<compile_context>
chip_gen: v5e
topology: v5e:2x2
jax: 0.10.0
libtpu: 0.0.40
codegen_flags: <defaults>
</compile_context>

<pallas_src>
import jax
import jax.numpy as jnp
from jax import lax
from jax.experimental import pallas as pl
from jax.experimental.pallas import tpu as pltpu

EMBED_SIZE = 100        # fusion linears are hard-coded 100x100 in the module
E_PAD = 128             # lane-aligned embed width (cols 100..127 are zeros)
NUM_NEG = 8             # args.num_neg_samples
L2_LAMBDA = 0.01        # args.l2_lambda

# (head_entity, relation, tail_entity, head_col, tail_col) of batch_idxs columns
# batch row = (u_id, p_id, w_id, b_id, c_id, rp_id, rp_id, rp_id)
REL_DEFS = [
    ("user",    "purchase",        "product",         0, 1),
    ("user",    "mentions",        "word",            0, 2),
    ("product", "describe_as",     "word",            1, 2),
    ("product", "produced_by",     "brand",           1, 3),
    ("product", "belongs_to",      "category",        1, 4),
    ("product", "also_bought",     "related_product", 1, 5),
    ("product", "also_viewed",     "related_product", 1, 6),
    ("product", "bought_together", "related_product", 1, 7),
]
NUM_REL = len(REL_DEFS)


def _fused_kg_kernel(head_ref, aux_ref, text_ref, tail_ref, rel_ref, meta_ref,
                     neg_ref, w1_ref, b1_ref, w2_ref, b2_ref, out_ref):
    """Single invocation over the stacked relation-batch axis M = R * B_pad.

    head/aux/text/tail/rel : [M, E_PAD] bf16     neg : [R*NUM_NEG, E_PAD] bf16
    meta : [M, 128] f32 (col0=rbias, col1=mask, col2=is_prod, col3=relation id)
    w1/w2 : [E_PAD, E_PAD] f32   b1/b2 : [1, E_PAD] f32
    out tile : [8, 128] f32 with total loss at (0,0) and total L2-reg at (0,1).
    """
    f32 = jnp.float32
    head = head_ref[...].astype(f32)
    aux = aux_ref[...].astype(f32)           # mp2vec embedding (user or product)
    text = text_ref[...].astype(f32)         # bert-text embedding (product rows)
    tail = tail_ref[...].astype(f32)
    rel = rel_ref[...].astype(f32)           # relation vector tiled per row
    neg = neg_ref[...].astype(f32)
    w1 = w1_ref[...]
    b1 = b1_ref[...]
    w2 = w2_ref[...]
    b2 = b2_ref[...]

    rbias = meta_ref[:, 0:1]                 # positive tail's relation bias
    mask = meta_ref[:, 1:2]                  # 1.0 where tail idx >= 0 (valid row)
    is_prod = meta_ref[:, 2:3]               # 1.0 product-head, 0.0 user-head
    rid = meta_ref[:, 3:4]                   # relation id (0..R-1), f32

    n_neg_total = neg.shape[0]

    def linear(x, w, b):                     # torch nn.Linear: y = x @ W.T + b
        return lax.dot_general(x, w, (((1,), (1,)), ((), ())),
                               preferred_element_type=f32) + b

    def sigmoid(x):                          # stable, routed to the EUP tanh
        return 0.5 * (jnp.tanh(0.5 * x) + 1.0)

    def softplus(x):                         # -log(sigmoid(-x)), overflow-free
        return jnp.maximum(x, 0.0) + jnp.log(1.0 + jnp.exp(-jnp.abs(x)))

    # product head: example = sigmoid(L1(head * L2(text * mp))) + rel
    # user    head: example = sigmoid(L1(head * mp))            + rel
    prod_emb = linear(text * aux, w2, b2)
    z = is_prod * prod_emb + (1.0 - is_prod) * aux
    example = sigmoid(linear(head * z, w1, b1))
    lane_valid = (lax.broadcasted_iota(jnp.int32, (1, E_PAD), 1)
                  < EMBED_SIZE).astype(f32)
    example = example * lane_valid + rel     # explicitly zero padded cols 100..127

    # positive logits / loss   (-log sigmoid(x) == softplus(-x))
    pos_logits = jnp.sum(tail * example, axis=-1, keepdims=True) + rbias   # [M,1]
    pos_loss = softplus(-pos_logits)

    # negative logits against ALL relations' stacked negatives; keep only the
    # NUM_NEG columns belonging to this row's relation (block-diagonal select).
    neg_logits = lax.dot_general(example, neg, (((1,), (1,)), ((), ())),
                                 preferred_element_type=f32) + rbias       # [M,NT]
    col_idx = lax.broadcasted_iota(jnp.int32, (1, n_neg_total), 1).astype(f32)
    lo = rid * float(NUM_NEG)
    sel = ((col_idx >= lo) & (col_idx < lo + float(NUM_NEG))).astype(f32)
    neg_loss = jnp.sum(softplus(neg_logits) * sel, axis=-1, keepdims=True)  # [M,1]

    per_row = (pos_loss + neg_loss) * mask

    # per-row squared norms once (lane reduction); relation-segmented below
    head_sq = jnp.sum(head * head, axis=-1, keepdims=True) * mask           # [M,1]
    tail_sq = jnp.sum(tail * tail, axis=-1, keepdims=True) * mask
    neg_sq = jnp.sum(neg * neg, axis=-1, keepdims=True)                     # [NT,1]
    neg_row = lax.broadcasted_iota(jnp.int32, (n_neg_total, 1), 0).astype(f32)

    total_loss = jnp.float32(0.0)
    total_reg = jnp.float32(0.0)
    for r in range(NUM_REL):                 # static unroll, R == 8
        mrel = (rid == float(r)).astype(f32)                                # [M,1]
        nrel = ((neg_row >= float(r * NUM_NEG)) &
                (neg_row < float((r + 1) * NUM_NEG))).astype(f32)           # [NT,1]
        cnt = jnp.sum(mask * mrel)
        valid = (cnt > 0.0).astype(f32)      # relation skipped if no valid rows
        loss_r = jnp.sum(per_row * mrel) / jnp.maximum(cnt, 1.0)
        reg_r = (jnp.sqrt(jnp.sum(head_sq * mrel)) +
                 jnp.sqrt(jnp.sum(tail_sq * mrel)) +
                 jnp.sqrt(jnp.sum(neg_sq * nrel)))
        total_loss += valid * loss_r
        total_reg += valid * reg_r

    # lane-dense scalar-carrier tile: loss -> (0,0), reg -> (0,1), zeros elsewhere
    rows = lax.broadcasted_iota(jnp.int32, (8, 128), 0)
    cols = lax.broadcasted_iota(jnp.int32, (8, 128), 1)
    out_ref[...] = jnp.where((rows == 0) & (cols == 0), total_loss,
                             jnp.where((rows == 0) & (cols == 1), total_reg, 0.0))


def fused_kg_loss(head, aux, text, tail, rel, meta, neg, w1, b1, w2, b2):
    """Single pallas_call: every operand fits comfortably in VMEM (< 1 MiB total)."""
    def vmem():
        return pl.BlockSpec(memory_space=pltpu.MemorySpace.VMEM)

    out = pl.pallas_call(
        _fused_kg_kernel,
        out_shape=jax.ShapeDtypeStruct((8, 128), jnp.float32),
        in_specs=[vmem() for _ in range(11)],
        out_specs=vmem(),
    )(head, aux, text, tail, rel, meta, neg, w1, b1, w2, b2)
    return out[0, 0], out[0, 1]


def compute_loss(params, batch_idxs, key):
    B = batch_idxs.shape[0]
    B_pad = max(8, ((B + 7) // 8) * 8)
    pad_rows = B_pad - B
    keys = jax.random.split(key, NUM_REL)

    heads, auxs, texts, tails, rels, metas, negs = ([] for _ in range(7))

    for r, ((eh, rel_name, et, h_col, t_col), k) in enumerate(zip(REL_DEFS, keys)):
        h_idx = batch_idxs[:, h_col]
        t_idx = batch_idxs[:, t_col]
        mask = (t_idx >= 0).astype(jnp.float32)[:, None]                  # [B,1]
        h_safe = jnp.maximum(h_idx, 0)
        t_safe = jnp.maximum(t_idx, 0)

        head_vec = jnp.take(params[eh], h_safe, axis=0)                   # [B,E_PAD]
        tail_vec = jnp.take(params[et], t_safe, axis=0)                   # [B,E_PAD]
        rel_vec = jnp.broadcast_to(params[rel_name], (B, E_PAD))          # [B,E_PAD]
        rel_bias = jnp.take(params[rel_name + "_bias"], t_safe, axis=0)   # [B,1]

        if eh == "product":
            aux = jnp.take(params["prod_emb_vectors"], h_safe, axis=0)
            text = jnp.take(params["prod_text_vectors"], h_safe, axis=0)
            flag = 1.0
        else:  # user head
            aux = jnp.take(params["user_emb_vectors"], h_safe, axis=0)
            text = jnp.zeros_like(head_vec)
            flag = 0.0

        # negative sampling (torch.multinomial equivalent) -- RNG glue in JAX
        distrib = params[rel_name + "_distrib"]
        neg_idx = jax.random.categorical(k, jnp.log(distrib), shape=(NUM_NEG,))
        neg_vec = jnp.take(params[et], neg_idx, axis=0)                   # [NUM_NEG,E_PAD]

        meta = jnp.concatenate(
            [rel_bias, mask,
             jnp.full((B, 1), flag, jnp.float32),
             jnp.full((B, 1), float(r), jnp.float32)], axis=1)            # [B,4]

        if pad_rows:
            pad2 = ((0, pad_rows), (0, 0))
            head_vec = jnp.pad(head_vec, pad2)
            tail_vec = jnp.pad(tail_vec, pad2)
            aux = jnp.pad(aux, pad2)
            text = jnp.pad(text, pad2)
            rel_vec = jnp.pad(rel_vec, pad2)
            meta = jnp.pad(meta, pad2)        # padded rows have mask==0 -> inert

        heads.append(head_vec); auxs.append(aux); texts.append(text)
        tails.append(tail_vec); rels.append(rel_vec); metas.append(meta)
        negs.append(neg_vec)

    bf16 = jnp.bfloat16
    head_all = jnp.concatenate(heads, axis=0).astype(bf16)   # [R*B_pad, E_PAD]
    aux_all = jnp.concatenate(auxs, axis=0).astype(bf16)
    text_all = jnp.concatenate(texts, axis=0).astype(bf16)
    tail_all = jnp.concatenate(tails, axis=0).astype(bf16)
    rel_all = jnp.concatenate(rels, axis=0).astype(bf16)
    neg_all = jnp.concatenate(negs, axis=0).astype(bf16)     # [R*NUM_NEG, E_PAD]
    meta_small = jnp.concatenate(metas, axis=0)               # [R*B_pad, 4]
    meta_all = jnp.pad(meta_small, ((0, 0), (0, 128 - meta_small.shape[1])))

    loss, reg = fused_kg_loss(
        head_all, aux_all, text_all, tail_all, rel_all, meta_all, neg_all,
        params["fusion_w1"], params["fusion_b1"],
        params["fusion_w2"], params["fusion_b2"])
    return loss + L2_LAMBDA * reg


def _pad_cols(x, width=E_PAD):
    return jnp.pad(x, ((0, 0), (0, width - x.shape[-1])))


def _pad_square(x, width=E_PAD):
    return jnp.pad(x, ((0, width - x.shape[0]), (0, width - x.shape[1])))


def init_params(key, vocab):
    # Deterministic synthetic parameter init (no .pt / .json loading).
    # All embed-dim tensors are generated at width 100 then zero-padded to 128.
    initrange = 0.5 / EMBED_SIZE
    entity_names = ["user", "product", "word", "related_product", "brand", "category"]
    rel_tails = {
        "purchase": "product", "mentions": "word", "describe_as": "word",
        "produced_by": "brand", "belongs_to": "category",
        "also_bought": "related_product", "also_viewed": "related_product",
        "bought_together": "related_product",
    }
    keys = list(jax.random.split(key, len(entity_names) + len(rel_tails) + 7))
    p = {}
    ki = 0
    for name in entity_names:
        w = jax.random.uniform(keys[ki], (vocab[name] + 1, EMBED_SIZE),
                               jnp.float32, -initrange, initrange)
        p[name] = _pad_cols(w)
        ki += 1
    for rel, et in rel_tails.items():
        rv = jax.random.uniform(keys[ki], (1, EMBED_SIZE),
                                jnp.float32, -initrange, initrange)
        p[rel] = _pad_cols(rv)
        ki += 1
        p[rel + "_bias"] = jnp.zeros((vocab[et] + 1, 1), jnp.float32)
        counts = jnp.arange(1, vocab[et] + 1, dtype=jnp.float32)
        d = counts ** 0.75
        p[rel + "_distrib"] = d / jnp.sum(d)
    fan = 1.0 / (EMBED_SIZE ** 0.5)
    p["fusion_w1"] = _pad_square(jax.random.uniform(
        keys[ki], (EMBED_SIZE, EMBED_SIZE), jnp.float32, -fan, fan)); ki += 1
    p["fusion_b1"] = _pad_cols(jax.random.uniform(
        keys[ki], (1, EMBED_SIZE), jnp.float32, -fan, fan)); ki += 1
    p["fusion_w2"] = _pad_square(jax.random.uniform(
        keys[ki], (EMBED_SIZE, EMBED_SIZE), jnp.float32, -fan, fan)); ki += 1
    p["fusion_b2"] = _pad_cols(jax.random.uniform(
        keys[ki], (1, EMBED_SIZE), jnp.float32, -fan, fan)); ki += 1
    # synthetic stand-ins for the precomputed mp2vec / bert-text2vec embeddings
    p["prod_emb_vectors"] = _pad_cols(jax.random.uniform(
        keys[ki], (vocab["product"] + 1, EMBED_SIZE), jnp.float32, 0.5, 1.5)); ki += 1
    p["prod_text_vectors"] = _pad_cols(jax.random.uniform(
        keys[ki], (vocab["product"] + 1, EMBED_SIZE), jnp.float32, 0.5, 1.5)); ki += 1
    p["user_emb_vectors"] = _pad_cols(jax.random.uniform(
        keys[ki], (vocab["user"] + 1, EMBED_SIZE), jnp.float32, 0.5, 1.5)); ki += 1
    return p


if __name__ == "__main__":
    key = jax.random.PRNGKey(0)
    vocab = dict(user=20, product=24, word=30, related_product=28, brand=10, category=12)
    pkey, bkey, skey = jax.random.split(key, 3)
    params = init_params(pkey, vocab)

    B = 8
    col_vocab = ["user", "product", "word", "brand", "category",
                 "related_product", "related_product", "related_product"]
    ks = jax.random.split(bkey, len(col_vocab))
    cols = [jax.random.randint(ks[i], (B,), 0, vocab[name], dtype=jnp.int32)
            for i, name in enumerate(col_vocab)]
    batch_idxs = jnp.stack(cols, axis=1)                # [B, 8]
    # one missing tail idx to exercise the `mask = tail_idx >= 0` path
    batch_idxs = batch_idxs.at[0, 5].set(-1)

    loss = jax.jit(compute_loss)(params, batch_idxs, skey)
    jax.block_until_ready(loss)
    assert loss.shape == () and jnp.isfinite(loss)
    print("KERNEL_OK")
</pallas_src>

<mosaic_0001>
module attributes {stable_mosaic.version = 11 : i64} {
  func.func @_fused_kg_kernel(%arg0: memref<64x128xbf16, #tpu.memory_space<vmem>>, %arg1: memref<64x128xbf16, #tpu.memory_space<vmem>>, %arg2: memref<64x128xbf16, #tpu.memory_space<vmem>>, %arg3: memref<64x128xbf16, #tpu.memory_space<vmem>>, %arg4: memref<64x128xbf16, #tpu.memory_space<vmem>>, %arg5: memref<64x128xf32, #tpu.memory_space<vmem>>, %arg6: memref<64x128xbf16, #tpu.memory_space<vmem>>, %arg7: memref<128x128xf32, #tpu.memory_space<vmem>>, %arg8: memref<1x128xf32, #tpu.memory_space<vmem>>, %arg9: memref<128x128xf32, #tpu.memory_space<vmem>>, %arg10: memref<1x128xf32, #tpu.memory_space<vmem>>, %arg11: memref<8x128xf32, #tpu.memory_space<vmem>>) attributes {dimension_semantics = [], scalar_prefetch = 0 : i64, scratch_operands = 0 : i64, tpu.core_type = #tpu.core_type<tc>} {
    %c0 = arith.constant 0 : index
    %c0_0 = arith.constant 0 : index
    %0 = vector.load %arg0[%c0, %c0_0] : memref<64x128xbf16, #tpu.memory_space<vmem>>, vector<64x128xbf16>
    %1 = arith.extf %0 : vector<64x128xbf16> to vector<64x128xf32>
    %c0_1 = arith.constant 0 : index
    %c0_2 = arith.constant 0 : index
    %2 = vector.load %arg1[%c0_1, %c0_2] : memref<64x128xbf16, #tpu.memory_space<vmem>>, vector<64x128xbf16>
    %3 = arith.extf %2 : vector<64x128xbf16> to vector<64x128xf32>
    %c0_3 = arith.constant 0 : index
    %c0_4 = arith.constant 0 : index
    %4 = vector.load %arg2[%c0_3, %c0_4] : memref<64x128xbf16, #tpu.memory_space<vmem>>, vector<64x128xbf16>
    %5 = arith.extf %4 : vector<64x128xbf16> to vector<64x128xf32>
    %c0_5 = arith.constant 0 : index
    %c0_6 = arith.constant 0 : index
    %6 = vector.load %arg3[%c0_5, %c0_6] : memref<64x128xbf16, #tpu.memory_space<vmem>>, vector<64x128xbf16>
    %7 = arith.extf %6 : vector<64x128xbf16> to vector<64x128xf32>
    %c0_7 = arith.constant 0 : index
    %c0_8 = arith.constant 0 : index
    %8 = vector.load %arg4[%c0_7, %c0_8] : memref<64x128xbf16, #tpu.memory_space<vmem>>, vector<64x128xbf16>
    %9 = arith.extf %8 : vector<64x128xbf16> to vector<64x128xf32>
    %c0_9 = arith.constant 0 : index
    %c0_10 = arith.constant 0 : index
    %10 = vector.load %arg6[%c0_9, %c0_10] : memref<64x128xbf16, #tpu.memory_space<vmem>>, vector<64x128xbf16>
    %11 = arith.extf %10 : vector<64x128xbf16> to vector<64x128xf32>
    %c0_11 = arith.constant 0 : index
    %c0_12 = arith.constant 0 : index
    %12 = vector.load %arg7[%c0_11, %c0_12] : memref<128x128xf32, #tpu.memory_space<vmem>>, vector<128x128xf32>
    %c0_13 = arith.constant 0 : index
    %c0_14 = arith.constant 0 : index
    %13 = vector.load %arg8[%c0_13, %c0_14] : memref<1x128xf32, #tpu.memory_space<vmem>>, vector<1x128xf32>
    %c0_15 = arith.constant 0 : index
    %c0_16 = arith.constant 0 : index
    %14 = vector.load %arg9[%c0_15, %c0_16] : memref<128x128xf32, #tpu.memory_space<vmem>>, vector<128x128xf32>
    %c0_17 = arith.constant 0 : index
    %c0_18 = arith.constant 0 : index
    %15 = vector.load %arg10[%c0_17, %c0_18] : memref<1x128xf32, #tpu.memory_space<vmem>>, vector<1x128xf32>
    %c0_19 = arith.constant 0 : index
    %c0_20 = arith.constant 0 : index
    %16 = vector.load %arg5[%c0_19, %c0_20] : memref<64x128xf32, #tpu.memory_space<vmem>>, vector<64x1xf32>
    %c0_21 = arith.constant 0 : index
    %c1 = arith.constant 1 : index
    %17 = vector.load %arg5[%c0_21, %c1] : memref<64x128xf32, #tpu.memory_space<vmem>>, vector<64x1xf32>
    %c0_22 = arith.constant 0 : index
    %c2 = arith.constant 2 : index
    %18 = vector.load %arg5[%c0_22, %c2] : memref<64x128xf32, #tpu.memory_space<vmem>>, vector<64x1xf32>
    %c0_23 = arith.constant 0 : index
    %c3 = arith.constant 3 : index
    %19 = vector.load %arg5[%c0_23, %c3] : memref<64x128xf32, #tpu.memory_space<vmem>>, vector<64x1xf32>
    %20 = arith.mulf %5, %3 : vector<64x128xf32>
    %cst = arith.constant dense<0.000000e+00> : vector<64x128xf32>
    %21 = tpu.matmul %20, %14, %cst {dimension_numbers = #tpu.dot_dimension_numbers<[1], [1], [0], [0], [0, 0, 1, 0], [], []>} : vector<64x128xf32>, vector<128x128xf32>, vector<64x128xf32> -> vector<64x128xf32>
    %22 = vector.broadcast %15 : vector<1x128xf32> to vector<64x128xf32>
    %23 = arith.addf %21, %22 : vector<64x128xf32>
    %24 = vector.broadcast %18 : vector<64x1xf32> to vector<64x128xf32>
    %25 = arith.mulf %24, %23 : vector<64x128xf32>
    %cst_24 = arith.constant 1.000000e+00 : f32
    %26 = vector.broadcast %cst_24 : f32 to vector<64x1xf32>
    %27 = arith.subf %26, %18 : vector<64x1xf32>
    %28 = vector.broadcast %27 : vector<64x1xf32> to vector<64x128xf32>
    %29 = arith.mulf %28, %3 : vector<64x128xf32>
    %30 = arith.addf %25, %29 : vector<64x128xf32>
    %31 = arith.mulf %1, %30 : vector<64x128xf32>
    %cst_25 = arith.constant dense<0.000000e+00> : vector<64x128xf32>
    %32 = tpu.matmul %31, %12, %cst_25 {dimension_numbers = #tpu.dot_dimension_numbers<[1], [1], [0], [0], [0, 0, 1, 0], [], []>} : vector<64x128xf32>, vector<128x128xf32>, vector<64x128xf32> -> vector<64x128xf32>
    %33 = vector.broadcast %13 : vector<1x128xf32> to vector<64x128xf32>
    %34 = arith.addf %32, %33 : vector<64x128xf32>
    %cst_26 = arith.constant 5.000000e-01 : f32
    %35 = vector.broadcast %cst_26 : f32 to vector<64x128xf32>
    %36 = arith.mulf %35, %34 : vector<64x128xf32>
    %37 = math.tanh %36 : vector<64x128xf32>
    %cst_27 = arith.constant 1.000000e+00 : f32
    %38 = vector.broadcast %cst_27 : f32 to vector<64x128xf32>
    %39 = arith.addf %37, %38 : vector<64x128xf32>
    %cst_28 = arith.constant 5.000000e-01 : f32
    %40 = vector.broadcast %cst_28 : f32 to vector<64x128xf32>
    %41 = arith.mulf %40, %39 : vector<64x128xf32>
    %42 = tpu.iota {dimensions = array<i32: 1>} : vector<1x128xi32>
    %c100_i32 = arith.constant 100 : i32
    %43 = vector.broadcast %c100_i32 : i32 to vector<1x128xi32>
    %44 = arith.cmpi slt, %42, %43 : vector<1x128xi32>
    %45 = arith.extui %44 : vector<1x128xi1> to vector<1x128xi32>
    %46 = arith.sitofp %45 : vector<1x128xi32> to vector<1x128xf32>
    %47 = vector.broadcast %46 : vector<1x128xf32> to vector<64x128xf32>
    %48 = arith.mulf %41, %47 : vector<64x128xf32>
    %49 = arith.addf %48, %9 : vector<64x128xf32>
    %50 = arith.mulf %7, %49 : vector<64x128xf32>
    %cst_29 = arith.constant dense<0.000000e+00> : vector<64xf32>
    %51 = vector.multi_reduction <add>, %50, %cst_29 [1] : vector<64x128xf32> to vector<64xf32>
    %52 = vector.shape_cast %51 : vector<64xf32> to vector<64x1xf32>
    %53 = arith.addf %52, %16 : vector<64x1xf32>
    %cst_30 = arith.constant 0.000000e+00 : f32
    %54 = vector.broadcast %cst_30 : f32 to vector<64x1xf32>
    %55 = arith.subf %54, %53 : vector<64x1xf32>
    %cst_31 = arith.constant 0.000000e+00 : f32
    %56 = vector.broadcast %cst_31 : f32 to vector<64x1xf32>
    %57 = arith.maximumf %55, %56 : vector<64x1xf32>
    %58 = math.absf %55 : vector<64x1xf32>
    %cst_32 = arith.constant 0.000000e+00 : f32
    %59 = vector.broadcast %cst_32 : f32 to vector<64x1xf32>
    %60 = arith.subf %59, %58 : vector<64x1xf32>
    %61 = math.exp %60 : vector<64x1xf32>
    %cst_33 = arith.constant 1.000000e+00 : f32
    %62 = vector.broadcast %cst_33 : f32 to vector<64x1xf32>
    %63 = arith.addf %62, %61 : vector<64x1xf32>
    %64 = math.log %63 : vector<64x1xf32>
    %65 = arith.addf %57, %64 : vector<64x1xf32>
    %cst_34 = arith.constant dense<0.000000e+00> : vector<64x64xf32>
    %66 = tpu.matmul %49, %11, %cst_34 {dimension_numbers = #tpu.dot_dimension_numbers<[1], [1], [0], [0], [0, 0, 1, 0], [], []>} : vector<64x128xf32>, vector<64x128xf32>, vector<64x64xf32> -> vector<64x64xf32>
    %67 = vector.broadcast %16 : vector<64x1xf32> to vector<64x64xf32>
    %68 = arith.addf %66, %67 : vector<64x64xf32>
    %69 = tpu.iota {dimensions = array<i32: 1>} : vector<1x64xi32>
    %70 = arith.sitofp %69 : vector<1x64xi32> to vector<1x64xf32>
    %cst_35 = arith.constant 8.000000e+00 : f32
    %71 = vector.broadcast %cst_35 : f32 to vector<64x1xf32>
    %72 = arith.mulf %19, %71 : vector<64x1xf32>
    %73 = vector.broadcast %70 : vector<1x64xf32> to vector<64x64xf32>
    %74 = vector.broadcast %72 : vector<64x1xf32> to vector<64x64xf32>
    %75 = arith.cmpf oge, %73, %74 : vector<64x64xf32>
    %cst_36 = arith.constant 8.000000e+00 : f32
    %76 = vector.broadcast %cst_36 : f32 to vector<64x1xf32>
    %77 = arith.addf %72, %76 : vector<64x1xf32>
    %78 = vector.broadcast %70 : vector<1x64xf32> to vector<64x64xf32>
    %79 = vector.broadcast %77 : vector<64x1xf32> to vector<64x64xf32>
    %80 = arith.cmpf olt, %78, %79 : vector<64x64xf32>
    %81 = arith.andi %75, %80 : vector<64x64xi1>
    %82 = arith.extui %81 : vector<64x64xi1> to vector<64x64xi32>
    %83 = arith.sitofp %82 : vector<64x64xi32> to vector<64x64xf32>
    %cst_37 = arith.constant 0.000000e+00 : f32
    %84 = vector.broadcast %cst_37 : f32 to vector<64x64xf32>
    %85 = arith.maximumf %68, %84 : vector<64x64xf32>
    %86 = math.absf %68 : vector<64x64xf32>
    %cst_38 = arith.constant 0.000000e+00 : f32
    %87 = vector.broadcast %cst_38 : f32 to vector<64x64xf32>
    %88 = arith.subf %87, %86 : vector<64x64xf32>
    %89 = math.exp %88 : vector<64x64xf32>
    %cst_39 = arith.constant 1.000000e+00 : f32
    %90 = vector.broadcast %cst_39 : f32 to vector<64x64xf32>
    %91 = arith.addf %90, %89 : vector<64x64xf32>
    %92 = math.log %91 : vector<64x64xf32>
    %93 = arith.addf %85, %92 : vector<64x64xf32>
    %94 = arith.mulf %93, %83 : vector<64x64xf32>
    %cst_40 = arith.constant dense<0.000000e+00> : vector<64xf32>
    %95 = vector.multi_reduction <add>, %94, %cst_40 [1] : vector<64x64xf32> to vector<64xf32>
    %96 = vector.shape_cast %95 : vector<64xf32> to vector<64x1xf32>
    %97 = arith.addf %65, %96 : vector<64x1xf32>
    %98 = arith.mulf %97, %17 : vector<64x1xf32>
    %99 = arith.mulf %1, %1 : vector<64x128xf32>
    %cst_41 = arith.constant dense<0.000000e+00> : vector<64xf32>
    %100 = vector.multi_reduction <add>, %99, %cst_41 [1] : vector<64x128xf32> to vector<64xf32>
    %101 = vector.shape_cast %100 : vector<64xf32> to vector<64x1xf32>
    %102 = arith.mulf %101, %17 : vector<64x1xf32>
    %103 = arith.mulf %7, %7 : vector<64x128xf32>
    %cst_42 = arith.constant dense<0.000000e+00> : vector<64xf32>
    %104 = vector.multi_reduction <add>, %103, %cst_42 [1] : vector<64x128xf32> to vector<64xf32>
    %105 = vector.shape_cast %104 : vector<64xf32> to vector<64x1xf32>
    %106 = arith.mulf %105, %17 : vector<64x1xf32>
    %107 = arith.mulf %11, %11 : vector<64x128xf32>
    %cst_43 = arith.constant dense<0.000000e+00> : vector<64xf32>
    %108 = vector.multi_reduction <add>, %107, %cst_43 [1] : vector<64x128xf32> to vector<64xf32>
    %109 = vector.shape_cast %108 : vector<64xf32> to vector<64x1xf32>
    %110 = tpu.iota {dimensions = array<i32: 0>} : vector<64x1xi32>
    %111 = arith.sitofp %110 : vector<64x1xi32> to vector<64x1xf32>
    %cst_44 = arith.constant 0.000000e+00 : f32
    %112 = vector.broadcast %cst_44 : f32 to vector<64x1xf32>
    %113 = arith.cmpf oeq, %19, %112 : vector<64x1xf32>
    %114 = arith.extui %113 : vector<64x1xi1> to vector<64x1xi32>
    %115 = arith.sitofp %114 : vector<64x1xi32> to vector<64x1xf32>
    %cst_45 = arith.constant 0.000000e+00 : f32
    %116 = vector.broadcast %cst_45 : f32 to vector<64x1xf32>
    %117 = arith.cmpf oge, %111, %116 : vector<64x1xf32>
    %cst_46 = arith.constant 8.000000e+00 : f32
    %118 = vector.broadcast %cst_46 : f32 to vector<64x1xf32>
    %119 = arith.cmpf olt, %111, %118 : vector<64x1xf32>
    %120 = arith.andi %117, %119 : vector<64x1xi1>
    %121 = arith.extui %120 : vector<64x1xi1> to vector<64x1xi32>
    %122 = arith.sitofp %121 : vector<64x1xi32> to vector<64x1xf32>
    %123 = arith.mulf %17, %115 : vector<64x1xf32>
    %124 = vector.shape_cast %123 : vector<64x1xf32> to vector<1x64x1xf32>
    %cst_47 = arith.constant dense<0.000000e+00> : vector<1xf32>
    %125 = vector.multi_reduction <add>, %124, %cst_47 [1, 2] : vector<1x64x1xf32> to vector<1xf32>
    %126 = vector.shape_cast %125 : vector<1xf32> to vector<1x1x1xf32>
    %127 = vector.extract %126[0, 0, 0] : f32 from vector<1x1x1xf32>
    %cst_48 = arith.constant 0.000000e+00 : f32
    %128 = arith.cmpf ogt, %127, %cst_48 : f32
    %129 = arith.extui %128 : i1 to i32
    %130 = arith.sitofp %129 : i32 to f32
    %131 = arith.mulf %98, %115 : vector<64x1xf32>
    %132 = vector.shape_cast %131 : vector<64x1xf32> to vector<1x64x1xf32>
    %cst_49 = arith.constant dense<0.000000e+00> : vector<1xf32>
    %133 = vector.multi_reduction <add>, %132, %cst_49 [1, 2] : vector<1x64x1xf32> to vector<1xf32>
    %134 = vector.shape_cast %133 : vector<1xf32> to vector<1x1x1xf32>
    %135 = vector.extract %134[0, 0, 0] : f32 from vector<1x1x1xf32>
    %cst_50 = arith.constant 1.000000e+00 : f32
    %136 = arith.maximumf %127, %cst_50 : f32
    %137 = arith.divf %135, %136 : f32
    %138 = arith.mulf %102, %115 : vector<64x1xf32>
    %139 = vector.shape_cast %138 : vector<64x1xf32> to vector<1x64x1xf32>
    %cst_51 = arith.constant dense<0.000000e+00> : vector<1xf32>
    %140 = vector.multi_reduction <add>, %139, %cst_51 [1, 2] : vector<1x64x1xf32> to vector<1xf32>
    %141 = vector.shape_cast %140 : vector<1xf32> to vector<1x1x1xf32>
    %142 = vector.extract %141[0, 0, 0] : f32 from vector<1x1x1xf32>
    %143 = math.sqrt %142 : f32
    %144 = arith.mulf %106, %115 : vector<64x1xf32>
    %145 = vector.shape_cast %144 : vector<64x1xf32> to vector<1x64x1xf32>
    %cst_52 = arith.constant dense<0.000000e+00> : vector<1xf32>
    %146 = vector.multi_reduction <add>, %145, %cst_52 [1, 2] : vector<1x64x1xf32> to vector<1xf32>
    %147 = vector.shape_cast %146 : vector<1xf32> to vector<1x1x1xf32>
    %148 = vector.extract %147[0, 0, 0] : f32 from vector<1x1x1xf32>
    %149 = math.sqrt %148 : f32
    %150 = arith.addf %143, %149 : f32
    %151 = arith.mulf %109, %122 : vector<64x1xf32>
    %152 = vector.shape_cast %151 : vector<64x1xf32> to vector<1x64x1xf32>
    %cst_53 = arith.constant dense<0.000000e+00> : vector<1xf32>
    %153 = vector.multi_reduction <add>, %152, %cst_53 [1, 2] : vector<1x64x1xf32> to vector<1xf32>
    %154 = vector.shape_cast %153 : vector<1xf32> to vector<1x1x1xf32>
    %155 = vector.extract %154[0, 0, 0] : f32 from vector<1x1x1xf32>
    %156 = math.sqrt %155 : f32
    %157 = arith.addf %150, %156 : f32
    %158 = arith.mulf %130, %137 : f32
    %cst_54 = arith.constant 0.000000e+00 : f32
    %159 = arith.addf %cst_54, %158 : f32
    %160 = arith.mulf %130, %157 : f32
    %cst_55 = arith.constant 0.000000e+00 : f32
    %161 = arith.addf %cst_55, %160 : f32
    %cst_56 = arith.constant 1.000000e+00 : f32
    %162 = vector.broadcast %cst_56 : f32 to vector<64x1xf32>
    %163 = arith.cmpf oeq, %19, %162 : vector<64x1xf32>
    %164 = arith.extui %163 : vector<64x1xi1> to vector<64x1xi32>
    %165 = arith.sitofp %164 : vector<64x1xi32> to vector<64x1xf32>
    %cst_57 = arith.constant 8.000000e+00 : f32
    %166 = vector.broadcast %cst_57 : f32 to vector<64x1xf32>
    %167 = arith.cmpf oge, %111, %166 : vector<64x1xf32>
    %cst_58 = arith.constant 1.600000e+01 : f32
    %168 = vector.broadcast %cst_58 : f32 to vector<64x1xf32>
    %169 = arith.cmpf olt, %111, %168 : vector<64x1xf32>
    %170 = arith.andi %167, %169 : vector<64x1xi1>
    %171 = arith.extui %170 : vector<64x1xi1> to vector<64x1xi32>
    %172 = arith.sitofp %171 : vector<64x1xi32> to vector<64x1xf32>
    %173 = arith.mulf %17, %165 : vector<64x1xf32>
    %174 = vector.shape_cast %173 : vector<64x1xf32> to vector<1x64x1xf32>
    %cst_59 = arith.constant dense<0.000000e+00> : vector<1xf32>
    %175 = vector.multi_reduction <add>, %174, %cst_59 [1, 2] : vector<1x64x1xf32> to vector<1xf32>
    %176 = vector.shape_cast %175 : vector<1xf32> to vector<1x1x1xf32>
    %177 = vector.extract %176[0, 0, 0] : f32 from vector<1x1x1xf32>
    %cst_60 = arith.constant 0.000000e+00 : f32
    %178 = arith.cmpf ogt, %177, %cst_60 : f32
    %179 = arith.extui %178 : i1 to i32
    %180 = arith.sitofp %179 : i32 to f32
    %181 = arith.mulf %98, %165 : vector<64x1xf32>
    %182 = vector.shape_cast %181 : vector<64x1xf32> to vector<1x64x1xf32>
    %cst_61 = arith.constant dense<0.000000e+00> : vector<1xf32>
    %183 = vector.multi_reduction <add>, %182, %cst_61 [1, 2] : vector<1x64x1xf32> to vector<1xf32>
    %184 = vector.shape_cast %183 : vector<1xf32> to vector<1x1x1xf32>
    %185 = vector.extract %184[0, 0, 0] : f32 from vector<1x1x1xf32>
    %cst_62 = arith.constant 1.000000e+00 : f32
    %186 = arith.maximumf %177, %cst_62 : f32
    %187 = arith.divf %185, %186 : f32
    %188 = arith.mulf %102, %165 : vector<64x1xf32>
    %189 = vector.shape_cast %188 : vector<64x1xf32> to vector<1x64x1xf32>
    %cst_63 = arith.constant dense<0.000000e+00> : vector<1xf32>
    %190 = vector.multi_reduction <add>, %189, %cst_63 [1, 2] : vector<1x64x1xf32> to vector<1xf32>
    %191 = vector.shape_cast %190 : vector<1xf32> to vector<1x1x1xf32>
    %192 = vector.extract %191[0, 0, 0] : f32 from vector<1x1x1xf32>
    %193 = math.sqrt %192 : f32
    %194 = arith.mulf %106, %165 : vector<64x1xf32>
    %195 = vector.shape_cast %194 : vector<64x1xf32> to vector<1x64x1xf32>
    %cst_64 = arith.constant dense<0.000000e+00> : vector<1xf32>
    %196 = vector.multi_reduction <add>, %195, %cst_64 [1, 2] : vector<1x64x1xf32> to vector<1xf32>
    %197 = vector.shape_cast %196 : vector<1xf32> to vector<1x1x1xf32>
    %198 = vector.extract %197[0, 0, 0] : f32 from vector<1x1x1xf32>
    %199 = math.sqrt %198 : f32
    %200 = arith.addf %193, %199 : f32
    %201 = arith.mulf %109, %172 : vector<64x1xf32>
    %202 = vector.shape_cast %201 : vector<64x1xf32> to vector<1x64x1xf32>
    %cst_65 = arith.constant dense<0.000000e+00> : vector<1xf32>
    %203 = vector.multi_reduction <add>, %202, %cst_65 [1, 2] : vector<1x64x1xf32> to vector<1xf32>
    %204 = vector.shape_cast %203 : vector<1xf32> to vector<1x1x1xf32>
    %205 = vector.extract %204[0, 0, 0] : f32 from vector<1x1x1xf32>
    %206 = math.sqrt %205 : f32
    %207 = arith.addf %200, %206 : f32
    %208 = arith.mulf %180, %187 : f32
    %209 = arith.addf %159, %208 : f32
    %210 = arith.mulf %180, %207 : f32
    %211 = arith.addf %161, %210 : f32
    %cst_66 = arith.constant 2.000000e+00 : f32
    %212 = vector.broadcast %cst_66 : f32 to vector<64x1xf32>
    %213 = arith.cmpf oeq, %19, %212 : vector<64x1xf32>
    %214 = arith.extui %213 : vector<64x1xi1> to vector<64x1xi32>
    %215 = arith.sitofp %214 : vector<64x1xi32> to vector<64x1xf32>
    %cst_67 = arith.constant 1.600000e+01 : f32
    %216 = vector.broadcast %cst_67 : f32 to vector<64x1xf32>
    %217 = arith.cmpf oge, %111, %216 : vector<64x1xf32>
    %cst_68 = arith.constant 2.400000e+01 : f32
    %218 = vector.broadcast %cst_68 : f32 to vector<64x1xf32>
    %219 = arith.cmpf olt, %111, %218 : vector<64x1xf32>
    %220 = arith.andi %217, %219 : vector<64x1xi1>
    %221 = arith.extui %220 : vector<64x1xi1> to vector<64x1xi32>
    %222 = arith.sitofp %221 : vector<64x1xi32> to vector<64x1xf32>
    %223 = arith.mulf %17, %215 : vector<64x1xf32>
    %224 = vector.shape_cast %223 : vector<64x1xf32> to vector<1x64x1xf32>
    %cst_69 = arith.constant dense<0.000000e+00> : vector<1xf32>
    %225 = vector.multi_reduction <add>, %224, %cst_69 [1, 2] : vector<1x64x1xf32> to vector<1xf32>
    %226 = vector.shape_cast %225 : vector<1xf32> to vector<1x1x1xf32>
    %227 = vector.extract %226[0, 0, 0] : f32 from vector<1x1x1xf32>
    %cst_70 = arith.constant 0.000000e+00 : f32
    %228 = arith.cmpf ogt, %227, %cst_70 : f32
    %229 = arith.extui %228 : i1 to i32
    %230 = arith.sitofp %229 : i32 to f32
    %231 = arith.mulf %98, %215 : vector<64x1xf32>
    %232 = vector.shape_cast %231 : vector<64x1xf32> to vector<1x64x1xf32>
    %cst_71 = arith.constant dense<0.000000e+00> : vector<1xf32>
    %233 = vector.multi_reduction <add>, %232, %cst_71 [1, 2] : vector<1x64x1xf32> to vector<1xf32>
    %234 = vector.shape_cast %233 : vector<1xf32> to vector<1x1x1xf32>
    %235 = vector.extract %234[0, 0, 0] : f32 from vector<1x1x1xf32>
    %cst_72 = arith.constant 1.000000e+00 : f32
    %236 = arith.maximumf %227, %cst_72 : f32
    %237 = arith.divf %235, %236 : f32
    %238 = arith.mulf %102, %215 : vector<64x1xf32>
    %239 = vector.shape_cast %238 : vector<64x1xf32> to vector<1x64x1xf32>
    %cst_73 = arith.constant dense<0.000000e+00> : vector<1xf32>
    %240 = vector.multi_reduction <add>, %239, %cst_73 [1, 2] : vector<1x64x1xf32> to vector<1xf32>
    %241 = vector.shape_cast %240 : vector<1xf32> to vector<1x1x1xf32>
    %242 = vector.extract %241[0, 0, 0] : f32 from vector<1x1x1xf32>
    %243 = math.sqrt %242 : f32
    %244 = arith.mulf %106, %215 : vector<64x1xf32>
    %245 = vector.shape_cast %244 : vector<64x1xf32> to vector<1x64x1xf32>
    %cst_74 = arith.constant dense<0.000000e+00> : vector<1xf32>
    %246 = vector.multi_reduction <add>, %245, %cst_74 [1, 2] : vector<1x64x1xf32> to vector<1xf32>
    %247 = vector.shape_cast %246 : vector<1xf32> to vector<1x1x1xf32>
    %248 = vector.extract %247[0, 0, 0] : f32 from vector<1x1x1xf32>
    %249 = math.sqrt %248 : f32
    %250 = arith.addf %243, %249 : f32
    %251 = arith.mulf %109, %222 : vector<64x1xf32>
    %252 = vector.shape_cast %251 : vector<64x1xf32> to vector<1x64x1xf32>
    %cst_75 = arith.constant dense<0.000000e+00> : vector<1xf32>
    %253 = vector.multi_reduction <add>, %252, %cst_75 [1, 2] : vector<1x64x1xf32> to vector<1xf32>
    %254 = vector.shape_cast %253 : vector<1xf32> to vector<1x1x1xf32>
    %255 = vector.extract %254[0, 0, 0] : f32 from vector<1x1x1xf32>
    %256 = math.sqrt %255 : f32
    %257 = arith.addf %250, %256 : f32
    %258 = arith.mulf %230, %237 : f32
    %259 = arith.addf %209, %258 : f32
    %260 = arith.mulf %230, %257 : f32
    %261 = arith.addf %211, %260 : f32
    %cst_76 = arith.constant 3.000000e+00 : f32
    %262 = vector.broadcast %cst_76 : f32 to vector<64x1xf32>
    %263 = arith.cmpf oeq, %19, %262 : vector<64x1xf32>
    %264 = arith.extui %263 : vector<64x1xi1> to vector<64x1xi32>
    %265 = arith.sitofp %264 : vector<64x1xi32> to vector<64x1xf32>
    %cst_77 = arith.constant 2.400000e+01 : f32
    %266 = vector.broadcast %cst_77 : f32 to vector<64x1xf32>
    %267 = arith.cmpf oge, %111, %266 : vector<64x1xf32>
    %cst_78 = arith.constant 3.200000e+01 : f32
    %268 = vector.broadcast %cst_78 : f32 to vector<64x1xf32>
    %269 = arith.cmpf olt, %111, %268 : vector<64x1xf32>
    %270 = arith.andi %267, %269 : vector<64x1xi1>
    %271 = arith.extui %270 : vector<64x1xi1> to vector<64x1xi32>
    %272 = arith.sitofp %271 : vector<64x1xi32> to vector<64x1xf32>
    %273 = arith.mulf %17, %265 : vector<64x1xf32>
    %274 = vector.shape_cast %273 : vector<64x1xf32> to vector<1x64x1xf32>
    %cst_79 = arith.constant dense<0.000000e+00> : vector<1xf32>
    %275 = vector.multi_reduction <add>, %274, %cst_79 [1, 2] : vector<1x64x1xf32> to vector<1xf32>
    %276 = vector.shape_cast %275 : vector<1xf32> to vector<1x1x1xf32>
    %277 = vector.extract %276[0, 0, 0] : f32 from vector<1x1x1xf32>
    %cst_80 = arith.constant 0.000000e+00 : f32
    %278 = arith.cmpf ogt, %277, %cst_80 : f32
    %279 = arith.extui %278 : i1 to i32
    %280 = arith.sitofp %279 : i32 to f32
    %281 = arith.mulf %98, %265 : vector<64x1xf32>
    %282 = vector.shape_cast %281 : vector<64x1xf32> to vector<1x64x1xf32>
    %cst_81 = arith.constant dense<0.000000e+00> : vector<1xf32>
    %283 = vector.multi_reduction <add>, %282, %cst_81 [1, 2] : vector<1x64x1xf32> to vector<1xf32>
    %284 = vector.shape_cast %283 : vector<1xf32> to vector<1x1x1xf32>
    %285 = vector.extract %284[0, 0, 0] : f32 from vector<1x1x1xf32>
    %cst_82 = arith.constant 1.000000e+00 : f32
    %286 = arith.maximumf %277, %cst_82 : f32
    %287 = arith.divf %285, %286 : f32
    %288 = arith.mulf %102, %265 : vector<64x1xf32>
    %289 = vector.shape_cast %288 : vector<64x1xf32> to vector<1x64x1xf32>
    %cst_83 = arith.constant dense<0.000000e+00> : vector<1xf32>
    %290 = vector.multi_reduction <add>, %289, %cst_83 [1, 2] : vector<1x64x1xf32> to vector<1xf32>
    %291 = vector.shape_cast %290 : vector<1xf32> to vector<1x1x1xf32>
    %292 = vector.extract %291[0, 0, 0] : f32 from vector<1x1x1xf32>
    %293 = math.sqrt %292 : f32
    %294 = arith.mulf %106, %265 : vector<64x1xf32>
    %295 = vector.shape_cast %294 : vector<64x1xf32> to vector<1x64x1xf32>
    %cst_84 = arith.constant dense<0.000000e+00> : vector<1xf32>
    %296 = vector.multi_reduction <add>, %295, %cst_84 [1, 2] : vector<1x64x1xf32> to vector<1xf32>
    %297 = vector.shape_cast %296 : vector<1xf32> to vector<1x1x1xf32>
    %298 = vector.extract %297[0, 0, 0] : f32 from vector<1x1x1xf32>
    %299 = math.sqrt %298 : f32
    %300 = arith.addf %293, %299 : f32
    %301 = arith.mulf %109, %272 : vector<64x1xf32>
    %302 = vector.shape_cast %301 : vector<64x1xf32> to vector<1x64x1xf32>
    %cst_85 = arith.constant dense<0.000000e+00> : vector<1xf32>
    %303 = vector.multi_reduction <add>, %302, %cst_85 [1, 2] : vector<1x64x1xf32> to vector<1xf32>
    %304 = vector.shape_cast %303 : vector<1xf32> to vector<1x1x1xf32>
    %305 = vector.extract %304[0, 0, 0] : f32 from vector<1x1x1xf32>
    %306 = math.sqrt %305 : f32
    %307 = arith.addf %300, %306 : f32
    %308 = arith.mulf %280, %287 : f32
    %309 = arith.addf %259, %308 : f32
    %310 = arith.mulf %280, %307 : f32
    %311 = arith.addf %261, %310 : f32
    %cst_86 = arith.constant 4.000000e+00 : f32
    %312 = vector.broadcast %cst_86 : f32 to vector<64x1xf32>
    %313 = arith.cmpf oeq, %19, %312 : vector<64x1xf32>
    %314 = arith.extui %313 : vector<64x1xi1> to vector<64x1xi32>
    %315 = arith.sitofp %314 : vector<64x1xi32> to vector<64x1xf32>
    %cst_87 = arith.constant 3.200000e+01 : f32
    %316 = vector.broadcast %cst_87 : f32 to vector<64x1xf32>
    %317 = arith.cmpf oge, %111, %316 : vector<64x1xf32>
    %cst_88 = arith.constant 4.000000e+01 : f32
    %318 = vector.broadcast %cst_88 : f32 to vector<64x1xf32>
    %319 = arith.cmpf olt, %111, %318 : vector<64x1xf32>
    %320 = arith.andi %317, %319 : vector<64x1xi1>
    %321 = arith.extui %320 : vector<64x1xi1> to vector<64x1xi32>
    %322 = arith.sitofp %321 : vector<64x1xi32> to vector<64x1xf32>
    %323 = arith.mulf %17, %315 : vector<64x1xf32>
    %324 = vector.shape_cast %323 : vector<64x1xf32> to vector<1x64x1xf32>
    %cst_89 = arith.constant dense<0.000000e+00> : vector<1xf32>
    %325 = vector.multi_reduction <add>, %324, %cst_89 [1, 2] : vector<1x64x1xf32> to vector<1xf32>
    %326 = vector.shape_cast %325 : vector<1xf32> to vector<1x1x1xf32>
    %327 = vector.extract %326[0, 0, 0] : f32 from vector<1x1x1xf32>
    %cst_90 = arith.constant 0.000000e+00 : f32
    %328 = arith.cmpf ogt, %327, %cst_90 : f32
    %329 = arith.extui %328 : i1 to i32
    %330 = arith.sitofp %329 : i32 to f32
    %331 = arith.mulf %98, %315 : vector<64x1xf32>
    %332 = vector.shape_cast %331 : vector<64x1xf32> to vector<1x64x1xf32>
    %cst_91 = arith.constant dense<0.000000e+00> : vector<1xf32>
    %333 = vector.multi_reduction <add>, %332, %cst_91 [1, 2] : vector<1x64x1xf32> to vector<1xf32>
    %334 = vector.shape_cast %333 : vector<1xf32> to vector<1x1x1xf32>
    %335 = vector.extract %334[0, 0, 0] : f32 from vector<1x1x1xf32>
    %cst_92 = arith.constant 1.000000e+00 : f32
    %336 = arith.maximumf %327, %cst_92 : f32
    %337 = arith.divf %335, %336 : f32
    %338 = arith.mulf %102, %315 : vector<64x1xf32>
    %339 = vector.shape_cast %338 : vector<64x1xf32> to vector<1x64x1xf32>
    %cst_93 = arith.constant dense<0.000000e+00> : vector<1xf32>
    %340 = vector.multi_reduction <add>, %339, %cst_93 [1, 2] : vector<1x64x1xf32> to vector<1xf32>
    %341 = vector.shape_cast %340 : vector<1xf32> to vector<1x1x1xf32>
    %342 = vector.extract %341[0, 0, 0] : f32 from vector<1x1x1xf32>
    %343 = math.sqrt %342 : f32
    %344 = arith.mulf %106, %315 : vector<64x1xf32>
    %345 = vector.shape_cast %344 : vector<64x1xf32> to vector<1x64x1xf32>
    %cst_94 = arith.constant dense<0.000000e+00> : vector<1xf32>
    %346 = vector.multi_reduction <add>, %345, %cst_94 [1, 2] : vector<1x64x1xf32> to vector<1xf32>
    %347 = vector.shape_cast %346 : vector<1xf32> to vector<1x1x1xf32>
    %348 = vector.extract %347[0, 0, 0] : f32 from vector<1x1x1xf32>
    %349 = math.sqrt %348 : f32
    %350 = arith.addf %343, %349 : f32
    %351 = arith.mulf %109, %322 : vector<64x1xf32>
    %352 = vector.shape_cast %351 : vector<64x1xf32> to vector<1x64x1xf32>
    %cst_95 = arith.constant dense<0.000000e+00> : vector<1xf32>
    %353 = vector.multi_reduction <add>, %352, %cst_95 [1, 2] : vector<1x64x1xf32> to vector<1xf32>
    %354 = vector.shape_cast %353 : vector<1xf32> to vector<1x1x1xf32>
    %355 = vector.extract %354[0, 0, 0] : f32 from vector<1x1x1xf32>
    %356 = math.sqrt %355 : f32
    %357 = arith.addf %350, %356 : f32
    %358 = arith.mulf %330, %337 : f32
    %359 = arith.addf %309, %358 : f32
    %360 = arith.mulf %330, %357 : f32
    %361 = arith.addf %311, %360 : f32
    %cst_96 = arith.constant 5.000000e+00 : f32
    %362 = vector.broadcast %cst_96 : f32 to vector<64x1xf32>
    %363 = arith.cmpf oeq, %19, %362 : vector<64x1xf32>
    %364 = arith.extui %363 : vector<64x1xi1> to vector<64x1xi32>
    %365 = arith.sitofp %364 : vector<64x1xi32> to vector<64x1xf32>
    %cst_97 = arith.constant 4.000000e+01 : f32
    %366 = vector.broadcast %cst_97 : f32 to vector<64x1xf32>
    %367 = arith.cmpf oge, %111, %366 : vector<64x1xf32>
    %cst_98 = arith.constant 4.800000e+01 : f32
    %368 = vector.broadcast %cst_98 : f32 to vector<64x1xf32>
    %369 = arith.cmpf olt, %111, %368 : vector<64x1xf32>
    %370 = arith.andi %367, %369 : vector<64x1xi1>
    %371 = arith.extui %370 : vector<64x1xi1> to vector<64x1xi32>
    %372 = arith.sitofp %371 : vector<64x1xi32> to vector<64x1xf32>
    %373 = arith.mulf %17, %365 : vector<64x1xf32>
    %374 = vector.shape_cast %373 : vector<64x1xf32> to vector<1x64x1xf32>
    %cst_99 = arith.constant dense<0.000000e+00> : vector<1xf32>
    %375 = vector.multi_reduction <add>, %374, %cst_99 [1, 2] : vector<1x64x1xf32> to vector<1xf32>
    %376 = vector.shape_cast %375 : vector<1xf32> to vector<1x1x1xf32>
    %377 = vector.extract %376[0, 0, 0] : f32 from vector<1x1x1xf32>
    %cst_100 = arith.constant 0.000000e+00 : f32
    %378 = arith.cmpf ogt, %377, %cst_100 : f32
    %379 = arith.extui %378 : i1 to i32
    %380 = arith.sitofp %379 : i32 to f32
    %381 = arith.mulf %98, %365 : vector<64x1xf32>
    %382 = vector.shape_cast %381 : vector<64x1xf32> to vector<1x64x1xf32>
    %cst_101 = arith.constant dense<0.000000e+00> : vector<1xf32>
    %383 = vector.multi_reduction <add>, %382, %cst_101 [1, 2] : vector<1x64x1xf32> to vector<1xf32>
    %384 = vector.shape_cast %383 : vector<1xf32> to vector<1x1x1xf32>
    %385 = vector.extract %384[0, 0, 0] : f32 from vector<1x1x1xf32>
    %cst_102 = arith.constant 1.000000e+00 : f32
    %386 = arith.maximumf %377, %cst_102 : f32
    %387 = arith.divf %385, %386 : f32
    %388 = arith.mulf %102, %365 : vector<64x1xf32>
    %389 = vector.shape_cast %388 : vector<64x1xf32> to vector<1x64x1xf32>
    %cst_103 = arith.constant dense<0.000000e+00> : vector<1xf32>
    %390 = vector.multi_reduction <add>, %389, %cst_103 [1, 2] : vector<1x64x1xf32> to vector<1xf32>
    %391 = vector.shape_cast %390 : vector<1xf32> to vector<1x1x1xf32>
    %392 = vector.extract %391[0, 0, 0] : f32 from vector<1x1x1xf32>
    %393 = math.sqrt %392 : f32
    %394 = arith.mulf %106, %365 : vector<64x1xf32>
    %395 = vector.shape_cast %394 : vector<64x1xf32> to vector<1x64x1xf32>
    %cst_104 = arith.constant dense<0.000000e+00> : vector<1xf32>
    %396 = vector.multi_reduction <add>, %395, %cst_104 [1, 2] : vector<1x64x1xf32> to vector<1xf32>
    %397 = vector.shape_cast %396 : vector<1xf32> to vector<1x1x1xf32>
    %398 = vector.extract %397[0, 0, 0] : f32 from vector<1x1x1xf32>
    %399 = math.sqrt %398 : f32
    %400 = arith.addf %393, %399 : f32
    %401 = arith.mulf %109, %372 : vector<64x1xf32>
    %402 = vector.shape_cast %401 : vector<64x1xf32> to vector<1x64x1xf32>
    %cst_105 = arith.constant dense<0.000000e+00> : vector<1xf32>
    %403 = vector.multi_reduction <add>, %402, %cst_105 [1, 2] : vector<1x64x1xf32> to vector<1xf32>
    %404 = vector.shape_cast %403 : vector<1xf32> to vector<1x1x1xf32>
    %405 = vector.extract %404[0, 0, 0] : f32 from vector<1x1x1xf32>
    %406 = math.sqrt %405 : f32
    %407 = arith.addf %400, %406 : f32
    %408 = arith.mulf %380, %387 : f32
    %409 = arith.addf %359, %408 : f32
    %410 = arith.mulf %380, %407 : f32
    %411 = arith.addf %361, %410 : f32
    %cst_106 = arith.constant 6.000000e+00 : f32
    %412 = vector.broadcast %cst_106 : f32 to vector<64x1xf32>
    %413 = arith.cmpf oeq, %19, %412 : vector<64x1xf32>
    %414 = arith.extui %413 : vector<64x1xi1> to vector<64x1xi32>
    %415 = arith.sitofp %414 : vector<64x1xi32> to vector<64x1xf32>
    %cst_107 = arith.constant 4.800000e+01 : f32
    %416 = vector.broadcast %cst_107 : f32 to vector<64x1xf32>
    %417 = arith.cmpf oge, %111, %416 : vector<64x1xf32>
    %cst_108 = arith.constant 5.600000e+01 : f32
    %418 = vector.broadcast %cst_108 : f32 to vector<64x1xf32>
    %419 = arith.cmpf olt, %111, %418 : vector<64x1xf32>
    %420 = arith.andi %417, %419 : vector<64x1xi1>
    %421 = arith.extui %420 : vector<64x1xi1> to vector<64x1xi32>
    %422 = arith.sitofp %421 : vector<64x1xi32> to vector<64x1xf32>
    %423 = arith.mulf %17, %415 : vector<64x1xf32>
    %424 = vector.shape_cast %423 : vector<64x1xf32> to vector<1x64x1xf32>
    %cst_109 = arith.constant dense<0.000000e+00> : vector<1xf32>
    %425 = vector.multi_reduction <add>, %424, %cst_109 [1, 2] : vector<1x64x1xf32> to vector<1xf32>
    %426 = vector.shape_cast %425 : vector<1xf32> to vector<1x1x1xf32>
    %427 = vector.extract %426[0, 0, 0] : f32 from vector<1x1x1xf32>
    %cst_110 = arith.constant 0.000000e+00 : f32
    %428 = arith.cmpf ogt, %427, %cst_110 : f32
    %429 = arith.extui %428 : i1 to i32
    %430 = arith.sitofp %429 : i32 to f32
    %431 = arith.mulf %98, %415 : vector<64x1xf32>
    %432 = vector.shape_cast %431 : vector<64x1xf32> to vector<1x64x1xf32>
    %cst_111 = arith.constant dense<0.000000e+00> : vector<1xf32>
    %433 = vector.multi_reduction <add>, %432, %cst_111 [1, 2] : vector<1x64x1xf32> to vector<1xf32>
    %434 = vector.shape_cast %433 : vector<1xf32> to vector<1x1x1xf32>
    %435 = vector.extract %434[0, 0, 0] : f32 from vector<1x1x1xf32>
    %cst_112 = arith.constant 1.000000e+00 : f32
    %436 = arith.maximumf %427, %cst_112 : f32
    %437 = arith.divf %435, %436 : f32
    %438 = arith.mulf %102, %415 : vector<64x1xf32>
    %439 = vector.shape_cast %438 : vector<64x1xf32> to vector<1x64x1xf32>
    %cst_113 = arith.constant dense<0.000000e+00> : vector<1xf32>
    %440 = vector.multi_reduction <add>, %439, %cst_113 [1, 2] : vector<1x64x1xf32> to vector<1xf32>
    %441 = vector.shape_cast %440 : vector<1xf32> to vector<1x1x1xf32>
    %442 = vector.extract %441[0, 0, 0] : f32 from vector<1x1x1xf32>
    %443 = math.sqrt %442 : f32
    %444 = arith.mulf %106, %415 : vector<64x1xf32>
    %445 = vector.shape_cast %444 : vector<64x1xf32> to vector<1x64x1xf32>
    %cst_114 = arith.constant dense<0.000000e+00> : vector<1xf32>
    %446 = vector.multi_reduction <add>, %445, %cst_114 [1, 2] : vector<1x64x1xf32> to vector<1xf32>
    %447 = vector.shape_cast %446 : vector<1xf32> to vector<1x1x1xf32>
    %448 = vector.extract %447[0, 0, 0] : f32 from vector<1x1x1xf32>
    %449 = math.sqrt %448 : f32
    %450 = arith.addf %443, %449 : f32
    %451 = arith.mulf %109, %422 : vector<64x1xf32>
    %452 = vector.shape_cast %451 : vector<64x1xf32> to vector<1x64x1xf32>
    %cst_115 = arith.constant dense<0.000000e+00> : vector<1xf32>
    %453 = vector.multi_reduction <add>, %452, %cst_115 [1, 2] : vector<1x64x1xf32> to vector<1xf32>
    %454 = vector.shape_cast %453 : vector<1xf32> to vector<1x1x1xf32>
    %455 = vector.extract %454[0, 0, 0] : f32 from vector<1x1x1xf32>
    %456 = math.sqrt %455 : f32
    %457 = arith.addf %450, %456 : f32
    %458 = arith.mulf %430, %437 : f32
    %459 = arith.addf %409, %458 : f32
    %460 = arith.mulf %430, %457 : f32
    %461 = arith.addf %411, %460 : f32
    %cst_116 = arith.constant 7.000000e+00 : f32
    %462 = vector.broadcast %cst_116 : f32 to vector<64x1xf32>
    %463 = arith.cmpf oeq, %19, %462 : vector<64x1xf32>
    %464 = arith.extui %463 : vector<64x1xi1> to vector<64x1xi32>
    %465 = arith.sitofp %464 : vector<64x1xi32> to vector<64x1xf32>
    %cst_117 = arith.constant 5.600000e+01 : f32
    %466 = vector.broadcast %cst_117 : f32 to vector<64x1xf32>
    %467 = arith.cmpf oge, %111, %466 : vector<64x1xf32>
    %cst_118 = arith.constant 6.400000e+01 : f32
    %468 = vector.broadcast %cst_118 : f32 to vector<64x1xf32>
    %469 = arith.cmpf olt, %111, %468 : vector<64x1xf32>
    %470 = arith.andi %467, %469 : vector<64x1xi1>
    %471 = arith.extui %470 : vector<64x1xi1> to vector<64x1xi32>
    %472 = arith.sitofp %471 : vector<64x1xi32> to vector<64x1xf32>
    %473 = arith.mulf %17, %465 : vector<64x1xf32>
    %474 = vector.shape_cast %473 : vector<64x1xf32> to vector<1x64x1xf32>
    %cst_119 = arith.constant dense<0.000000e+00> : vector<1xf32>
    %475 = vector.multi_reduction <add>, %474, %cst_119 [1, 2] : vector<1x64x1xf32> to vector<1xf32>
    %476 = vector.shape_cast %475 : vector<1xf32> to vector<1x1x1xf32>
    %477 = vector.extract %476[0, 0, 0] : f32 from vector<1x1x1xf32>
    %cst_120 = arith.constant 0.000000e+00 : f32
    %478 = arith.cmpf ogt, %477, %cst_120 : f32
    %479 = arith.extui %478 : i1 to i32
    %480 = arith.sitofp %479 : i32 to f32
    %481 = arith.mulf %98, %465 : vector<64x1xf32>
    %482 = vector.shape_cast %481 : vector<64x1xf32> to vector<1x64x1xf32>
    %cst_121 = arith.constant dense<0.000000e+00> : vector<1xf32>
    %483 = vector.multi_reduction <add>, %482, %cst_121 [1, 2] : vector<1x64x1xf32> to vector<1xf32>
    %484 = vector.shape_cast %483 : vector<1xf32> to vector<1x1x1xf32>
    %485 = vector.extract %484[0, 0, 0] : f32 from vector<1x1x1xf32>
    %cst_122 = arith.constant 1.000000e+00 : f32
    %486 = arith.maximumf %477, %cst_122 : f32
    %487 = arith.divf %485, %486 : f32
    %488 = arith.mulf %102, %465 : vector<64x1xf32>
    %489 = vector.shape_cast %488 : vector<64x1xf32> to vector<1x64x1xf32>
    %cst_123 = arith.constant dense<0.000000e+00> : vector<1xf32>
    %490 = vector.multi_reduction <add>, %489, %cst_123 [1, 2] : vector<1x64x1xf32> to vector<1xf32>
    %491 = vector.shape_cast %490 : vector<1xf32> to vector<1x1x1xf32>
    %492 = vector.extract %491[0, 0, 0] : f32 from vector<1x1x1xf32>
    %493 = math.sqrt %492 : f32
    %494 = arith.mulf %106, %465 : vector<64x1xf32>
    %495 = vector.shape_cast %494 : vector<64x1xf32> to vector<1x64x1xf32>
    %cst_124 = arith.constant dense<0.000000e+00> : vector<1xf32>
    %496 = vector.multi_reduction <add>, %495, %cst_124 [1, 2] : vector<1x64x1xf32> to vector<1xf32>
    %497 = vector.shape_cast %496 : vector<1xf32> to vector<1x1x1xf32>
    %498 = vector.extract %497[0, 0, 0] : f32 from vector<1x1x1xf32>
    %499 = math.sqrt %498 : f32
    %500 = arith.addf %493, %499 : f32
    %501 = arith.mulf %109, %472 : vector<64x1xf32>
    %502 = vector.shape_cast %501 : vector<64x1xf32> to vector<1x64x1xf32>
    %cst_125 = arith.constant dense<0.000000e+00> : vector<1xf32>
    %503 = vector.multi_reduction <add>, %502, %cst_125 [1, 2] : vector<1x64x1xf32> to vector<1xf32>
    %504 = vector.shape_cast %503 : vector<1xf32> to vector<1x1x1xf32>
    %505 = vector.extract %504[0, 0, 0] : f32 from vector<1x1x1xf32>
    %506 = math.sqrt %505 : f32
    %507 = arith.addf %500, %506 : f32
    %508 = arith.mulf %480, %487 : f32
    %509 = arith.addf %459, %508 : f32
    %510 = arith.mulf %480, %507 : f32
    %511 = arith.addf %461, %510 : f32
    %512 = tpu.iota {dimensions = array<i32: 0>} : vector<8x128xi32>
    %513 = tpu.iota {dimensions = array<i32: 1>} : vector<8x128xi32>
    %c0_i32 = arith.constant 0 : i32
    %514 = vector.broadcast %c0_i32 : i32 to vector<8x128xi32>
    %515 = arith.cmpi eq, %512, %514 : vector<8x128xi32>
    %c0_i32_126 = arith.constant 0 : i32
    %516 = vector.broadcast %c0_i32_126 : i32 to vector<8x128xi32>
    %517 = arith.cmpi eq, %513, %516 : vector<8x128xi32>
    %518 = arith.andi %515, %517 : vector<8x128xi1>
    %c0_i32_127 = arith.constant 0 : i32
    %519 = vector.broadcast %c0_i32_127 : i32 to vector<8x128xi32>
    %520 = arith.cmpi eq, %512, %519 : vector<8x128xi32>
    %c1_i32 = arith.constant 1 : i32
    %521 = vector.broadcast %c1_i32 : i32 to vector<8x128xi32>
    %522 = arith.cmpi eq, %513, %521 : vector<8x128xi32>
    %523 = arith.andi %520, %522 : vector<8x128xi1>
    %cst_128 = arith.constant 0.000000e+00 : f32
    %524 = vector.broadcast %511 : f32 to vector<8x128xf32>
    %525 = vector.broadcast %cst_128 : f32 to vector<8x128xf32>
    %526 = arith.select %523, %524, %525 : vector<8x128xi1>, vector<8x128xf32>
    %527 = vector.broadcast %509 : f32 to vector<8x128xf32>
    %528 = arith.select %518, %527, %526 : vector<8x128xi1>, vector<8x128xf32>
    %c0_129 = arith.constant 0 : index
    %c0_130 = arith.constant 0 : index
    %529 = vector.load %arg11[%c0_129, %c0_130] : memref<8x128xf32, #tpu.memory_space<vmem>>, vector<8x128xf32>
    tpu.vector_store %arg11[%c0_129, %c0_130], %528 {strides = array<i32>} : memref<8x128xf32, #tpu.memory_space<vmem>>, vector<8x128xf32>,
    return
  }
}

</mosaic_0001>

<llo_original>
// kernel: compute_loss.3
$region0: #{compute_loss.3}
  #allocation0 [shape = 'u32[]', space=smem, size = 0x4, offset = 0x4, fixed_abs, tag = 'smem constant byte address 0x4 - core index']
  #allocation1 [shape = 'u32[72,128]{1,0:T(1,128)}', space=vmem, size = 0x9000, scoped, tag = 'internal scratch']
  %s0 = inlined_call_operand.vmem [shape: bf16[64,128], index: 0, kind: input, shape index: {}]
  %s1 = inlined_call_operand.vmem [shape: bf16[64,128], index: 1, kind: input, shape index: {}]
  %s2 = inlined_call_operand.vmem [shape: bf16[64,128], index: 2, kind: input, shape index: {}]
  %s3 = inlined_call_operand.vmem [shape: bf16[64,128], index: 3, kind: input, shape index: {}]
  %s4 = inlined_call_operand.vmem [shape: bf16[64,128], index: 4, kind: input, shape index: {}]
  %s5 = inlined_call_operand.vmem [shape: f32[64,128], index: 5, kind: input, shape index: {}]
  %s6 = inlined_call_operand.vmem [shape: bf16[64,128], index: 6, kind: input, shape index: {}]
  %s7 = inlined_call_operand.vmem [shape: f32[128,128], index: 7, kind: input, shape index: {}]
  %s8 = inlined_call_operand.vmem [shape: f32[1,128], index: 8, kind: input, shape index: {}]
  %s9 = inlined_call_operand.vmem [shape: f32[128,128], index: 9, kind: input, shape index: {}]
  %s10 = inlined_call_operand.vmem [shape: f32[1,128], index: 10, kind: input, shape index: {}]
  %s11 = inlined_call_operand.vmem [shape: f32[8,128], index: 11, kind: output, shape index: {}]
  %s12 = sld [smem:[#allocation0]]
  $region54: #{compute_loss.3} parent=0
    _
  %s14 = ssub.s32 1, %s12
  %s15 = scalar_select 0, %s14, %s12
  // Predicated region
  $region2: #{compute_loss.3} parent=0 // pred_check
    _
  $region3: #{compute_loss.3} parent=0 // pred_check_branch
    %17 = sbr.rel (0) target = $region5
  $region4: #{compute_loss.3} parent=0 // pred_region
    _
  $region5: #{compute_loss.3} parent=0 // pred_fallthru
    _
  // Predicated region
  $region6: #{compute_loss.3} parent=0 // pred_check
    _
  $region7: #{compute_loss.3} parent=0 // pred_check_branch
    %19 = sbr.rel (0) target = $region9
  $region8: #{compute_loss.3} parent=0 // pred_region
    _
  $region9: #{compute_loss.3} parent=0 // pred_fallthru
    _
  // Predicated region
  $region10: #{compute_loss.3} parent=0 // pred_check
    _
  $region11: #{compute_loss.3} parent=0 // pred_check_branch
    %21 = sbr.rel (0) target = $region13
  $region12: #{compute_loss.3} parent=0 // pred_region
    _
  $region13: #{compute_loss.3} parent=0 // pred_fallthru
    _
  // Predicated region
  $region14: #{compute_loss.3} parent=0 // pred_check
    _
  $region15: #{compute_loss.3} parent=0 // pred_check_branch
    %23 = sbr.rel (0) target = $region17
  $region16: #{compute_loss.3} parent=0 // pred_region
    _
  $region17: #{compute_loss.3} parent=0 // pred_fallthru
    _
  // Predicated region
  $region18: #{compute_loss.3} parent=0 // pred_check
    _
  $region19: #{compute_loss.3} parent=0 // pred_check_branch
    %25 = sbr.rel (0) target = $region21
  $region20: #{compute_loss.3} parent=0 // pred_region
    _
  $region21: #{compute_loss.3} parent=0 // pred_fallthru
    _
  // Predicated region
  $region22: #{compute_loss.3} parent=0 // pred_check
    _
  $region23: #{compute_loss.3} parent=0 // pred_check_branch
    %27 = sbr.rel (0) target = $region25
  $region24: #{compute_loss.3} parent=0 // pred_region
    _
  $region25: #{compute_loss.3} parent=0 // pred_fallthru
    _
  // Predicated region
  $region26: #{compute_loss.3} parent=0 // pred_check
    _
  $region27: #{compute_loss.3} parent=0 // pred_check_branch
    %29 = sbr.rel (0) target = $region29
  $region28: #{compute_loss.3} parent=0 // pred_region
    _
  $region29: #{compute_loss.3} parent=0 // pred_fallthru
    _
  // Predicated region
  $region30: #{compute_loss.3} parent=0 // pred_check
    _
  $region31: #{compute_loss.3} parent=0 // pred_check_branch
    %31 = sbr.rel (0) target = $region33
  $region32: #{compute_loss.3} parent=0 // pred_region
    _
  $region33: #{compute_loss.3} parent=0 // pred_fallthru
    _
  // Predicated region
  $region34: #{compute_loss.3} parent=0 // pred_check
    _
  $region35: #{compute_loss.3} parent=0 // pred_check_branch
    %33 = sbr.rel (0) target = $region37
  $region36: #{compute_loss.3} parent=0 // pred_region
    _
  $region37: #{compute_loss.3} parent=0 // pred_fallthru
    _
  // Predicated region
  $region38: #{compute_loss.3} parent=0 // pred_check
    _
  $region39: #{compute_loss.3} parent=0 // pred_check_branch
    %35 = sbr.rel (0) target = $region41
  $region40: #{compute_loss.3} parent=0 // pred_region
    _
  $region41: #{compute_loss.3} parent=0 // pred_fallthru
    _
  // Predicated region
  $region42: #{compute_loss.3} parent=0 // pred_check
    _
  $region43: #{compute_loss.3} parent=0 // pred_check_branch
    %37 = sbr.rel (0) target = $region45
  $region44: #{compute_loss.3} parent=0 // pred_region
    _
  $region45: #{compute_loss.3} parent=0 // pred_fallthru
    _
  %v38 = vld [vmem:[%s0] sm:$0xf]
  %v39 = vld [vmem:[%s0 + $0x4] sm:$0xf]
  %v40 = vld [vmem:[%s0 + $0x8] sm:$0xf]
  %v41 = vld [vmem:[%s0 + $0xc] sm:$0xf]
  %v42 = vld [vmem:[%s0 + $0x10] sm:$0xf]
  %v43 = vld [vmem:[%s0 + $0x14] sm:$0xf]
  %v44 = vld [vmem:[%s0 + $0x18] sm:$0xf]
  %v45 = vld [vmem:[%s0 + $0x1c] sm:$0xf]
  %v46 = vunpack.c.l.bf16 %v38
  %v47 = vunpack.c.l.bf16 %v39
  %v48 = vunpack.c.l.bf16 %v40
  %v49 = vunpack.c.l.bf16 %v41
  %v50 = vunpack.c.l.bf16 %v42
  %v51 = vunpack.c.l.bf16 %v43
  %v52 = vunpack.c.l.bf16 %v44
  %v53 = vunpack.c.l.bf16 %v45
  %v54 = vld [vmem:[%s1] sm:$0xf]
  %v55 = vld [vmem:[%s1 + $0x4] sm:$0xf]
  %v56 = vld [vmem:[%s1 + $0x8] sm:$0xf]
  %v57 = vld [vmem:[%s1 + $0xc] sm:$0xf]
  %v58 = vld [vmem:[%s1 + $0x10] sm:$0xf]
  %v59 = vld [vmem:[%s1 + $0x14] sm:$0xf]
  %v60 = vld [vmem:[%s1 + $0x18] sm:$0xf]
  %v61 = vld [vmem:[%s1 + $0x1c] sm:$0xf]
  %v62 = vunpack.c.l.bf16 %v54
  %v63 = vunpack.c.l.bf16 %v55
  %v64 = vunpack.c.l.bf16 %v56
  %v65 = vunpack.c.l.bf16 %v57
  %v66 = vunpack.c.l.bf16 %v58
  %v67 = vunpack.c.l.bf16 %v59
  %v68 = vunpack.c.l.bf16 %v60
  %v69 = vunpack.c.l.bf16 %v61
  %v70 = vld [vmem:[%s2] sm:$0xf]
  %v71 = vld [vmem:[%s2 + $0x4] sm:$0xf]
  %v72 = vld [vmem:[%s2 + $0x8] sm:$0xf]
  %v73 = vld [vmem:[%s2 + $0xc] sm:$0xf]
  %v74 = vld [vmem:[%s2 + $0x10] sm:$0xf]
  %v75 = vld [vmem:[%s2 + $0x14] sm:$0xf]
  %v76 = vld [vmem:[%s2 + $0x18] sm:$0xf]
  %v77 = vld [vmem:[%s2 + $0x1c] sm:$0xf]
  %v78 = vunpack.c.l.bf16 %v70
  %v79 = vunpack.c.l.bf16 %v71
  %v80 = vunpack.c.l.bf16 %v72
  %v81 = vunpack.c.l.bf16 %v73
  %v82 = vunpack.c.l.bf16 %v74
  %v83 = vunpack.c.l.bf16 %v75
  %v84 = vunpack.c.l.bf16 %v76
  %v85 = vunpack.c.l.bf16 %v77
  %v86 = vld [vmem:[%s3] sm:$0xf]
  %v87 = vld [vmem:[%s3 + $0x4] sm:$0xf]
  %v88 = vld [vmem:[%s3 + $0x8] sm:$0xf]
  %v89 = vld [vmem:[%s3 + $0xc] sm:$0xf]
  %v90 = vld [vmem:[%s3 + $0x10] sm:$0xf]
  %v91 = vld [vmem:[%s3 + $0x14] sm:$0xf]
  %v92 = vld [vmem:[%s3 + $0x18] sm:$0xf]
  %v93 = vld [vmem:[%s3 + $0x1c] sm:$0xf]
  %v94 = vunpack.c.l.bf16 %v86
  %v95 = vunpack.c.l.bf16 %v87
  %v96 = vunpack.c.l.bf16 %v88
  %v97 = vunpack.c.l.bf16 %v89
  %v98 = vunpack.c.l.bf16 %v90
  %v99 = vunpack.c.l.bf16 %v91
  %v100 = vunpack.c.l.bf16 %v92
  %v101 = vunpack.c.l.bf16 %v93
  %v102 = vld [vmem:[%s4] sm:$0xf]
  %v103 = vld [vmem:[%s4 + $0x4] sm:$0xf]
  %v104 = vld [vmem:[%s4 + $0x8] sm:$0xf]
  %v105 = vld [vmem:[%s4 + $0xc] sm:$0xf]
  %v106 = vld [vmem:[%s4 + $0x10] sm:$0xf]
  %v107 = vld [vmem:[%s4 + $0x14] sm:$0xf]
  %v108 = vld [vmem:[%s4 + $0x18] sm:$0xf]
  %v109 = vld [vmem:[%s4 + $0x1c] sm:$0xf]
  %v110 = vunpack.c.l.bf16 %v102
  %v111 = vunpack.c.l.bf16 %v103
  %v112 = vunpack.c.l.bf16 %v104
  %v113 = vunpack.c.l.bf16 %v105
  %v114 = vunpack.c.l.bf16 %v106
  %v115 = vunpack.c.l.bf16 %v107
  %v116 = vunpack.c.l.bf16 %v108
  %v117 = vunpack.c.l.bf16 %v109
  %v118 = vld [vmem:[%s6] sm:$0xf]
  %v119 = vld [vmem:[%s6 + $0x4] sm:$0xf]
  %v120 = vld [vmem:[%s6 + $0x8] sm:$0xf]
  %v121 = vld [vmem:[%s6 + $0xc] sm:$0xf]
  %v122 = vld [vmem:[%s6 + $0x10] sm:$0xf]
  %v123 = vld [vmem:[%s6 + $0x14] sm:$0xf]
  %v124 = vld [vmem:[%s6 + $0x18] sm:$0xf]
  %v125 = vld [vmem:[%s6 + $0x1c] sm:$0xf]
  %v126 = vunpack.c.l.bf16 %v118
  %v127 = vunpack.c.l.bf16 %v119
  %v128 = vunpack.c.l.bf16 %v120
  %v129 = vunpack.c.l.bf16 %v121
  %v130 = vunpack.c.l.bf16 %v122
  %v131 = vunpack.c.l.bf16 %v123
  %v132 = vunpack.c.l.bf16 %v124
  %v133 = vunpack.c.l.bf16 %v125
  %v134 = vld [vmem:[%s7] sm:$0xff]
  %v135 = vld [vmem:[%s7 + $0x8] sm:$0xff]
  %v136 = vld [vmem:[%s7 + $0x10] sm:$0xff]
  %v137 = vld [vmem:[%s7 + $0x18] sm:$0xff]
  %v138 = vld [vmem:[%s7 + $0x20] sm:$0xff]
  %v139 = vld [vmem:[%s7 + $0x28] sm:$0xff]
  %v140 = vld [vmem:[%s7 + $0x30] sm:$0xff]
  %v141 = vld [vmem:[%s7 + $0x38] sm:$0xff]
  %v142 = vld [vmem:[%s7 + $0x40] sm:$0xff]
  %v143 = vld [vmem:[%s7 + $0x48] sm:$0xff]
  %v144 = vld [vmem:[%s7 + $0x50] sm:$0xff]
  %v145 = vld [vmem:[%s7 + $0x58] sm:$0xff]
  %v146 = vld [vmem:[%s7 + $0x60] sm:$0xff]
  %v147 = vld [vmem:[%s7 + $0x68] sm:$0xff]
  %v148 = vld [vmem:[%s7 + $0x70] sm:$0xff]
  %v149 = vld [vmem:[%s7 + $0x78] sm:$0xff]
  %v150 = vld [vmem:[%s8] sm:$0x1]
  %v151 = vld [vmem:[%s9] sm:$0xff]
  %v152 = vld [vmem:[%s9 + $0x8] sm:$0xff]
  %v153 = vld [vmem:[%s9 + $0x10] sm:$0xff]
  %v154 = vld [vmem:[%s9 + $0x18] sm:$0xff]
  %v155 = vld [vmem:[%s9 + $0x20] sm:$0xff]
  %v156 = vld [vmem:[%s9 + $0x28] sm:$0xff]
  %v157 = vld [vmem:[%s9 + $0x30] sm:$0xff]
  %v158 = vld [vmem:[%s9 + $0x38] sm:$0xff]
  %v159 = vld [vmem:[%s9 + $0x40] sm:$0xff]
  %v160 = vld [vmem:[%s9 + $0x48] sm:$0xff]
  %v161 = vld [vmem:[%s9 + $0x50] sm:$0xff]
  %v162 = vld [vmem:[%s9 + $0x58] sm:$0xff]
  %v163 = vld [vmem:[%s9 + $0x60] sm:$0xff]
  %v164 = vld [vmem:[%s9 + $0x68] sm:$0xff]
  %v165 = vld [vmem:[%s9 + $0x70] sm:$0xff]
  %v166 = vld [vmem:[%s9 + $0x78] sm:$0xff]
  %v167 = vld [vmem:[%s10] sm:$0x1]
  %v168 = vld [vmem:[%s5] sm:$0xff]
  %v169 = vld [vmem:[%s5 + $0x8] sm:$0xff]
  %v170 = vld [vmem:[%s5 + $0x10] sm:$0xff]
  %v171 = vld [vmem:[%s5 + $0x18] sm:$0xff]
  %v172 = vld [vmem:[%s5 + $0x20] sm:$0xff]
  %v173 = vld [vmem:[%s5 + $0x28] sm:$0xff]
  %v174 = vld [vmem:[%s5 + $0x30] sm:$0xff]
  %v175 = vld [vmem:[%s5 + $0x38] sm:$0xff]
  %v176 = vmul.f32 %v78, %v62
  %v177 = vmul.f32 %v79, %v63
  %v178 = vmul.f32 %v80, %v64
  %v179 = vmul.f32 %v81, %v65
  %v180 = vmul.f32 %v82, %v66
  %v181 = vmul.f32 %v83, %v67
  %v182 = vmul.f32 %v84, %v68
  %v183 = vmul.f32 %v85, %v69
  %v185 = vperm.slane %v167, 0
  %187 = vmatpush.xpose.msra.mxu0 %v166
  %188 = vmatpush.xpose.msra.mxu0 %v165
  %189 = vmatpush.xpose.msra.mxu0 %v164
  %190 = vmatpush.xpose.msra.mxu0 %v163
  %191 = vmatpush.xpose.msra.mxu0 %v162
  %192 = vmatpush.xpose.msra.mxu0 %v161
  %193 = vmatpush.xpose.msra.mxu0 %v160
  %194 = vmatpush.xpose.msra.mxu0 %v159
  %195 = vmatpush.xpose.msra.mxu0 %v158
  %196 = vmatpush.xpose.msra.mxu0 %v157
  %197 = vmatpush.xpose.msra.mxu0 %v156
  %198 = vmatpush.xpose.msra.mxu0 %v155
  %199 = vmatpush.xpose.msra.mxu0 %v154
  %200 = vmatpush.xpose.msra.mxu0 %v153
  %201 = vmatpush.xpose.msra.mxu0 %v152
  %202 = vmatpush.xpose.msra.mxu0 %v151
  %203 = vmatmul.f32.gmra.mxu0 %v176
  %v204 = vpop.f32.mrf.mxu0
  %v205 = vadd.f32 %v185, %v204
  %206 = vmatmul.f32.gmra.mxu0 %v177
  %v207 = vpop.f32.mrf.mxu0
  %v208 = vadd.f32 %v185, %v207
  %209 = vmatmul.f32.gmra.mxu0 %v178
  %v210 = vpop.f32.mrf.mxu0
  %v211 = vadd.f32 %v185, %v210
  %212 = vmatmul.f32.gmra.mxu0 %v179
  %v213 = vpop.f32.mrf.mxu0
  %v214 = vadd.f32 %v185, %v213
  %215 = vmatmul.f32.gmra.mxu0 %v180
  %v216 = vpop.f32.mrf.mxu0
  %v217 = vadd.f32 %v185, %v216
  %218 = vmatmul.f32.gmra.mxu0 %v181
  %v219 = vpop.f32.mrf.mxu0
  %v220 = vadd.f32 %v185, %v219
  %221 = vmatmul.f32.gmra.mxu0 %v182
  %v222 = vpop.f32.mrf.mxu0
  %v223 = vadd.f32 %v185, %v222
  %224 = vmatmul.f32.gmra.mxu0 %v183
  %v225 = vpop.f32.mrf.mxu0
  %v226 = vadd.f32 %v185, %v225
  %227 = vdwg.mxu0
  %229 = vset.pattern.permute.xlu0 2
  %230 = vperm.xlu0 %229, %v168
  %v231 = vpop.permute.xlu0 %230
  %234 = vset.pattern.permute.xlu0 2
  %235 = vperm.xlu0 %234, %v169
  %v236 = vpop.permute.xlu0 %235
  %239 = vset.pattern.permute.xlu0 2
  %240 = vperm.xlu0 %239, %v170
  %v241 = vpop.permute.xlu0 %240
  %244 = vset.pattern.permute.xlu0 2
  %245 = vperm.xlu0 %244, %v171
  %v246 = vpop.permute.xlu0 %245
  %249 = vset.pattern.permute.xlu0 2
  %250 = vperm.xlu0 %249, %v172
  %v251 = vpop.permute.xlu0 %250
  %254 = vset.pattern.permute.xlu0 2
  %255 = vperm.xlu0 %254, %v173
  %v256 = vpop.permute.xlu0 %255
  %259 = vset.pattern.permute.xlu0 2
  %260 = vperm.xlu0 %259, %v174
  %v261 = vpop.permute.xlu0 %260
  %264 = vset.pattern.permute.xlu0 2
  %265 = vperm.xlu0 %264, %v175
  %v266 = vpop.permute.xlu0 %265
  %v268 = vmul.f32 %v231, %v205
  %v269 = vmul.f32 %v236, %v208
  %v270 = vmul.f32 %v241, %v211
  %v271 = vmul.f32 %v246, %v214
  %v272 = vmul.f32 %v251, %v217
  %v273 = vmul.f32 %v256, %v220
  %v274 = vmul.f32 %v261, %v223
  %v275 = vmul.f32 %v266, %v226
  %v276 = vsub.f32 1.0, %v168
  %v277 = vsub.f32 1.0, %v169
  %v278 = vsub.f32 1.0, %v170
  %v279 = vsub.f32 1.0, %v171
  %v280 = vsub.f32 1.0, %v172
  %v281 = vsub.f32 1.0, %v173
  %v282 = vsub.f32 1.0, %v174
  %v283 = vsub.f32 1.0, %v175
  %285 = vset.pattern.permute.xlu0 2
  %286 = vperm.xlu0 %285, %v276
  %v287 = vpop.permute.xlu0 %286
  %290 = vset.pattern.permute.xlu0 2
  %291 = vperm.xlu0 %290, %v277
  %v292 = vpop.permute.xlu0 %291
  %295 = vset.pattern.permute.xlu0 2
  %296 = vperm.xlu0 %295, %v278
  %v297 = vpop.permute.xlu0 %296
  %300 = vset.pattern.permute.xlu0 2
  %301 = vperm.xlu0 %300, %v279
  %v302 = vpop.permute.xlu0 %301
  %305 = vset.pattern.permute.xlu0 2
  %306 = vperm.xlu0 %305, %v280
  %v307 = vpop.permute.xlu0 %306
  %310 = vset.pattern.permute.xlu0 2
  %311 = vperm.xlu0 %310, %v281
  %v312 = vpop.permute.xlu0 %311
  %315 = vset.pattern.permute.xlu0 2
  %316 = vperm.xlu0 %315, %v282
  %v317 = vpop.permute.xlu0 %316
  %320 = vset.pattern.permute.xlu0 2
  %321 = vperm.xlu0 %320, %v283
  %v322 = vpop.permute.xlu0 %321
  %v324 = vmul.f32 %v287, %v62
  %v325 = vmul.f32 %v292, %v63
  %v326 = vmul.f32 %v297, %v64
  %v327 = vmul.f32 %v302, %v65
  %v328 = vmul.f32 %v307, %v66
  %v329 = vmul.f32 %v312, %v67
  %v330 = vmul.f32 %v317, %v68
  %v331 = vmul.f32 %v322, %v69
  %v332 = vadd.f32 %v268, %v324
  %v333 = vadd.f32 %v269, %v325
  %v334 = vadd.f32 %v270, %v326
  %v335 = vadd.f32 %v271, %v327
  %v336 = vadd.f32 %v272, %v328
  %v337 = vadd.f32 %v273, %v329
  %v338 = vadd.f32 %v274, %v330
  %v339 = vadd.f32 %v275, %v331
  %v340 = vmul.f32 %v46, %v332
  %v341 = vmul.f32 %v47, %v333
  %v342 = vmul.f32 %v48, %v334
  %v343 = vmul.f32 %v49, %v335
  %v344 = vmul.f32 %v50, %v336
  %v345 = vmul.f32 %v51, %v337
  %v346 = vmul.f32 %v52, %v338
  %v347 = vmul.f32 %v53, %v339
  %v349 = vperm.slane %v150, 0
  %351 = vmatpush.xpose.msra.mxu0 %v149
  %352 = vmatpush.xpose.msra.mxu0 %v148
  %353 = vmatpush.xpose.msra.mxu0 %v147
  %354 = vmatpush.xpose.msra.mxu0 %v146
  %355 = vmatpush.xpose.msra.mxu0 %v145
  %356 = vmatpush.xpose.msra.mxu0 %v144
  %357 = vmatpush.xpose.msra.mxu0 %v143
  %358 = vmatpush.xpose.msra.mxu0 %v142
  %359 = vmatpush.xpose.msra.mxu0 %v141
  %360 = vmatpush.xpose.msra.mxu0 %v140
  %361 = vmatpush.xpose.msra.mxu0 %v139
  %362 = vmatpush.xpose.msra.mxu0 %v138
  %363 = vmatpush.xpose.msra.mxu0 %v137
  %364 = vmatpush.xpose.msra.mxu0 %v136
  %365 = vmatpush.xpose.msra.mxu0 %v135
  %366 = vmatpush.xpose.msra.mxu0 %v134
  %367 = vmatmul.f32.gmra.mxu0 %v340
  %v368 = vpop.f32.mrf.mxu0
  %v369 = vadd.f32 %v349, %v368
  %370 = vmatmul.f32.gmra.mxu0 %v341
  %v371 = vpop.f32.mrf.mxu0
  %v372 = vadd.f32 %v349, %v371
  %373 = vmatmul.f32.gmra.mxu0 %v342
  %v374 = vpop.f32.mrf.mxu0
  %v375 = vadd.f32 %v349, %v374
  %376 = vmatmul.f32.gmra.mxu0 %v343
  %v377 = vpop.f32.mrf.mxu0
  %v378 = vadd.f32 %v349, %v377
  %379 = vmatmul.f32.gmra.mxu0 %v344
  %v380 = vpop.f32.mrf.mxu0
  %v381 = vadd.f32 %v349, %v380
  %382 = vmatmul.f32.gmra.mxu0 %v345
  %v383 = vpop.f32.mrf.mxu0
  %v384 = vadd.f32 %v349, %v383
  %385 = vmatmul.f32.gmra.mxu0 %v346
  %v386 = vpop.f32.mrf.mxu0
  %v387 = vadd.f32 %v349, %v386
  %388 = vmatmul.f32.gmra.mxu0 %v347
  %v389 = vpop.f32.mrf.mxu0
  %v390 = vadd.f32 %v349, %v389
  %391 = vdwg.mxu0
  %v392 = vmul.f32 %v369, 0.5
  %v393 = vmul.f32 %v372, 0.5
  %v394 = vmul.f32 %v375, 0.5
  %v395 = vmul.f32 %v378, 0.5
  %v396 = vmul.f32 %v381, 0.5
  %v397 = vmul.f32 %v384, 0.5
  %v398 = vmul.f32 %v387, 0.5
  %v399 = vmul.f32 %v390, 0.5
  %v400 = vtanh.pop %v392
  %v401 = vtanh.pop %v393
  %v402 = vtanh.pop %v394
  %v403 = vtanh.pop %v395
  %v404 = vtanh.pop %v396
  %v405 = vtanh.pop %v397
  %v406 = vtanh.pop %v398
  %v407 = vtanh.pop %v399
  %v408 = vadd.f32 %v400, 1.0
  %v409 = vadd.f32 %v401, 1.0
  %v410 = vadd.f32 %v402, 1.0
  %v411 = vadd.f32 %v403, 1.0
  %v412 = vadd.f32 %v404, 1.0
  %v413 = vadd.f32 %v405, 1.0
  %v414 = vadd.f32 %v406, 1.0
  %v415 = vadd.f32 %v407, 1.0
  %v416 = vmul.f32 %v408, 0.5
  %v417 = vmul.f32 %v409, 0.5
  %v418 = vmul.f32 %v410, 0.5
  %v419 = vmul.f32 %v411, 0.5
  %v420 = vmul.f32 %v412, 0.5
  %v421 = vmul.f32 %v413, 0.5
  %v422 = vmul.f32 %v414, 0.5
  %v423 = vmul.f32 %v415, 0.5
  %v424 = vlaneseq
  %v425 = vand.u32 %v424, 127
  %vm426 = vcmp.lt.s32.totalorder %v425, 100
  %v427 = vsel %vm426, 1, 0
  %v428 = vcvt.s32.f32 %v427
  %v429 = vmul.f32 %v416, %v428
  %v430 = vmul.f32 %v417, %v428
  %v431 = vmul.f32 %v418, %v428
  %v432 = vmul.f32 %v419, %v428
  %v433 = vmul.f32 %v420, %v428
  %v434 = vmul.f32 %v421, %v428
  %v435 = vmul.f32 %v422, %v428
  %v436 = vmul.f32 %v423, %v428
  %v437 = vadd.f32 %v429, %v110
  %v438 = vadd.f32 %v430, %v111
  %v439 = vadd.f32 %v431, %v112
  %v440 = vadd.f32 %v432, %v113
  %v441 = vadd.f32 %v433, %v114
  %v442 = vadd.f32 %v434, %v115
  %v443 = vadd.f32 %v435, %v116
  %v444 = vadd.f32 %v436, %v117
  %v445 = vmul.f32 %v94, %v437
  %v446 = vmul.f32 %v95, %v438
  %v447 = vmul.f32 %v96, %v439
  %v448 = vmul.f32 %v97, %v440
  %v449 = vmul.f32 %v98, %v441
  %v450 = vmul.f32 %v99, %v442
  %v451 = vmul.f32 %v100, %v443
  %v452 = vmul.f32 %v101, %v444
  %453 = vadd.xlane.f32.xlu0 %v445
  %v454 = vpop.xlane.xlu0 %453
  %455 = vadd.xlane.f32.xlu0 %v446
  %v456 = vpop.xlane.xlu0 %455
  %457 = vadd.xlane.f32.xlu0 %v447
  %v458 = vpop.xlane.xlu0 %457
  %459 = vadd.xlane.f32.xlu0 %v448
  %v460 = vpop.xlane.xlu0 %459
  %461 = vadd.xlane.f32.xlu0 %v449
  %v462 = vpop.xlane.xlu0 %461
  %463 = vadd.xlane.f32.xlu0 %v450
  %v464 = vpop.xlane.xlu0 %463
  %465 = vadd.xlane.f32.xlu0 %v451
  %v466 = vpop.xlane.xlu0 %465
  %467 = vadd.xlane.f32.xlu0 %v452
  %v468 = vpop.xlane.xlu0 %467
  %v469 = vadd.f32 %v454, %v168
  %v470 = vadd.f32 %v456, %v169
  %v471 = vadd.f32 %v458, %v170
  %v472 = vadd.f32 %v460, %v171
  %v473 = vadd.f32 %v462, %v172
  %v474 = vadd.f32 %v464, %v173
  %v475 = vadd.f32 %v466, %v174
  %v476 = vadd.f32 %v468, %v175
  %v477 = vsub.f32 0.0, %v469
  %v478 = vsub.f32 0.0, %v470
  %v479 = vsub.f32 0.0, %v471
  %v480 = vsub.f32 0.0, %v472
  %v481 = vsub.f32 0.0, %v473
  %v482 = vsub.f32 0.0, %v474
  %v483 = vsub.f32 0.0, %v475
  %v484 = vsub.f32 0.0, %v476
  %v485 = vmax.f32 %v477, 0.0
  %v486 = vmax.f32 %v478, 0.0
  %v487 = vmax.f32 %v479, 0.0
  %v488 = vmax.f32 %v480, 0.0
  %v489 = vmax.f32 %v481, 0.0
  %v490 = vmax.f32 %v482, 0.0
  %v491 = vmax.f32 %v483, 0.0
  %v492 = vmax.f32 %v484, 0.0
  %v493 = vand.u32 2147483647, %v477
  %v494 = vand.u32 2147483647, %v478
  %v495 = vand.u32 2147483647, %v479
  %v496 = vand.u32 2147483647, %v480
  %v497 = vand.u32 2147483647, %v481
  %v498 = vand.u32 2147483647, %v482
  %v499 = vand.u32 2147483647, %v483
  %v500 = vand.u32 2147483647, %v484
  %v501 = vsub.f32 0.0, %v493
  %v502 = vsub.f32 0.0, %v494
  %v503 = vsub.f32 0.0, %v495
  %v504 = vsub.f32 0.0, %v496
  %v505 = vsub.f32 0.0, %v497
  %v506 = vsub.f32 0.0, %v498
  %v507 = vsub.f32 0.0, %v499
  %v508 = vsub.f32 0.0, %v500
  %v509 = vmul.f32 %v501, 1.442695
  %v510 = vpow.pop %v509
  %v511 = vmul.f32 %v502, 1.442695
  %v512 = vpow.pop %v511
  %v513 = vmul.f32 %v503, 1.442695
  %v514 = vpow.pop %v513
  %v515 = vmul.f32 %v504, 1.442695
  %v516 = vpow.pop %v515
  %v517 = vmul.f32 %v505, 1.442695
  %v518 = vpow.pop %v517
  %v519 = vmul.f32 %v506, 1.442695
  %v520 = vpow.pop %v519
  %v521 = vmul.f32 %v507, 1.442695
  %v522 = vpow.pop %v521
  %v523 = vmul.f32 %v508, 1.442695
  %v524 = vpow.pop %v523
  %v525 = vadd.f32 %v510, 1.0
  %v526 = vadd.f32 %v512, 1.0
  %v527 = vadd.f32 %v514, 1.0
  %v528 = vadd.f32 %v516, 1.0
  %v529 = vadd.f32 %v518, 1.0
  %v530 = vadd.f32 %v520, 1.0
  %v531 = vadd.f32 %v522, 1.0
  %v532 = vadd.f32 %v524, 1.0
  %v533 = vlog2.pop %v525
  %v534 = vmul.f32 %v533, 0.6931472
  %v535 = vlog2.pop %v526
  %v536 = vmul.f32 %v535, 0.6931472
  %v537 = vlog2.pop %v527
  %v538 = vmul.f32 %v537, 0.6931472
  %v539 = vlog2.pop %v528
  %v540 = vmul.f32 %v539, 0.6931472
  %v541 = vlog2.pop %v529
  %v542 = vmul.f32 %v541, 0.6931472
  %v543 = vlog2.pop %v530
  %v544 = vmul.f32 %v543, 0.6931472
  %v545 = vlog2.pop %v531
  %v546 = vmul.f32 %v545, 0.6931472
  %v547 = vlog2.pop %v532
  %v548 = vmul.f32 %v547, 0.6931472
  %v549 = vadd.f32 %v485, %v534
  %v550 = vadd.f32 %v486, %v536
  %v551 = vadd.f32 %v487, %v538
  %v552 = vadd.f32 %v488, %v540
  %v553 = vadd.f32 %v489, %v542
  %v554 = vadd.f32 %v490, %v544
  %v555 = vadd.f32 %v491, %v546
  %v556 = vadd.f32 %v492, %v548
  %557 = vset.pattern.permute.xlu0 0
  %558 = vperm.xlu0 %557, %v168
  %v559 = vpop.permute.xlu0 %558
  %561 = vset.pattern.permute.xlu0 0
  %562 = vperm.xlu0 %561, %v169
  %v563 = vpop.permute.xlu0 %562
  %565 = vset.pattern.permute.xlu0 0
  %566 = vperm.xlu0 %565, %v170
  %v567 = vpop.permute.xlu0 %566
  %569 = vset.pattern.permute.xlu0 0
  %570 = vperm.xlu0 %569, %v171
  %v571 = vpop.permute.xlu0 %570
  %573 = vset.pattern.permute.xlu0 0
  %574 = vperm.xlu0 %573, %v172
  %v575 = vpop.permute.xlu0 %574
  %577 = vset.pattern.permute.xlu0 0
  %578 = vperm.xlu0 %577, %v173
  %v579 = vpop.permute.xlu0 %578
  %581 = vset.pattern.permute.xlu0 0
  %582 = vperm.xlu0 %581, %v174
  %v583 = vpop.permute.xlu0 %582
  %585 = vset.pattern.permute.xlu0 0
  %586 = vperm.xlu0 %585, %v175
  %v587 = vpop.permute.xlu0 %586
  %589 = vmatpush.xpose.msra.mxu0 0.0
  %590 = vmatpush.xpose.msra.mxu0 0.0
  %591 = vmatpush.xpose.msra.mxu0 0.0
  %592 = vmatpush.xpose.msra.mxu0 0.0
  %593 = vmatpush.xpose.msra.mxu0 0.0
  %594 = vmatpush.xpose.msra.mxu0 0.0
  %595 = vmatpush.xpose.msra.mxu0 0.0
  %596 = vmatpush.xpose.msra.mxu0 0.0
  %597 = vmatpush.xpose.msra.mxu0 %v133
  %598 = vmatpush.xpose.msra.mxu0 %v132
  %599 = vmatpush.xpose.msra.mxu0 %v131
  %600 = vmatpush.xpose.msra.mxu0 %v130
  %601 = vmatpush.xpose.msra.mxu0 %v129
  %602 = vmatpush.xpose.msra.mxu0 %v128
  %603 = vmatpush.xpose.msra.mxu0 %v127
  %604 = vmatpush.xpose.msra.mxu0 %v126
  %605 = vmatmul.f32.gmra.mxu0 %v437
  %v606 = vpop.f32.mrf.mxu0
  %v607 = vadd.f32 %v559, %v606
  %608 = vmatmul.f32.gmra.mxu0 %v438
  %v609 = vpop.f32.mrf.mxu0
  %v610 = vadd.f32 %v563, %v609
  %611 = vmatmul.f32.gmra.mxu0 %v439
  %v612 = vpop.f32.mrf.mxu0
  %v613 = vadd.f32 %v567, %v612
  %614 = vmatmul.f32.gmra.mxu0 %v440
  %v615 = vpop.f32.mrf.mxu0
  %v616 = vadd.f32 %v571, %v615
  %617 = vmatmul.f32.gmra.mxu0 %v441
  %v618 = vpop.f32.mrf.mxu0
  %v619 = vadd.f32 %v575, %v618
  %620 = vmatmul.f32.gmra.mxu0 %v442
  %v621 = vpop.f32.mrf.mxu0
  %v622 = vadd.f32 %v579, %v621
  %623 = vmatmul.f32.gmra.mxu0 %v443
  %v624 = vpop.f32.mrf.mxu0
  %v625 = vadd.f32 %v583, %v624
  %626 = vmatmul.f32.gmra.mxu0 %v444
  %v627 = vpop.f32.mrf.mxu0
  %v628 = vadd.f32 %v587, %v627
  %629 = vdwg.mxu0
  %v630 = vcvt.s32.f32 %v425
  %v631 = vmul.f32 %v168, 8.0
  %v632 = vmul.f32 %v169, 8.0
  %v633 = vmul.f32 %v170, 8.0
  %v634 = vmul.f32 %v171, 8.0
  %v635 = vmul.f32 %v172, 8.0
  %v636 = vmul.f32 %v173, 8.0
  %v637 = vmul.f32 %v174, 8.0
  %v638 = vmul.f32 %v175, 8.0
  %640 = vset.pattern.permute.xlu0 3
  %641 = vperm.xlu0 %640, %v631
  %v642 = vpop.permute.xlu0 %641
  %645 = vset.pattern.permute.xlu0 3
  %646 = vperm.xlu0 %645, %v632
  %v647 = vpop.permute.xlu0 %646
  %650 = vset.pattern.permute.xlu0 3
  %651 = vperm.xlu0 %650, %v633
  %v652 = vpop.permute.xlu0 %651
  %655 = vset.pattern.permute.xlu0 3
  %656 = vperm.xlu0 %655, %v634
  %v657 = vpop.permute.xlu0 %656
  %660 = vset.pattern.permute.xlu0 3
  %661 = vperm.xlu0 %660, %v635
  %v662 = vpop.permute.xlu0 %661
  %665 = vset.pattern.permute.xlu0 3
  %666 = vperm.xlu0 %665, %v636
  %v667 = vpop.permute.xlu0 %666
  %670 = vset.pattern.permute.xlu0 3
  %671 = vperm.xlu0 %670, %v637
  %v672 = vpop.permute.xlu0 %671
  %675 = vset.pattern.permute.xlu0 3
  %676 = vperm.xlu0 %675, %v638
  %v677 = vpop.permute.xlu0 %676
  %vm679 = vcmp.ge.f32.partialorder %v630, %v642
  %vm680 = vcmp.ge.f32.partialorder %v630, %v647
  %vm681 = vcmp.ge.f32.partialorder %v630, %v652
  %vm682 = vcmp.ge.f32.partialorder %v630, %v657
  %vm683 = vcmp.ge.f32.partialorder %v630, %v662
  %vm684 = vcmp.ge.f32.partialorder %v630, %v667
  %vm685 = vcmp.ge.f32.partialorder %v630, %v672
  %vm686 = vcmp.ge.f32.partialorder %v630, %v677
  %v687 = vadd.f32 %v631, 8.0
  %v688 = vadd.f32 %v632, 8.0
  %v689 = vadd.f32 %v633, 8.0
  %v690 = vadd.f32 %v634, 8.0
  %v691 = vadd.f32 %v635, 8.0
  %v692 = vadd.f32 %v636, 8.0
  %v693 = vadd.f32 %v637, 8.0
  %v694 = vadd.f32 %v638, 8.0
  %696 = vset.pattern.permute.xlu0 3
  %697 = vperm.xlu0 %696, %v687
  %v698 = vpop.permute.xlu0 %697
  %701 = vset.pattern.permute.xlu0 3
  %702 = vperm.xlu0 %701, %v688
  %v703 = vpop.permute.xlu0 %702
  %706 = vset.pattern.permute.xlu0 3
  %707 = vperm.xlu0 %706, %v689
  %v708 = vpop.permute.xlu0 %707
  %711 = vset.pattern.permute.xlu0 3
  %712 = vperm.xlu0 %711, %v690
  %v713 = vpop.permute.xlu0 %712
  %716 = vset.pattern.permute.xlu0 3
  %717 = vperm.xlu0 %716, %v691
  %v718 = vpop.permute.xlu0 %717
  %721 = vset.pattern.permute.xlu0 3
  %722 = vperm.xlu0 %721, %v692
  %v723 = vpop.permute.xlu0 %722
  %726 = vset.pattern.permute.xlu0 3
  %727 = vperm.xlu0 %726, %v693
  %v728 = vpop.permute.xlu0 %727
  %731 = vset.pattern.permute.xlu0 3
  %732 = vperm.xlu0 %731, %v694
  %v733 = vpop.permute.xlu0 %732
  %vm735 = vcmp.lt.f32.partialorder %v630, %v698
  %vm736 = vcmp.lt.f32.partialorder %v630, %v703
  %vm737 = vcmp.lt.f32.partialorder %v630, %v708
  %vm738 = vcmp.lt.f32.partialorder %v630, %v713
  %vm739 = vcmp.lt.f32.partialorder %v630, %v718
  %vm740 = vcmp.lt.f32.partialorder %v630, %v723
  %vm741 = vcmp.lt.f32.partialorder %v630, %v728
  %vm742 = vcmp.lt.f32.partialorder %v630, %v733
  %vm743 = vmand %vm679, %vm735
  %vm744 = vmand %vm680, %vm736
  %vm745 = vmand %vm681, %vm737
  %vm746 = vmand %vm682, %vm738
  %vm747 = vmand %vm683, %vm739
  %vm748 = vmand %vm684, %vm740
  %vm749 = vmand %vm685, %vm741
  %vm750 = vmand %vm686, %vm742
  %v751 = vsel %vm743, 1, 0
  %v752 = vsel %vm744, 1, 0
  %v753 = vsel %vm745, 1, 0
  %v754 = vsel %vm746, 1, 0
  %v755 = vsel %vm747, 1, 0
  %v756 = vsel %vm748, 1, 0
  %v757 = vsel %vm749, 1, 0
  %v758 = vsel %vm750, 1, 0
  %v759 = vcvt.s32.f32 %v751
  %v760 = vcvt.s32.f32 %v752
  %v761 = vcvt.s32.f32 %v753
  %v762 = vcvt.s32.f32 %v754
  %v763 = vcvt.s32.f32 %v755
  %v764 = vcvt.s32.f32 %v756
  %v765 = vcvt.s32.f32 %v757
  %v766 = vcvt.s32.f32 %v758
  %v767 = vmax.f32 %v607, 0.0
  %v768 = vmax.f32 %v610, 0.0
  %v769 = vmax.f32 %v613, 0.0
  %v770 = vmax.f32 %v616, 0.0
  %v771 = vmax.f32 %v619, 0.0
  %v772 = vmax.f32 %v622, 0.0
  %v773 = vmax.f32 %v625, 0.0
  %v774 = vmax.f32 %v628, 0.0
  %v775 = vand.u32 2147483647, %v607
  %v776 = vand.u32 2147483647, %v610
  %v777 = vand.u32 2147483647, %v613
  %v778 = vand.u32 2147483647, %v616
  %v779 = vand.u32 2147483647, %v619
  %v780 = vand.u32 2147483647, %v622
  %v781 = vand.u32 2147483647, %v625
  %v782 = vand.u32 2147483647, %v628
  %v783 = vsub.f32 0.0, %v775
  %v784 = vsub.f32 0.0, %v776
  %v785 = vsub.f32 0.0, %v777
  %v786 = vsub.f32 0.0, %v778
  %v787 = vsub.f32 0.0, %v779
  %v788 = vsub.f32 0.0, %v780
  %v789 = vsub.f32 0.0, %v781
  %v790 = vsub.f32 0.0, %v782
  %v791 = vmul.f32 %v783, 1.442695
  %v792 = vpow.pop %v791
  %v793 = vmul.f32 %v784, 1.442695
  %v794 = vpow.pop %v793
  %v795 = vmul.f32 %v785, 1.442695
  %v796 = vpow.pop %v795
  %v797 = vmul.f32 %v786, 1.442695
  %v798 = vpow.pop %v797
  %v799 = vmul.f32 %v787, 1.442695
  %v800 = vpow.pop %v799
  %v801 = vmul.f32 %v788, 1.442695
  %v802 = vpow.pop %v801
  %v803 = vmul.f32 %v789, 1.442695
  %v804 = vpow.pop %v803
  %v805 = vmul.f32 %v790, 1.442695
  %v806 = vpow.pop %v805
  %v807 = vadd.f32 %v792, 1.0
  %v808 = vadd.f32 %v794, 1.0
  %v809 = vadd.f32 %v796, 1.0
  %v810 = vadd.f32 %v798, 1.0
  %v811 = vadd.f32 %v800, 1.0
  %v812 = vadd.f32 %v802, 1.0
  %v813 = vadd.f32 %v804, 1.0
  %v814 = vadd.f32 %v806, 1.0
  %v815 = vlog2.pop %v807
  %v816 = vmul.f32 %v815, 0.6931472
  %v817 = vlog2.pop %v808
  %v818 = vmul.f32 %v817, 0.6931472
  %v819 = vlog2.pop %v809
  %v820 = vmul.f32 %v819, 0.6931472
  %v821 = vlog2.pop %v810
  %v822 = vmul.f32 %v821, 0.6931472
  %v823 = vlog2.pop %v811
  %v824 = vmul.f32 %v823, 0.6931472
  %v825 = vlog2.pop %v812
  %v826 = vmul.f32 %v825, 0.6931472
  %v827 = vlog2.pop %v813
  %v828 = vmul.f32 %v827, 0.6931472
  %v829 = vlog2.pop %v814
  %v830 = vmul.f32 %v829, 0.6931472
  %v831 = vadd.f32 %v767, %v816
  %v832 = vadd.f32 %v768, %v818
  %v833 = vadd.f32 %v769, %v820
  %v834 = vadd.f32 %v770, %v822
  %v835 = vadd.f32 %v771, %v824
  %v836 = vadd.f32 %v772, %v826
  %v837 = vadd.f32 %v773, %v828
  %v838 = vadd.f32 %v774, %v830
  %v839 = vmul.f32 %v831, %v759
  %v840 = vmul.f32 %v832, %v760
  %v841 = vmul.f32 %v833, %v761
  %v842 = vmul.f32 %v834, %v762
  %v843 = vmul.f32 %v835, %v763
  %v844 = vmul.f32 %v836, %v764
  %v845 = vmul.f32 %v837, %v765
  %v846 = vmul.f32 %v838, %v766
  %vm847 = vcmask 523264
  %v848 = vsel %vm847, %v839, 0.0
  %849 = vadd.xlane.f32.xlu0 %v848
  %v850 = vpop.xlane.xlu0 %849
  %v851 = vsel %vm847, %v840, 0.0
  %852 = vadd.xlane.f32.xlu0 %v851
  %v853 = vpop.xlane.xlu0 %852
  %v854 = vsel %vm847, %v841, 0.0
  %855 = vadd.xlane.f32.xlu0 %v854
  %v856 = vpop.xlane.xlu0 %855
  %v857 = vsel %vm847, %v842, 0.0
  %858 = vadd.xlane.f32.xlu0 %v857
  %v859 = vpop.xlane.xlu0 %858
  %v860 = vsel %vm847, %v843, 0.0
  %861 = vadd.xlane.f32.xlu0 %v860
  %v862 = vpop.xlane.xlu0 %861
  %v863 = vsel %vm847, %v844, 0.0
  %864 = vadd.xlane.f32.xlu0 %v863
  %v865 = vpop.xlane.xlu0 %864
  %v866 = vsel %vm847, %v845, 0.0
  %867 = vadd.xlane.f32.xlu0 %v866
  %v868 = vpop.xlane.xlu0 %867
  %v869 = vsel %vm847, %v846, 0.0
  %870 = vadd.xlane.f32.xlu0 %v869
  %v871 = vpop.xlane.xlu0 %870
  %v872 = vadd.f32 %v549, %v850
  %v873 = vadd.f32 %v550, %v853
  %v874 = vadd.f32 %v551, %v856
  %v875 = vadd.f32 %v552, %v859
  %v876 = vadd.f32 %v553, %v862
  %v877 = vadd.f32 %v554, %v865
  %v878 = vadd.f32 %v555, %v868
  %v879 = vadd.f32 %v556, %v871
  %880 = vrot.lane.b32.xlu0 %v168, 127
  %v881 = vpop.permute.xlu0 %880
  %882 = vrot.lane.b32.xlu0 %v169, 127
  %v883 = vpop.permute.xlu0 %882
  %884 = vrot.lane.b32.xlu0 %v170, 127
  %v885 = vpop.permute.xlu0 %884
  %886 = vrot.lane.b32.xlu0 %v171, 127
  %v887 = vpop.permute.xlu0 %886
  %888 = vrot.lane.b32.xlu0 %v172, 127
  %v889 = vpop.permute.xlu0 %888
  %890 = vrot.lane.b32.xlu0 %v173, 127
  %v891 = vpop.permute.xlu0 %890
  %892 = vrot.lane.b32.xlu0 %v174, 127
  %v893 = vpop.permute.xlu0 %892
  %894 = vrot.lane.b32.xlu0 %v175, 127
  %v895 = vpop.permute.xlu0 %894
  %v904 = vmul.f32 %v872, %v881
  %v905 = vmul.f32 %v873, %v883
  %v906 = vmul.f32 %v874, %v885
  %v907 = vmul.f32 %v875, %v887
  %v908 = vmul.f32 %v876, %v889
  %v909 = vmul.f32 %v877, %v891
  %v910 = vmul.f32 %v878, %v893
  %v911 = vmul.f32 %v879, %v895
  %v912 = vmul.f32 %v46, %v46
  %v913 = vmul.f32 %v47, %v47
  %v914 = vmul.f32 %v48, %v48
  %v915 = vmul.f32 %v49, %v49
  %v916 = vmul.f32 %v50, %v50
  %v917 = vmul.f32 %v51, %v51
  %v918 = vmul.f32 %v52, %v52
  %v919 = vmul.f32 %v53, %v53
  %920 = vadd.xlane.f32.xlu0 %v912
  %v921 = vpop.xlane.xlu0 %920
  %922 = vadd.xlane.f32.xlu0 %v913
  %v923 = vpop.xlane.xlu0 %922
  %924 = vadd.xlane.f32.xlu0 %v914
  %v925 = vpop.xlane.xlu0 %924
  %926 = vadd.xlane.f32.xlu0 %v915
  %v927 = vpop.xlane.xlu0 %926
  %928 = vadd.xlane.f32.xlu0 %v916
  %v929 = vpop.xlane.xlu0 %928
  %930 = vadd.xlane.f32.xlu0 %v917
  %v931 = vpop.xlane.xlu0 %930
  %932 = vadd.xlane.f32.xlu0 %v918
  %v933 = vpop.xlane.xlu0 %932
  %934 = vadd.xlane.f32.xlu0 %v919
  %v935 = vpop.xlane.xlu0 %934
  %v936 = vmul.f32 %v921, %v168
  %v937 = vmul.f32 %v923, %v169
  %v938 = vmul.f32 %v925, %v170
  %v939 = vmul.f32 %v927, %v171
  %v940 = vmul.f32 %v929, %v172
  %v941 = vmul.f32 %v931, %v173
  %v942 = vmul.f32 %v933, %v174
  %v943 = vmul.f32 %v935, %v175
  %v944 = vmul.f32 %v94, %v94
  %v945 = vmul.f32 %v95, %v95
  %v946 = vmul.f32 %v96, %v96
  %v947 = vmul.f32 %v97, %v97
  %v948 = vmul.f32 %v98, %v98
  %v949 = vmul.f32 %v99, %v99
  %v950 = vmul.f32 %v100, %v100
  %v951 = vmul.f32 %v101, %v101
  %952 = vadd.xlane.f32.xlu0 %v944
  %v953 = vpop.xlane.xlu0 %952
  %954 = vadd.xlane.f32.xlu0 %v945
  %v955 = vpop.xlane.xlu0 %954
  %956 = vadd.xlane.f32.xlu0 %v946
  %v957 = vpop.xlane.xlu0 %956
  %958 = vadd.xlane.f32.xlu0 %v947
  %v959 = vpop.xlane.xlu0 %958
  %960 = vadd.xlane.f32.xlu0 %v948
  %v961 = vpop.xlane.xlu0 %960
  %962 = vadd.xlane.f32.xlu0 %v949
  %v963 = vpop.xlane.xlu0 %962
  %964 = vadd.xlane.f32.xlu0 %v950
  %v965 = vpop.xlane.xlu0 %964
  %966 = vadd.xlane.f32.xlu0 %v951
  %v967 = vpop.xlane.xlu0 %966
  %v968 = vmul.f32 %v953, %v168
  %v969 = vmul.f32 %v955, %v169
  %v970 = vmul.f32 %v957, %v170
  %v971 = vmul.f32 %v959, %v171
  %v972 = vmul.f32 %v961, %v172
  %v973 = vmul.f32 %v963, %v173
  %v974 = vmul.f32 %v965, %v174
  %v975 = vmul.f32 %v967, %v175
  %v976 = vmul.f32 %v126, %v126
  %v977 = vmul.f32 %v127, %v127
  %v978 = vmul.f32 %v128, %v128
  %v979 = vmul.f32 %v129, %v129
  %v980 = vmul.f32 %v130, %v130
  %v981 = vmul.f32 %v131, %v131
  %v982 = vmul.f32 %v132, %v132
  %v983 = vmul.f32 %v133, %v133
  %984 = vadd.xlane.f32.xlu0 %v976
  %v985 = vpop.xlane.xlu0 %984
  %986 = vadd.xlane.f32.xlu0 %v977
  %v987 = vpop.xlane.xlu0 %986
  %988 = vadd.xlane.f32.xlu0 %v978
  %v989 = vpop.xlane.xlu0 %988
  %990 = vadd.xlane.f32.xlu0 %v979
  %v991 = vpop.xlane.xlu0 %990
  %992 = vadd.xlane.f32.xlu0 %v980
  %v993 = vpop.xlane.xlu0 %992
  %994 = vadd.xlane.f32.xlu0 %v981
  %v995 = vpop.xlane.xlu0 %994
  %996 = vadd.xlane.f32.xlu0 %v982
  %v997 = vpop.xlane.xlu0 %996
  %998 = vadd.xlane.f32.xlu0 %v983
  %v999 = vpop.xlane.xlu0 %998
  %v1000 = vlaneseq
  %v1001 = vshrl.u32 %v1000, 7
  %v1002 = vadd.s32 %v1001, 8
  %v1003 = vadd.s32 %v1001, 16
  %v1004 = vadd.s32 %v1001, 24
  %v1005 = vadd.s32 %v1001, 32
  %v1006 = vadd.s32 %v1001, 40
  %v1007 = vadd.s32 %v1001, 48
  %v1008 = vadd.s32 %v1001, 56
  %v1009 = vcvt.s32.f32 %v1001
  %v1010 = vcvt.s32.f32 %v1002
  %v1011 = vcvt.s32.f32 %v1003
  %v1012 = vcvt.s32.f32 %v1004
  %v1013 = vcvt.s32.f32 %v1005
  %v1014 = vcvt.s32.f32 %v1006
  %v1015 = vcvt.s32.f32 %v1007
  %v1016 = vcvt.s32.f32 %v1008
  %vm1017 = vcmp.eq.f32.partialorder %v168, 0.0
  %vm1018 = vcmp.eq.f32.partialorder %v169, 0.0
  %vm1019 = vcmp.eq.f32.partialorder %v170, 0.0
  %vm1020 = vcmp.eq.f32.partialorder %v171, 0.0
  %vm1021 = vcmp.eq.f32.partialorder %v172, 0.0
  %vm1022 = vcmp.eq.f32.partialorder %v173, 0.0
  %vm1023 = vcmp.eq.f32.partialorder %v174, 0.0
  %vm1024 = vcmp.eq.f32.partialorder %v175, 0.0
  %v1025 = vsel %vm1017, 1, 0
  %v1026 = vsel %vm1018, 1, 0
  %v1027 = vsel %vm1019, 1, 0
  %v1028 = vsel %vm1020, 1, 0
  %v1029 = vsel %vm1021, 1, 0
  %v1030 = vsel %vm1022, 1, 0
  %v1031 = vsel %vm1023, 1, 0
  %v1032 = vsel %vm1024, 1, 0
  %v1033 = vcvt.s32.f32 %v1025
  %v1034 = vcvt.s32.f32 %v1026
  %v1035 = vcvt.s32.f32 %v1027
  %v1036 = vcvt.s32.f32 %v1028
  %v1037 = vcvt.s32.f32 %v1029
  %v1038 = vcvt.s32.f32 %v1030
  %v1039 = vcvt.s32.f32 %v1031
  %v1040 = vcvt.s32.f32 %v1032
  %vm1041 = vcmp.ge.f32.partialorder %v1009, 0.0
  %vm1042 = vcmp.ge.f32.partialorder %v1010, 0.0
  %vm1043 = vcmp.ge.f32.partialorder %v1011, 0.0
  %vm1044 = vcmp.ge.f32.partialorder %v1012, 0.0
  %vm1045 = vcmp.ge.f32.partialorder %v1013, 0.0
  %vm1046 = vcmp.ge.f32.partialorder %v1014, 0.0
  %vm1047 = vcmp.ge.f32.partialorder %v1015, 0.0
  %vm1048 = vcmp.ge.f32.partialorder %v1016, 0.0
  %vm1049 = vcmp.lt.f32.partialorder %v1009, 8.0
  %vm1050 = vcmp.lt.f32.partialorder %v1010, 8.0
  %vm1051 = vcmp.lt.f32.partialorder %v1011, 8.0
  %vm1052 = vcmp.lt.f32.partialorder %v1012, 8.0
  %vm1053 = vcmp.lt.f32.partialorder %v1013, 8.0
  %vm1054 = vcmp.lt.f32.partialorder %v1014, 8.0
  %vm1055 = vcmp.lt.f32.partialorder %v1015, 8.0
  %vm1056 = vcmp.lt.f32.partialorder %v1016, 8.0
  %vm1057 = vmand %vm1041, %vm1049
  %vm1058 = vmand %vm1042, %vm1050
  %vm1059 = vmand %vm1043, %vm1051
  %vm1060 = vmand %vm1044, %vm1052
  %vm1061 = vmand %vm1045, %vm1053
  %vm1062 = vmand %vm1046, %vm1054
  %vm1063 = vmand %vm1047, %vm1055
  %vm1064 = vmand %vm1048, %vm1056
  %v1065 = vsel %vm1057, 1, 0
  %v1066 = vsel %vm1058, 1, 0
  %v1067 = vsel %vm1059, 1, 0
  %v1068 = vsel %vm1060, 1, 0
  %v1069 = vsel %vm1061, 1, 0
  %v1070 = vsel %vm1062, 1, 0
  %v1071 = vsel %vm1063, 1, 0
  %v1072 = vsel %vm1064, 1, 0
  %v1073 = vcvt.s32.f32 %v1065
  %v1074 = vcvt.s32.f32 %v1066
  %v1075 = vcvt.s32.f32 %v1067
  %v1076 = vcvt.s32.f32 %v1068
  %v1077 = vcvt.s32.f32 %v1069
  %v1078 = vcvt.s32.f32 %v1070
  %v1079 = vcvt.s32.f32 %v1071
  %v1080 = vcvt.s32.f32 %v1072
  %1089 = vrot.lane.b32.xlu0 %v1033, 126
  %v1090 = vpop.permute.xlu0 %1089
  %1091 = vrot.lane.b32.xlu0 %v1034, 126
  %v1092 = vpop.permute.xlu0 %1091
  %1093 = vrot.lane.b32.xlu0 %v1035, 126
  %v1094 = vpop.permute.xlu0 %1093
  %1095 = vrot.lane.b32.xlu0 %v1036, 126
  %v1096 = vpop.permute.xlu0 %1095
  %1097 = vrot.lane.b32.xlu0 %v1037, 126
  %v1098 = vpop.permute.xlu0 %1097
  %1099 = vrot.lane.b32.xlu0 %v1038, 126
  %v1100 = vpop.permute.xlu0 %1099
  %1101 = vrot.lane.b32.xlu0 %v1039, 126
  %v1102 = vpop.permute.xlu0 %1101
  %1103 = vrot.lane.b32.xlu0 %v1040, 126
  %v1104 = vpop.permute.xlu0 %1103
  %v1113 = vmul.f32 %v168, %v1090
  %v1114 = vmul.f32 %v169, %v1092
  %v1115 = vmul.f32 %v170, %v1094
  %v1116 = vmul.f32 %v171, %v1096
  %v1117 = vmul.f32 %v172, %v1098
  %v1118 = vmul.f32 %v173, %v1100
  %v1119 = vmul.f32 %v174, %v1102
  %v1120 = vmul.f32 %v175, %v1104
  %1129 = vrot.lane.b32.xlu0 %v1113, 127
  %v1130 = vpop.permute.xlu0 %1129
  %1131 = vrot.lane.b32.xlu0 %v1114, 127
  %v1132 = vpop.permute.xlu0 %1131
  %1133 = vrot.lane.b32.xlu0 %v1115, 127
  %v1134 = vpop.permute.xlu0 %1133
  %1135 = vrot.lane.b32.xlu0 %v1116, 127
  %v1136 = vpop.permute.xlu0 %1135
  %1137 = vrot.lane.b32.xlu0 %v1117, 127
  %v1138 = vpop.permute.xlu0 %1137
  %1139 = vrot.lane.b32.xlu0 %v1118, 127
  %v1140 = vpop.permute.xlu0 %1139
  %1141 = vrot.lane.b32.xlu0 %v1119, 127
  %v1142 = vpop.permute.xlu0 %1141
  %1143 = vrot.lane.b32.xlu0 %v1120, 127
  %v1144 = vpop.permute.xlu0 %1143
  %vm1153 = vcmask 7168
  %v1154 = vsel %vm1153, %v1130, 0.0
  %v1155 = vsel %vm1153, %v1132, 0.0
  %v1156 = vadd.f32 %v1154, %v1155
  %v1157 = vsel %vm1153, %v1134, 0.0
  %v1158 = vadd.f32 %v1156, %v1157
  %v1159 = vsel %vm1153, %v1136, 0.0
  %v1160 = vadd.f32 %v1158, %v1159
  %v1161 = vsel %vm1153, %v1138, 0.0
  %v1162 = vadd.f32 %v1160, %v1161
  %v1163 = vsel %vm1153, %v1140, 0.0
  %v1164 = vadd.f32 %v1162, %v1163
  %v1165 = vsel %vm1153, %v1142, 0.0
  %v1166 = vadd.f32 %v1164, %v1165
  %v1167 = vsel %vm1153, %v1144, 0.0
  %v1168 = vadd.f32 %v1166, %v1167
  %1169 = vadd.xlane.f32.xlu0 %v1168
  %v1170 = vpop.xlane.xlu0 %1169
  %v1171 = vrot.slane %v1170, 4
  %v1172 = vadd.f32 %v1170, %v1171
  %v1173 = vrot.slane %v1172, 2
  %v1174 = vadd.f32 %v1172, %v1173
  %v1175 = vrot.slane %v1174, 1
  %v1176 = vadd.f32 %v1174, %v1175
  %s1177 = vtos %v1176
  %p1178 = scmp.gt.f32.partialorder %s1177, 0.0
  %s1179 = scalar_select %p1178, 1, 0
  %s1180 = scvt.s32.f32 %s1179
  %1181 = vrot.lane.b32.xlu0 %v1033, 125
  %v1182 = vpop.permute.xlu0 %1181
  %1183 = vrot.lane.b32.xlu0 %v1034, 125
  %v1184 = vpop.permute.xlu0 %1183
  %1185 = vrot.lane.b32.xlu0 %v1035, 125
  %v1186 = vpop.permute.xlu0 %1185
  %1187 = vrot.lane.b32.xlu0 %v1036, 125
  %v1188 = vpop.permute.xlu0 %1187
  %1189 = vrot.lane.b32.xlu0 %v1037, 125
  %v1190 = vpop.permute.xlu0 %1189
  %1191 = vrot.lane.b32.xlu0 %v1038, 125
  %v1192 = vpop.permute.xlu0 %1191
  %1193 = vrot.lane.b32.xlu0 %v1039, 125
  %v1194 = vpop.permute.xlu0 %1193
  %1195 = vrot.lane.b32.xlu0 %v1040, 125
  %v1196 = vpop.permute.xlu0 %1195
  %v1205 = vmul.f32 %v904, %v1182
  %v1206 = vmul.f32 %v905, %v1184
  %v1207 = vmul.f32 %v906, %v1186
  %v1208 = vmul.f32 %v907, %v1188
  %v1209 = vmul.f32 %v908, %v1190
  %v1210 = vmul.f32 %v909, %v1192
  %v1211 = vmul.f32 %v910, %v1194
  %v1212 = vmul.f32 %v911, %v1196
  %v1213 = vsel %vm1153, %v1205, 0.0
  %v1214 = vsel %vm1153, %v1206, 0.0
  %v1215 = vadd.f32 %v1213, %v1214
  %v1216 = vsel %vm1153, %v1207, 0.0
  %v1217 = vadd.f32 %v1215, %v1216
  %v1218 = vsel %vm1153, %v1208, 0.0
  %v1219 = vadd.f32 %v1217, %v1218
  %v1220 = vsel %vm1153, %v1209, 0.0
  %v1221 = vadd.f32 %v1219, %v1220
  %v1222 = vsel %vm1153, %v1210, 0.0
  %v1223 = vadd.f32 %v1221, %v1222
  %v1224 = vsel %vm1153, %v1211, 0.0
  %v1225 = vadd.f32 %v1223, %v1224
  %v1226 = vsel %vm1153, %v1212, 0.0
  %v1227 = vadd.f32 %v1225, %v1226
  %1228 = vadd.xlane.f32.xlu0 %v1227
  %v1229 = vpop.xlane.xlu0 %1228
  %v1230 = vrot.slane %v1229, 4
  %v1231 = vadd.f32 %v1229, %v1230
  %v1232 = vrot.slane %v1231, 2
  %v1233 = vadd.f32 %v1231, %v1232
  %v1234 = vrot.slane %v1233, 1
  %v1235 = vadd.f32 %v1233, %v1234
  %s1236 = vtos %v1235
  %s1237 = smax.f32 %s1177, 1.0
  %v1238 = vstv %s1237
  %v1239 = vrcp.pop %v1238
  %v1240 = vmul.f32 %v1238, %v1239
  %v1241 = vsub.f32 1.0, %v1240
  %v1242 = vmul.f32 %v1239, %v1241
  %v1243 = vadd.f32 %v1239, %v1242
  %vm1244 = vweird.f32 %v1238
  %vm1245 = vweird.f32 %v1239
  %vm1246 = vmor %vm1244, %vm1245
  %v1247 = vsel %vm1246, %v1239, %v1243
  %v1248 = vand.u32 2147483647, %v1238
  %vm1249 = vcmp.eq.f32.partialorder %v1248, 8.507059e+37
  %v1250 = vand.u32 %v1238, 2147483648
  %v1251 = vor.u32 1.1754944e-38, %v1250
  %v1252 = vsel %vm1249, %v1251, %v1247
  %s1253 = vtos %v1252
  %s1254 = smul.f32 %s1236, %s1253
  %v1255 = vmul.f32 %v936, %v1090
  %v1256 = vmul.f32 %v937, %v1092
  %v1257 = vmul.f32 %v938, %v1094
  %v1258 = vmul.f32 %v939, %v1096
  %v1259 = vmul.f32 %v940, %v1098
  %v1260 = vmul.f32 %v941, %v1100
  %v1261 = vmul.f32 %v942, %v1102
  %v1262 = vmul.f32 %v943, %v1104
  %1271 = vrot.lane.b32.xlu0 %v1255, 127
  %v1272 = vpop.permute.xlu0 %1271
  %1273 = vrot.lane.b32.xlu0 %v1256, 127
  %v1274 = vpop.permute.xlu0 %1273
  %1275 = vrot.lane.b32.xlu0 %v1257, 127
  %v1276 = vpop.permute.xlu0 %1275
  %1277 = vrot.lane.b32.xlu0 %v1258, 127
  %v1278 = vpop.permute.xlu0 %1277
  %1279 = vrot.lane.b32.xlu0 %v1259, 127
  %v1280 = vpop.permute.xlu0 %1279
  %1281 = vrot.lane.b32.xlu0 %v1260, 127
  %v1282 = vpop.permute.xlu0 %1281
  %1283 = vrot.lane.b32.xlu0 %v1261, 127
  %v1284 = vpop.permute.xlu0 %1283
  %1285 = vrot.lane.b32.xlu0 %v1262, 127
  %v1286 = vpop.permute.xlu0 %1285
  %v1295 = vsel %vm1153, %v1272, 0.0
  %v1296 = vsel %vm1153, %v1274, 0.0
  %v1297 = vadd.f32 %v1295, %v1296
  %v1298 = vsel %vm1153, %v1276, 0.0
  %v1299 = vadd.f32 %v1297, %v1298
  %v1300 = vsel %vm1153, %v1278, 0.0
  %v1301 = vadd.f32 %v1299, %v1300
  %v1302 = vsel %vm1153, %v1280, 0.0
  %v1303 = vadd.f32 %v1301, %v1302
  %v1304 = vsel %vm1153, %v1282, 0.0
  %v1305 = vadd.f32 %v1303, %v1304
  %v1306 = vsel %vm1153, %v1284, 0.0
  %v1307 = vadd.f32 %v1305, %v1306
  %v1308 = vsel %vm1153, %v1286, 0.0
  %v1309 = vadd.f32 %v1307, %v1308
  %1310 = vadd.xlane.f32.xlu0 %v1309
  %v1311 = vpop.xlane.xlu0 %1310
  %v1312 = vrot.slane %v1311, 4
  %v1313 = vadd.f32 %v1311, %v1312
  %v1314 = vrot.slane %v1313, 2
  %v1315 = vadd.f32 %v1313, %v1314
  %v1316 = vrot.slane %v1315, 1
  %v1317 = vadd.f32 %v1315, %v1316
  %s1318 = vtos %v1317
  %v1319 = vstv %s1318
  %v1320 = vrsqrt.pop %v1319
  %v1321 = vmul.f32 %v1320, %v1319
  %v1322 = vmul.f32 %v1321, %v1320
  %v1323 = vmul.f32 0.5, %v1322
  %v1324 = vsub.f32 1.5, %v1323
  %v1325 = vmul.f32 %v1320, %v1324
  %v1326 = vmul.f32 %v1319, %v1325
  %vm1327 = vcmp.eq.f32.partialorder %v1319, inf
  %v1328 = vsel %vm1327, %v1319, %v1326
  %vm1329 = vcmp.eq.f32.partialorder %v1319, 0.0
  %v1330 = vand.u32 %v1319, 2147483648
  %v1331 = vsel %vm1329, %v1330, %v1328
  %s1332 = vtos %v1331
  %v1333 = vmul.f32 %v968, %v1090
  %v1334 = vmul.f32 %v969, %v1092
  %v1335 = vmul.f32 %v970, %v1094
  %v1336 = vmul.f32 %v971, %v1096
  %v1337 = vmul.f32 %v972, %v1098
  %v1338 = vmul.f32 %v973, %v1100
  %v1339 = vmul.f32 %v974, %v1102
  %v1340 = vmul.f32 %v975, %v1104
  %1349 = vrot.lane.b32.xlu0 %v1333, 127
  %v1350 = vpop.permute.xlu0 %1349
  %1351 = vrot.lane.b32.xlu0 %v1334, 127
  %v1352 = vpop.permute.xlu0 %1351
  %1353 = vrot.lane.b32.xlu0 %v1335, 127
  %v1354 = vpop.permute.xlu0 %1353
  %1355 = vrot.lane.b32.xlu0 %v1336, 127
  %v1356 = vpop.permute.xlu0 %1355
  %1357 = vrot.lane.b32.xlu0 %v1337, 127
  %v1358 = vpop.permute.xlu0 %1357
  %1359 = vrot.lane.b32.xlu0 %v1338, 127
  %v1360 = vpop.permute.xlu0 %1359
  %1361 = vrot.lane.b32.xlu0 %v1339, 127
  %v1362 = vpop.permute.xlu0 %1361
  %1363 = vrot.lane.b32.xlu0 %v1340, 127
  %v1364 = vpop.permute.xlu0 %1363
  %v1373 = vsel %vm1153, %v1350, 0.0
  %v1374 = vsel %vm1153, %v1352, 0.0
  %v1375 = vadd.f32 %v1373, %v1374
  %v1376 = vsel %vm1153, %v1354, 0.0
  %v1377 = vadd.f32 %v1375, %v1376
  %v1378 = vsel %vm1153, %v1356, 0.0
  %v1379 = vadd.f32 %v1377, %v1378
  %v1380 = vsel %vm1153, %v1358, 0.0
  %v1381 = vadd.f32 %v1379, %v1380
  %v1382 = vsel %vm1153, %v1360, 0.0
  %v1383 = vadd.f32 %v1381, %v1382
  %v1384 = vsel %vm1153, %v1362, 0.0
  %v1385 = vadd.f32 %v1383, %v1384
  %v1386 = vsel %vm1153, %v1364, 0.0
  %v1387 = vadd.f32 %v1385, %v1386
  %1388 = vadd.xlane.f32.xlu0 %v1387
  %v1389 = vpop.xlane.xlu0 %1388
  %v1390 = vrot.slane %v1389, 4
  %v1391 = vadd.f32 %v1389, %v1390
  %v1392 = vrot.slane %v1391, 2
  %v1393 = vadd.f32 %v1391, %v1392
  %v1394 = vrot.slane %v1393, 1
  %v1395 = vadd.f32 %v1393, %v1394
  %s1396 = vtos %v1395
  %v1397 = vstv %s1396
  %v1398 = vrsqrt.pop %v1397
  %v1399 = vmul.f32 %v1398, %v1397
  %v1400 = vmul.f32 %v1399, %v1398
  %v1401 = vmul.f32 0.5, %v1400
  %v1402 = vsub.f32 1.5, %v1401
  %v1403 = vmul.f32 %v1398, %v1402
  %v1404 = vmul.f32 %v1397, %v1403
  %vm1405 = vcmp.eq.f32.partialorder %v1397, inf
  %v1406 = vsel %vm1405, %v1397, %v1404
  %vm1407 = vcmp.eq.f32.partialorder %v1397, 0.0
  %v1408 = vand.u32 %v1397, 2147483648
  %v1409 = vsel %vm1407, %v1408, %v1406
  %s1410 = vtos %v1409
  %s1411 = sadd.f32 %s1332, %s1410
  %v1412 = vmul.f32 %v985, %v1073
  %v1413 = vmul.f32 %v987, %v1074
  %v1414 = vmul.f32 %v989, %v1075
  %v1415 = vmul.f32 %v991, %v1076
  %v1416 = vmul.f32 %v993, %v1077
  %v1417 = vmul.f32 %v995, %v1078
  %v1418 = vmul.f32 %v997, %v1079
  %v1419 = vmul.f32 %v999, %v1080
  %v1420 = vsel %vm1153, %v1412, 0.0
  %v1421 = vsel %vm1153, %v1413, 0.0
  %v1422 = vadd.f32 %v1420, %v1421
  %v1423 = vsel %vm1153, %v1414, 0.0
  %v1424 = vadd.f32 %v1422, %v1423
  %v1425 = vsel %vm1153, %v1415, 0.0
  %v1426 = vadd.f32 %v1424, %v1425
  %v1427 = vsel %vm1153, %v1416, 0.0
  %v1428 = vadd.f32 %v1426, %v1427
  %v1429 = vsel %vm1153, %v1417, 0.0
  %v1430 = vadd.f32 %v1428, %v1429
  %v1431 = vsel %vm1153, %v1418, 0.0
  %v1432 = vadd.f32 %v1430, %v1431
  %v1433 = vsel %vm1153, %v1419, 0.0
  %v1434 = vadd.f32 %v1432, %v1433
  %1435 = vadd.xlane.f32.xlu0 %v1434
  %v1436 = vpop.xlane.xlu0 %1435
  %v1437 = vrot.slane %v1436, 4
  %v1438 = vadd.f32 %v1436, %v1437
  %v1439 = vrot.slane %v1438, 2
  %v1440 = vadd.f32 %v1438, %v1439
  %v1441 = vrot.slane %v1440, 1
  %v1442 = vadd.f32 %v1440, %v1441
  %s1443 = vtos %v1442
  %v1444 = vstv %s1443
  %v1445 = vrsqrt.pop %v1444
  %v1446 = vmul.f32 %v1445, %v1444
  %v1447 = vmul.f32 %v1446, %v1445
  %v1448 = vmul.f32 0.5, %v1447
  %v1449 = vsub.f32 1.5, %v1448
  %v1450 = vmul.f32 %v1445, %v1449
  %v1451 = vmul.f32 %v1444, %v1450
  %vm1452 = vcmp.eq.f32.partialorder %v1444, inf
  %v1453 = vsel %vm1452, %v1444, %v1451
  %vm1454 = vcmp.eq.f32.partialorder %v1444, 0.0
  %v1455 = vand.u32 %v1444, 2147483648
  %v1456 = vsel %vm1454, %v1455, %v1453
  %s1457 = vtos %v1456
  %s1458 = sadd.f32 %s1411, %s1457
  %s1459 = smul.f32 %s1180, %s1254
  %s1460 = sadd.f32 %s1459, 0.0
  %s1461 = smul.f32 %s1180, %s1458
  %s1462 = sadd.f32 %s1461, 0.0
  %vm1463 = vcmp.eq.f32.partialorder %v168, 1.0
  %vm1464 = vcmp.eq.f32.partialorder %v169, 1.0
  %vm1465 = vcmp.eq.f32.partialorder %v170, 1.0
  %vm1466 = vcmp.eq.f32.partialorder %v171, 1.0
  %vm1467 = vcmp.eq.f32.partialorder %v172, 1.0
  %vm1468 = vcmp.eq.f32.partialorder %v173, 1.0
  %vm1469 = vcmp.eq.f32.partialorder %v174, 1.0
  %vm1470 = vcmp.eq.f32.partialorder %v175, 1.0
  %v1471 = vsel %vm1463, 1, 0
  %v1472 = vsel %vm1464, 1, 0
  %v1473 = vsel %vm1465, 1, 0
  %v1474 = vsel %vm1466, 1, 0
  %v1475 = vsel %vm1467, 1, 0
  %v1476 = vsel %vm1468, 1, 0
  %v1477 = vsel %vm1469, 1, 0
  %v1478 = vsel %vm1470, 1, 0
  %v1479 = vcvt.s32.f32 %v1471
  %v1480 = vcvt.s32.f32 %v1472
  %v1481 = vcvt.s32.f32 %v1473
  %v1482 = vcvt.s32.f32 %v1474
  %v1483 = vcvt.s32.f32 %v1475
  %v1484 = vcvt.s32.f32 %v1476
  %v1485 = vcvt.s32.f32 %v1477
  %v1486 = vcvt.s32.f32 %v1478
  %vm1487 = vcmp.ge.f32.partialorder %v1009, 8.0
  %vm1488 = vcmp.ge.f32.partialorder %v1010, 8.0
  %vm1489 = vcmp.ge.f32.partialorder %v1011, 8.0
  %vm1490 = vcmp.ge.f32.partialorder %v1012, 8.0
  %vm1491 = vcmp.ge.f32.partialorder %v1013, 8.0
  %vm1492 = vcmp.ge.f32.partialorder %v1014, 8.0
  %vm1493 = vcmp.ge.f32.partialorder %v1015, 8.0
  %vm1494 = vcmp.ge.f32.partialorder %v1016, 8.0
  %vm1495 = vcmp.lt.f32.partialorder %v1009, 16.0
  %vm1496 = vcmp.lt.f32.partialorder %v1010, 16.0
  %vm1497 = vcmp.lt.f32.partialorder %v1011, 16.0
  %vm1498 = vcmp.lt.f32.partialorder %v1012, 16.0
  %vm1499 = vcmp.lt.f32.partialorder %v1013, 16.0
  %vm1500 = vcmp.lt.f32.partialorder %v1014, 16.0
  %vm1501 = vcmp.lt.f32.partialorder %v1015, 16.0
  %vm1502 = vcmp.lt.f32.partialorder %v1016, 16.0
  %vm1503 = vmand %vm1487, %vm1495
  %vm1504 = vmand %vm1488, %vm1496
  %vm1505 = vmand %vm1489, %vm1497
  %vm1506 = vmand %vm1490, %vm1498
  %vm1507 = vmand %vm1491, %vm1499
  %vm1508 = vmand %vm1492, %vm1500
  %vm1509 = vmand %vm1493, %vm1501
  %vm1510 = vmand %vm1494, %vm1502
  %v1511 = vsel %vm1503, 1, 0
  %v1512 = vsel %vm1504, 1, 0
  %v1513 = vsel %vm1505, 1, 0
  %v1514 = vsel %vm1506, 1, 0
  %v1515 = vsel %vm1507, 1, 0
  %v1516 = vsel %vm1508, 1, 0
  %v1517 = vsel %vm1509, 1, 0
  %v1518 = vsel %vm1510, 1, 0
  %v1519 = vcvt.s32.f32 %v1511
  %v1520 = vcvt.s32.f32 %v1512
  %v1521 = vcvt.s32.f32 %v1513
  %v1522 = vcvt.s32.f32 %v1514
  %v1523 = vcvt.s32.f32 %v1515
  %v1524 = vcvt.s32.f32 %v1516
  %v1525 = vcvt.s32.f32 %v1517
  %v1526 = vcvt.s32.f32 %v1518
  %1535 = vrot.lane.b32.xlu0 %v1479, 126
  %v1536 = vpop.permute.xlu0 %1535
  %1537 = vrot.lane.b32.xlu0 %v1480, 126
  %v1538 = vpop.permute.xlu0 %1537
  %1539 = vrot.lane.b32.xlu0 %v1481, 126
  %v1540 = vpop.permute.xlu0 %1539
  %1541 = vrot.lane.b32.xlu0 %v1482, 126
  %v1542 = vpop.permute.xlu0 %1541
  %1543 = vrot.lane.b32.xlu0 %v1483, 126
  %v1544 = vpop.permute.xlu0 %1543
  %1545 = vrot.lane.b32.xlu0 %v1484, 126
  %v1546 = vpop.permute.xlu0 %1545
  %1547 = vrot.lane.b32.xlu0 %v1485, 126
  %v1548 = vpop.permute.xlu0 %1547
  %1549 = vrot.lane.b32.xlu0 %v1486, 126
  %v1550 = vpop.permute.xlu0 %1549
  %v1559 = vmul.f32 %v168, %v1536
  %v1560 = vmul.f32 %v169, %v1538
  %v1561 = vmul.f32 %v170, %v1540
  %v1562 = vmul.f32 %v171, %v1542
  %v1563 = vmul.f32 %v172, %v1544
  %v1564 = vmul.f32 %v173, %v1546
  %v1565 = vmul.f32 %v174, %v1548
  %v1566 = vmul.f32 %v175, %v1550
  %1575 = vrot.lane.b32.xlu0 %v1559, 127
  %v1576 = vpop.permute.xlu0 %1575
  %1577 = vrot.lane.b32.xlu0 %v1560, 127
  %v1578 = vpop.permute.xlu0 %1577
  %1579 = vrot.lane.b32.xlu0 %v1561, 127
  %v1580 = vpop.permute.xlu0 %1579
  %1581 = vrot.lane.b32.xlu0 %v1562, 127
  %v1582 = vpop.permute.xlu0 %1581
  %1583 = vrot.lane.b32.xlu0 %v1563, 127
  %v1584 = vpop.permute.xlu0 %1583
  %1585 = vrot.lane.b32.xlu0 %v1564, 127
  %v1586 = vpop.permute.xlu0 %1585
  %1587 = vrot.lane.b32.xlu0 %v1565, 127
  %v1588 = vpop.permute.xlu0 %1587
  %1589 = vrot.lane.b32.xlu0 %v1566, 127
  %v1590 = vpop.permute.xlu0 %1589
  %v1599 = vsel %vm1153, %v1576, 0.0
  %v1600 = vsel %vm1153, %v1578, 0.0
  %v1601 = vadd.f32 %v1599, %v1600
  %v1602 = vsel %vm1153, %v1580, 0.0
  %v1603 = vadd.f32 %v1601, %v1602
  %v1604 = vsel %vm1153, %v1582, 0.0
  %v1605 = vadd.f32 %v1603, %v1604
  %v1606 = vsel %vm1153, %v1584, 0.0
  %v1607 = vadd.f32 %v1605, %v1606
  %v1608 = vsel %vm1153, %v1586, 0.0
  %v1609 = vadd.f32 %v1607, %v1608
  %v1610 = vsel %vm1153, %v1588, 0.0
  %v1611 = vadd.f32 %v1609, %v1610
  %v1612 = vsel %vm1153, %v1590, 0.0
  %v1613 = vadd.f32 %v1611, %v1612
  %1614 = vadd.xlane.f32.xlu0 %v1613
  %v1615 = vpop.xlane.xlu0 %1614
  %v1616 = vrot.slane %v1615, 4
  %v1617 = vadd.f32 %v1615, %v1616
  %v1618 = vrot.slane %v1617, 2
  %v1619 = vadd.f32 %v1617, %v1618
  %v1620 = vrot.slane %v1619, 1
  %v1621 = vadd.f32 %v1619, %v1620
  %s1622 = vtos %v1621
  %p1623 = scmp.gt.f32.partialorder %s1622, 0.0
  %s1624 = scalar_select %p1623, 1, 0
  %s1625 = scvt.s32.f32 %s1624
  %1626 = vrot.lane.b32.xlu0 %v1479, 125
  %v1627 = vpop.permute.xlu0 %1626
  %1628 = vrot.lane.b32.xlu0 %v1480, 125
  %v1629 = vpop.permute.xlu0 %1628
  %1630 = vrot.lane.b32.xlu0 %v1481, 125
  %v1631 = vpop.permute.xlu0 %1630
  %1632 = vrot.lane.b32.xlu0 %v1482, 125
  %v1633 = vpop.permute.xlu0 %1632
  %1634 = vrot.lane.b32.xlu0 %v1483, 125
  %v1635 = vpop.permute.xlu0 %1634
  %1636 = vrot.lane.b32.xlu0 %v1484, 125
  %v1637 = vpop.permute.xlu0 %1636
  %1638 = vrot.lane.b32.xlu0 %v1485, 125
  %v1639 = vpop.permute.xlu0 %1638
  %1640 = vrot.lane.b32.xlu0 %v1486, 125
  %v1641 = vpop.permute.xlu0 %1640
  %v1650 = vmul.f32 %v904, %v1627
  %v1651 = vmul.f32 %v905, %v1629
  %v1652 = vmul.f32 %v906, %v1631
  %v1653 = vmul.f32 %v907, %v1633
  %v1654 = vmul.f32 %v908, %v1635
  %v1655 = vmul.f32 %v909, %v1637
  %v1656 = vmul.f32 %v910, %v1639
  %v1657 = vmul.f32 %v911, %v1641
  %v1658 = vsel %vm1153, %v1650, 0.0
  %v1659 = vsel %vm1153, %v1651, 0.0
  %v1660 = vadd.f32 %v1658, %v1659
  %v1661 = vsel %vm1153, %v1652, 0.0
  %v1662 = vadd.f32 %v1660, %v1661
  %v1663 = vsel %vm1153, %v1653, 0.0
  %v1664 = vadd.f32 %v1662, %v1663
  %v1665 = vsel %vm1153, %v1654, 0.0
  %v1666 = vadd.f32 %v1664, %v1665
  %v1667 = vsel %vm1153, %v1655, 0.0
  %v1668 = vadd.f32 %v1666, %v1667
  %v1669 = vsel %vm1153, %v1656, 0.0
  %v1670 = vadd.f32 %v1668, %v1669
  %v1671 = vsel %vm1153, %v1657, 0.0
  %v1672 = vadd.f32 %v1670, %v1671
  %1673 = vadd.xlane.f32.xlu0 %v1672
  %v1674 = vpop.xlane.xlu0 %1673
  %v1675 = vrot.slane %v1674, 4
  %v1676 = vadd.f32 %v1674, %v1675
  %v1677 = vrot.slane %v1676, 2
  %v1678 = vadd.f32 %v1676, %v1677
  %v1679 = vrot.slane %v1678, 1
  %v1680 = vadd.f32 %v1678, %v1679
  %s1681 = vtos %v1680
  %s1682 = smax.f32 %s1622, 1.0
  %v1683 = vstv %s1682
  %v1684 = vrcp.pop %v1683
  %v1685 = vmul.f32 %v1683, %v1684
  %v1686 = vsub.f32 1.0, %v1685
  %v1687 = vmul.f32 %v1684, %v1686
  %v1688 = vadd.f32 %v1684, %v1687
  %vm1689 = vweird.f32 %v1683
  %vm1690 = vweird.f32 %v1684
  %vm1691 = vmor %vm1689, %vm1690
  %v1692 = vsel %vm1691, %v1684, %v1688
  %v1693 = vand.u32 2147483647, %v1683
  %vm1694 = vcmp.eq.f32.partialorder %v1693, 8.507059e+37
  %v1695 = vand.u32 %v1683, 2147483648
  %v1696 = vor.u32 1.1754944e-38, %v1695
  %v1697 = vsel %vm1694, %v1696, %v1692
  %s1698 = vtos %v1697
  %s1699 = smul.f32 %s1681, %s1698
  %v1700 = vmul.f32 %v936, %v1536
  %v1701 = vmul.f32 %v937, %v1538
  %v1702 = vmul.f32 %v938, %v1540
  %v1703 = vmul.f32 %v939, %v1542
  %v1704 = vmul.f32 %v940, %v1544
  %v1705 = vmul.f32 %v941, %v1546
  %v1706 = vmul.f32 %v942, %v1548
  %v1707 = vmul.f32 %v943, %v1550
  %1716 = vrot.lane.b32.xlu0 %v1700, 127
  %v1717 = vpop.permute.xlu0 %1716
  %1718 = vrot.lane.b32.xlu0 %v1701, 127
  %v1719 = vpop.permute.xlu0 %1718
  %1720 = vrot.lane.b32.xlu0 %v1702, 127
  %v1721 = vpop.permute.xlu0 %1720
  %1722 = vrot.lane.b32.xlu0 %v1703, 127
  %v1723 = vpop.permute.xlu0 %1722
  %1724 = vrot.lane.b32.xlu0 %v1704, 127
  %v1725 = vpop.permute.xlu0 %1724
  %1726 = vrot.lane.b32.xlu0 %v1705, 127
  %v1727 = vpop.permute.xlu0 %1726
  %1728 = vrot.lane.b32.xlu0 %v1706, 127
  %v1729 = vpop.permute.xlu0 %1728
  %1730 = vrot.lane.b32.xlu0 %v1707, 127
  %v1731 = vpop.permute.xlu0 %1730
  %v1740 = vsel %vm1153, %v1717, 0.0
  %v1741 = vsel %vm1153, %v1719, 0.0
  %v1742 = vadd.f32 %v1740, %v1741
  %v1743 = vsel %vm1153, %v1721, 0.0
  %v1744 = vadd.f32 %v1742, %v1743
  %v1745 = vsel %vm1153, %v1723, 0.0
  %v1746 = vadd.f32 %v1744, %v1745
  %v1747 = vsel %vm1153, %v1725, 0.0
  %v1748 = vadd.f32 %v1746, %v1747
  %v1749 = vsel %vm1153, %v1727, 0.0
  %v1750 = vadd.f32 %v1748, %v1749
  %v1751 = vsel %vm1153, %v1729, 0.0
  %v1752 = vadd.f32 %v1750, %v1751
  %v1753 = vsel %vm1153, %v1731, 0.0
  %v1754 = vadd.f32 %v1752, %v1753
  %1755 = vadd.xlane.f32.xlu0 %v1754
  %v1756 = vpop.xlane.xlu0 %1755
  %v1757 = vrot.slane %v1756, 4
  %v1758 = vadd.f32 %v1756, %v1757
  %v1759 = vrot.slane %v1758, 2
  %v1760 = vadd.f32 %v1758, %v1759
  %v1761 = vrot.slane %v1760, 1
  %v1762 = vadd.f32 %v1760, %v1761
  %s1763 = vtos %v1762
  %v1764 = vstv %s1763
  %v1765 = vrsqrt.pop %v1764
  %v1766 = vmul.f32 %v1765, %v1764
  %v1767 = vmul.f32 %v1766, %v1765
  %v1768 = vmul.f32 0.5, %v1767
  %v1769 = vsub.f32 1.5, %v1768
  %v1770 = vmul.f32 %v1765, %v1769
  %v1771 = vmul.f32 %v1764, %v1770
  %vm1772 = vcmp.eq.f32.partialorder %v1764, inf
  %v1773 = vsel %vm1772, %v1764, %v1771
  %vm1774 = vcmp.eq.f32.partialorder %v1764, 0.0
  %v1775 = vand.u32 %v1764, 2147483648
  %v1776 = vsel %vm1774, %v1775, %v1773
  %s1777 = vtos %v1776
  %v1778 = vmul.f32 %v968, %v1536
  %v1779 = vmul.f32 %v969, %v1538
  %v1780 = vmul.f32 %v970, %v1540
  %v1781 = vmul.f32 %v971, %v1542
  %v1782 = vmul.f32 %v972, %v1544
  %v1783 = vmul.f32 %v973, %v1546
  %v1784 = vmul.f32 %v974, %v1548
  %v1785 = vmul.f32 %v975, %v1550
  %1794 = vrot.lane.b32.xlu0 %v1778, 127
  %v1795 = vpop.permute.xlu0 %1794
  %1796 = vrot.lane.b32.xlu0 %v1779, 127
  %v1797 = vpop.permute.xlu0 %1796
  %1798 = vrot.lane.b32.xlu0 %v1780, 127
  %v1799 = vpop.permute.xlu0 %1798
  %1800 = vrot.lane.b32.xlu0 %v1781, 127
  %v1801 = vpop.permute.xlu0 %1800
  %1802 = vrot.lane.b32.xlu0 %v1782, 127
  %v1803 = vpop.permute.xlu0 %1802
  %1804 = vrot.lane.b32.xlu0 %v1783, 127
  %v1805 = vpop.permute.xlu0 %1804
  %1806 = vrot.lane.b32.xlu0 %v1784, 127
  %v1807 = vpop.permute.xlu0 %1806
  %1808 = vrot.lane.b32.xlu0 %v1785, 127
  %v1809 = vpop.permute.xlu0 %1808
  %v1818 = vsel %vm1153, %v1795, 0.0
  %v1819 = vsel %vm1153, %v1797, 0.0
  %v1820 = vadd.f32 %v1818, %v1819
  %v1821 = vsel %vm1153, %v1799, 0.0
  %v1822 = vadd.f32 %v1820, %v1821
  %v1823 = vsel %vm1153, %v1801, 0.0
  %v1824 = vadd.f32 %v1822, %v1823
  %v1825 = vsel %vm1153, %v1803, 0.0
  %v1826 = vadd.f32 %v1824, %v1825
  %v1827 = vsel %vm1153, %v1805, 0.0
  %v1828 = vadd.f32 %v1826, %v1827
  %v1829 = vsel %vm1153, %v1807, 0.0
  %v1830 = vadd.f32 %v1828, %v1829
  %v1831 = vsel %vm1153, %v1809, 0.0
  %v1832 = vadd.f32 %v1830, %v1831
  %1833 = vadd.xlane.f32.xlu0 %v1832
  %v1834 = vpop.xlane.xlu0 %1833
  %v1835 = vrot.slane %v1834, 4
  %v1836 = vadd.f32 %v1834, %v1835
  %v1837 = vrot.slane %v1836, 2
  %v1838 = vadd.f32 %v1836, %v1837
  %v1839 = vrot.slane %v1838, 1
  %v1840 = vadd.f32 %v1838, %v1839
  %s1841 = vtos %v1840
  %v1842 = vstv %s1841
  %v1843 = vrsqrt.pop %v1842
  %v1844 = vmul.f32 %v1843, %v1842
  %v1845 = vmul.f32 %v1844, %v1843
  %v1846 = vmul.f32 0.5, %v1845
  %v1847 = vsub.f32 1.5, %v1846
  %v1848 = vmul.f32 %v1843, %v1847
  %v1849 = vmul.f32 %v1842, %v1848
  %vm1850 = vcmp.eq.f32.partialorder %v1842, inf
  %v1851 = vsel %vm1850, %v1842, %v1849
  %vm1852 = vcmp.eq.f32.partialorder %v1842, 0.0
  %v1853 = vand.u32 %v1842, 2147483648
  %v1854 = vsel %vm1852, %v1853, %v1851
  %s1855 = vtos %v1854
  %s1856 = sadd.f32 %s1777, %s1855
  %v1857 = vmul.f32 %v985, %v1519
  %v1858 = vmul.f32 %v987, %v1520
  %v1859 = vmul.f32 %v989, %v1521
  %v1860 = vmul.f32 %v991, %v1522
  %v1861 = vmul.f32 %v993, %v1523
  %v1862 = vmul.f32 %v995, %v1524
  %v1863 = vmul.f32 %v997, %v1525
  %v1864 = vmul.f32 %v999, %v1526
  %v1865 = vsel %vm1153, %v1857, 0.0
  %v1866 = vsel %vm1153, %v1858, 0.0
  %v1867 = vadd.f32 %v1865, %v1866
  %v1868 = vsel %vm1153, %v1859, 0.0
  %v1869 = vadd.f32 %v1867, %v1868
  %v1870 = vsel %vm1153, %v1860, 0.0
  %v1871 = vadd.f32 %v1869, %v1870
  %v1872 = vsel %vm1153, %v1861, 0.0
  %v1873 = vadd.f32 %v1871, %v1872
  %v1874 = vsel %vm1153, %v1862, 0.0
  %v1875 = vadd.f32 %v1873, %v1874
  %v1876 = vsel %vm1153, %v1863, 0.0
  %v1877 = vadd.f32 %v1875, %v1876
  %v1878 = vsel %vm1153, %v1864, 0.0
  %v1879 = vadd.f32 %v1877, %v1878
  %1880 = vadd.xlane.f32.xlu0 %v1879
  %v1881 = vpop.xlane.xlu0 %1880
  %v1882 = vrot.slane %v1881, 4
  %v1883 = vadd.f32 %v1881, %v1882
  %v1884 = vrot.slane %v1883, 2
  %v1885 = vadd.f32 %v1883, %v1884
  %v1886 = vrot.slane %v1885, 1
  %v1887 = vadd.f32 %v1885, %v1886
  %s1888 = vtos %v1887
  %v1889 = vstv %s1888
  %v1890 = vrsqrt.pop %v1889
  %v1891 = vmul.f32 %v1890, %v1889
  %v1892 = vmul.f32 %v1891, %v1890
  %v1893 = vmul.f32 0.5, %v1892
  %v1894 = vsub.f32 1.5, %v1893
  %v1895 = vmul.f32 %v1890, %v1894
  %v1896 = vmul.f32 %v1889, %v1895
  %vm1897 = vcmp.eq.f32.partialorder %v1889, inf
  %v1898 = vsel %vm1897, %v1889, %v1896
  %vm1899 = vcmp.eq.f32.partialorder %v1889, 0.0
  %v1900 = vand.u32 %v1889, 2147483648
  %v1901 = vsel %vm1899, %v1900, %v1898
  %s1902 = vtos %v1901
  %s1903 = sadd.f32 %s1856, %s1902
  %s1904 = smul.f32 %s1625, %s1699
  %s1905 = sadd.f32 %s1460, %s1904
  %s1906 = smul.f32 %s1625, %s1903
  %s1907 = sadd.f32 %s1462, %s1906
  %vm1908 = vcmp.eq.f32.partialorder %v168, 2.0
  %vm1909 = vcmp.eq.f32.partialorder %v169, 2.0
  %vm1910 = vcmp.eq.f32.partialorder %v170, 2.0
  %vm1911 = vcmp.eq.f32.partialorder %v171, 2.0
  %vm1912 = vcmp.eq.f32.partialorder %v172, 2.0
  %vm1913 = vcmp.eq.f32.partialorder %v173, 2.0
  %vm1914 = vcmp.eq.f32.partialorder %v174, 2.0
  %vm1915 = vcmp.eq.f32.partialorder %v175, 2.0
  %v1916 = vsel %vm1908, 1, 0
  %v1917 = vsel %vm1909, 1, 0
  %v1918 = vsel %vm1910, 1, 0
  %v1919 = vsel %vm1911, 1, 0
  %v1920 = vsel %vm1912, 1, 0
  %v1921 = vsel %vm1913, 1, 0
  %v1922 = vsel %vm1914, 1, 0
  %v1923 = vsel %vm1915, 1, 0
  %v1924 = vcvt.s32.f32 %v1916
  %v1925 = vcvt.s32.f32 %v1917
  %v1926 = vcvt.s32.f32 %v1918
  %v1927 = vcvt.s32.f32 %v1919
  %v1928 = vcvt.s32.f32 %v1920
  %v1929 = vcvt.s32.f32 %v1921
  %v1930 = vcvt.s32.f32 %v1922
  %v1931 = vcvt.s32.f32 %v1923
  %vm1932 = vcmp.ge.f32.partialorder %v1009, 16.0
  %vm1933 = vcmp.ge.f32.partialorder %v1010, 16.0
  %vm1934 = vcmp.ge.f32.partialorder %v1011, 16.0
  %vm1935 = vcmp.ge.f32.partialorder %v1012, 16.0
  %vm1936 = vcmp.ge.f32.partialorder %v1013, 16.0
  %vm1937 = vcmp.ge.f32.partialorder %v1014, 16.0
  %vm1938 = vcmp.ge.f32.partialorder %v1015, 16.0
  %vm1939 = vcmp.ge.f32.partialorder %v1016, 16.0
  %vm1940 = vcmp.lt.f32.partialorder %v1009, 24.0
  %vm1941 = vcmp.lt.f32.partialorder %v1010, 24.0
  %vm1942 = vcmp.lt.f32.partialorder %v1011, 24.0
  %vm1943 = vcmp.lt.f32.partialorder %v1012, 24.0
  %vm1944 = vcmp.lt.f32.partialorder %v1013, 24.0
  %vm1945 = vcmp.lt.f32.partialorder %v1014, 24.0
  %vm1946 = vcmp.lt.f32.partialorder %v1015, 24.0
  %vm1947 = vcmp.lt.f32.partialorder %v1016, 24.0
  %vm1948 = vmand %vm1932, %vm1940
  %vm1949 = vmand %vm1933, %vm1941
  %vm1950 = vmand %vm1934, %vm1942
  %vm1951 = vmand %vm1935, %vm1943
  %vm1952 = vmand %vm1936, %vm1944
  %vm1953 = vmand %vm1937, %vm1945
  %vm1954 = vmand %vm1938, %vm1946
  %vm1955 = vmand %vm1939, %vm1947
  %v1956 = vsel %vm1948, 1, 0
  %v1957 = vsel %vm1949, 1, 0
  %v1958 = vsel %vm1950, 1, 0
  %v1959 = vsel %vm1951, 1, 0
  %v1960 = vsel %vm1952, 1, 0
  %v1961 = vsel %vm1953, 1, 0
  %v1962 = vsel %vm1954, 1, 0
  %v1963 = vsel %vm1955, 1, 0
  %v1964 = vcvt.s32.f32 %v1956
  %v1965 = vcvt.s32.f32 %v1957
  %v1966 = vcvt.s32.f32 %v1958
  %v1967 = vcvt.s32.f32 %v1959
  %v1968 = vcvt.s32.f32 %v1960
  %v1969 = vcvt.s32.f32 %v1961
  %v1970 = vcvt.s32.f32 %v1962
  %v1971 = vcvt.s32.f32 %v1963
  %1980 = vrot.lane.b32.xlu0 %v1924, 126
  %v1981 = vpop.permute.xlu0 %1980
  %1982 = vrot.lane.b32.xlu0 %v1925, 126
  %v1983 = vpop.permute.xlu0 %1982
  %1984 = vrot.lane.b32.xlu0 %v1926, 126
  %v1985 = vpop.permute.xlu0 %1984
  %1986 = vrot.lane.b32.xlu0 %v1927, 126
  %v1987 = vpop.permute.xlu0 %1986
  %1988 = vrot.lane.b32.xlu0 %v1928, 126
  %v1989 = vpop.permute.xlu0 %1988
  %1990 = vrot.lane.b32.xlu0 %v1929, 126
  %v1991 = vpop.permute.xlu0 %1990
  %1992 = vrot.lane.b32.xlu0 %v1930, 126
  %v1993 = vpop.permute.xlu0 %1992
  %1994 = vrot.lane.b32.xlu0 %v1931, 126
  %v1995 = vpop.permute.xlu0 %1994
  %v2004 = vmul.f32 %v168, %v1981
  %v2005 = vmul.f32 %v169, %v1983
  %v2006 = vmul.f32 %v170, %v1985
  %v2007 = vmul.f32 %v171, %v1987
  %v2008 = vmul.f32 %v172, %v1989
  %v2009 = vmul.f32 %v173, %v1991
  %v2010 = vmul.f32 %v174, %v1993
  %v2011 = vmul.f32 %v175, %v1995
  %2020 = vrot.lane.b32.xlu0 %v2004, 127
  %v2021 = vpop.permute.xlu0 %2020
  %2022 = vrot.lane.b32.xlu0 %v2005, 127
  %v2023 = vpop.permute.xlu0 %2022
  %2024 = vrot.lane.b32.xlu0 %v2006, 127
  %v2025 = vpop.permute.xlu0 %2024
  %2026 = vrot.lane.b32.xlu0 %v2007, 127
  %v2027 = vpop.permute.xlu0 %2026
  %2028 = vrot.lane.b32.xlu0 %v2008, 127
  %v2029 = vpop.permute.xlu0 %2028
  %2030 = vrot.lane.b32.xlu0 %v2009, 127
  %v2031 = vpop.permute.xlu0 %2030
  %2032 = vrot.lane.b32.xlu0 %v2010, 127
  %v2033 = vpop.permute.xlu0 %2032
  %2034 = vrot.lane.b32.xlu0 %v2011, 127
  %v2035 = vpop.permute.xlu0 %2034
  %v2044 = vsel %vm1153, %v2021, 0.0
  %v2045 = vsel %vm1153, %v2023, 0.0
  %v2046 = vadd.f32 %v2044, %v2045
  %v2047 = vsel %vm1153, %v2025, 0.0
  %v2048 = vadd.f32 %v2046, %v2047
  %v2049 = vsel %vm1153, %v2027, 0.0
  %v2050 = vadd.f32 %v2048, %v2049
  %v2051 = vsel %vm1153, %v2029, 0.0
  %v2052 = vadd.f32 %v2050, %v2051
  %v2053 = vsel %vm1153, %v2031, 0.0
  %v2054 = vadd.f32 %v2052, %v2053
  %v2055 = vsel %vm1153, %v2033, 0.0
  %v2056 = vadd.f32 %v2054, %v2055
  %v2057 = vsel %vm1153, %v2035, 0.0
  %v2058 = vadd.f32 %v2056, %v2057
  %2059 = vadd.xlane.f32.xlu0 %v2058
  %v2060 = vpop.xlane.xlu0 %2059
  %v2061 = vrot.slane %v2060, 4
  %v2062 = vadd.f32 %v2060, %v2061
  %v2063 = vrot.slane %v2062, 2
  %v2064 = vadd.f32 %v2062, %v2063
  %v2065 = vrot.slane %v2064, 1
  %v2066 = vadd.f32 %v2064, %v2065
  %s2067 = vtos %v2066
  %p2068 = scmp.gt.f32.partialorder %s2067, 0.0
  %s2069 = scalar_select %p2068, 1, 0
  %s2070 = scvt.s32.f32 %s2069
  %2071 = vrot.lane.b32.xlu0 %v1924, 125
  %v2072 = vpop.permute.xlu0 %2071
  %2073 = vrot.lane.b32.xlu0 %v1925, 125
  %v2074 = vpop.permute.xlu0 %2073
  %2075 = vrot.lane.b32.xlu0 %v1926, 125
  %v2076 = vpop.permute.xlu0 %2075
  %2077 = vrot.lane.b32.xlu0 %v1927, 125
  %v2078 = vpop.permute.xlu0 %2077
  %2079 = vrot.lane.b32.xlu0 %v1928, 125
  %v2080 = vpop.permute.xlu0 %2079
  %2081 = vrot.lane.b32.xlu0 %v1929, 125
  %v2082 = vpop.permute.xlu0 %2081
  %2083 = vrot.lane.b32.xlu0 %v1930, 125
  %v2084 = vpop.permute.xlu0 %2083
  %2085 = vrot.lane.b32.xlu0 %v1931, 125
  %v2086 = vpop.permute.xlu0 %2085
  %v2095 = vmul.f32 %v904, %v2072
  %v2096 = vmul.f32 %v905, %v2074
  %v2097 = vmul.f32 %v906, %v2076
  %v2098 = vmul.f32 %v907, %v2078
  %v2099 = vmul.f32 %v908, %v2080
  %v2100 = vmul.f32 %v909, %v2082
  %v2101 = vmul.f32 %v910, %v2084
  %v2102 = vmul.f32 %v911, %v2086
  %v2103 = vsel %vm1153, %v2095, 0.0
  %v2104 = vsel %vm1153, %v2096, 0.0
  %v2105 = vadd.f32 %v2103, %v2104
  %v2106 = vsel %vm1153, %v2097, 0.0
  %v2107 = vadd.f32 %v2105, %v2106
  %v2108 = vsel %vm1153, %v2098, 0.0
  %v2109 = vadd.f32 %v2107, %v2108
  %v2110 = vsel %vm1153, %v2099, 0.0
  %v2111 = vadd.f32 %v2109, %v2110
  %v2112 = vsel %vm1153, %v2100, 0.0
  %v2113 = vadd.f32 %v2111, %v2112
  %v2114 = vsel %vm1153, %v2101, 0.0
  %v2115 = vadd.f32 %v2113, %v2114
  %v2116 = vsel %vm1153, %v2102, 0.0
  %v2117 = vadd.f32 %v2115, %v2116
  %2118 = vadd.xlane.f32.xlu0 %v2117
  %v2119 = vpop.xlane.xlu0 %2118
  %v2120 = vrot.slane %v2119, 4
  %v2121 = vadd.f32 %v2119, %v2120
  %v2122 = vrot.slane %v2121, 2
  %v2123 = vadd.f32 %v2121, %v2122
  %v2124 = vrot.slane %v2123, 1
  %v2125 = vadd.f32 %v2123, %v2124
  %s2126 = vtos %v2125
  %s2127 = smax.f32 %s2067, 1.0
  %v2128 = vstv %s2127
  %v2129 = vrcp.pop %v2128
  %v2130 = vmul.f32 %v2128, %v2129
  %v2131 = vsub.f32 1.0, %v2130
  %v2132 = vmul.f32 %v2129, %v2131
  %v2133 = vadd.f32 %v2129, %v2132
  %vm2134 = vweird.f32 %v2128
  %vm2135 = vweird.f32 %v2129
  %vm2136 = vmor %vm2134, %vm2135
  %v2137 = vsel %vm2136, %v2129, %v2133
  %v2138 = vand.u32 2147483647, %v2128
  %vm2139 = vcmp.eq.f32.partialorder %v2138, 8.507059e+37
  %v2140 = vand.u32 %v2128, 2147483648
  %v2141 = vor.u32 1.1754944e-38, %v2140
  %v2142 = vsel %vm2139, %v2141, %v2137
  %s2143 = vtos %v2142
  %s2144 = smul.f32 %s2126, %s2143
  %v2145 = vmul.f32 %v936, %v1981
  %v2146 = vmul.f32 %v937, %v1983
  %v2147 = vmul.f32 %v938, %v1985
  %v2148 = vmul.f32 %v939, %v1987
  %v2149 = vmul.f32 %v940, %v1989
  %v2150 = vmul.f32 %v941, %v1991
  %v2151 = vmul.f32 %v942, %v1993
  %v2152 = vmul.f32 %v943, %v1995
  %2161 = vrot.lane.b32.xlu0 %v2145, 127
  %v2162 = vpop.permute.xlu0 %2161
  %2163 = vrot.lane.b32.xlu0 %v2146, 127
  %v2164 = vpop.permute.xlu0 %2163
  %2165 = vrot.lane.b32.xlu0 %v2147, 127
  %v2166 = vpop.permute.xlu0 %2165
  %2167 = vrot.lane.b32.xlu0 %v2148, 127
  %v2168 = vpop.permute.xlu0 %2167
  %2169 = vrot.lane.b32.xlu0 %v2149, 127
  %v2170 = vpop.permute.xlu0 %2169
  %2171 = vrot.lane.b32.xlu0 %v2150, 127
  %v2172 = vpop.permute.xlu0 %2171
  %2173 = vrot.lane.b32.xlu0 %v2151, 127
  %v2174 = vpop.permute.xlu0 %2173
  %2175 = vrot.lane.b32.xlu0 %v2152, 127
  %v2176 = vpop.permute.xlu0 %2175
  %v2185 = vsel %vm1153, %v2162, 0.0
  %v2186 = vsel %vm1153, %v2164, 0.0
  %v2187 = vadd.f32 %v2185, %v2186
  %v2188 = vsel %vm1153, %v2166, 0.0
  %v2189 = vadd.f32 %v2187, %v2188
  %v2190 = vsel %vm1153, %v2168, 0.0
  %v2191 = vadd.f32 %v2189, %v2190
  %v2192 = vsel %vm1153, %v2170, 0.0
  %v2193 = vadd.f32 %v2191, %v2192
  %v2194 = vsel %vm1153, %v2172, 0.0
  %v2195 = vadd.f32 %v2193, %v2194
  %v2196 = vsel %vm1153, %v2174, 0.0
  %v2197 = vadd.f32 %v2195, %v2196
  %v2198 = vsel %vm1153, %v2176, 0.0
  %v2199 = vadd.f32 %v2197, %v2198
  %2200 = vadd.xlane.f32.xlu0 %v2199
  %v2201 = vpop.xlane.xlu0 %2200
  %v2202 = vrot.slane %v2201, 4
  %v2203 = vadd.f32 %v2201, %v2202
  %v2204 = vrot.slane %v2203, 2
  %v2205 = vadd.f32 %v2203, %v2204
  %v2206 = vrot.slane %v2205, 1
  %v2207 = vadd.f32 %v2205, %v2206
  %s2208 = vtos %v2207
  %v2209 = vstv %s2208
  %v2210 = vrsqrt.pop %v2209
  %v2211 = vmul.f32 %v2210, %v2209
  %v2212 = vmul.f32 %v2211, %v2210
  %v2213 = vmul.f32 0.5, %v2212
  %v2214 = vsub.f32 1.5, %v2213
  %v2215 = vmul.f32 %v2210, %v2214
  %v2216 = vmul.f32 %v2209, %v2215
  %vm2217 = vcmp.eq.f32.partialorder %v2209, inf
  %v2218 = vsel %vm2217, %v2209, %v2216
  %vm2219 = vcmp.eq.f32.partialorder %v2209, 0.0
  %v2220 = vand.u32 %v2209, 2147483648
  %v2221 = vsel %vm2219, %v2220, %v2218
  %s2222 = vtos %v2221
  %v2223 = vmul.f32 %v968, %v1981
  %v2224 = vmul.f32 %v969, %v1983
  %v2225 = vmul.f32 %v970, %v1985
  %v2226 = vmul.f32 %v971, %v1987
  %v2227 = vmul.f32 %v972, %v1989
  %v2228 = vmul.f32 %v973, %v1991
  %v2229 = vmul.f32 %v974, %v1993
  %v2230 = vmul.f32 %v975, %v1995
  %2239 = vrot.lane.b32.xlu0 %v2223, 127
  %v2240 = vpop.permute.xlu0 %2239
  %2241 = vrot.lane.b32.xlu0 %v2224, 127
  %v2242 = vpop.permute.xlu0 %2241
  %2243 = vrot.lane.b32.xlu0 %v2225, 127
  %v2244 = vpop.permute.xlu0 %2243
  %2245 = vrot.lane.b32.xlu0 %v2226, 127
  %v2246 = vpop.permute.xlu0 %2245
  %2247 = vrot.lane.b32.xlu0 %v2227, 127
  %v2248 = vpop.permute.xlu0 %2247
  %2249 = vrot.lane.b32.xlu0 %v2228, 127
  %v2250 = vpop.permute.xlu0 %2249
  %2251 = vrot.lane.b32.xlu0 %v2229, 127
  %v2252 = vpop.permute.xlu0 %2251
  %2253 = vrot.lane.b32.xlu0 %v2230, 127
  %v2254 = vpop.permute.xlu0 %2253
  %v2263 = vsel %vm1153, %v2240, 0.0
  %v2264 = vsel %vm1153, %v2242, 0.0
  %v2265 = vadd.f32 %v2263, %v2264
  %v2266 = vsel %vm1153, %v2244, 0.0
  %v2267 = vadd.f32 %v2265, %v2266
  %v2268 = vsel %vm1153, %v2246, 0.0
  %v2269 = vadd.f32 %v2267, %v2268
  %v2270 = vsel %vm1153, %v2248, 0.0
  %v2271 = vadd.f32 %v2269, %v2270
  %v2272 = vsel %vm1153, %v2250, 0.0
  %v2273 = vadd.f32 %v2271, %v2272
  %v2274 = vsel %vm1153, %v2252, 0.0
  %v2275 = vadd.f32 %v2273, %v2274
  %v2276 = vsel %vm1153, %v2254, 0.0
  %v2277 = vadd.f32 %v2275, %v2276
  %2278 = vadd.xlane.f32.xlu0 %v2277
  %v2279 = vpop.xlane.xlu0 %2278
  %v2280 = vrot.slane %v2279, 4
  %v2281 = vadd.f32 %v2279, %v2280
  %v2282 = vrot.slane %v2281, 2
  %v2283 = vadd.f32 %v2281, %v2282
  %v2284 = vrot.slane %v2283, 1
  %v2285 = vadd.f32 %v2283, %v2284
  %s2286 = vtos %v2285
  %v2287 = vstv %s2286
  %v2288 = vrsqrt.pop %v2287
  %v2289 = vmul.f32 %v2288, %v2287
  %v2290 = vmul.f32 %v2289, %v2288
  %v2291 = vmul.f32 0.5, %v2290
  %v2292 = vsub.f32 1.5, %v2291
  %v2293 = vmul.f32 %v2288, %v2292
  %v2294 = vmul.f32 %v2287, %v2293
  %vm2295 = vcmp.eq.f32.partialorder %v2287, inf
  %v2296 = vsel %vm2295, %v2287, %v2294
  %vm2297 = vcmp.eq.f32.partialorder %v2287, 0.0
  %v2298 = vand.u32 %v2287, 2147483648
  %v2299 = vsel %vm2297, %v2298, %v2296
  %s2300 = vtos %v2299
  %s2301 = sadd.f32 %s2222, %s2300
  %v2302 = vmul.f32 %v985, %v1964
  %v2303 = vmul.f32 %v987, %v1965
  %v2304 = vmul.f32 %v989, %v1966
  %v2305 = vmul.f32 %v991, %v1967
  %v2306 = vmul.f32 %v993, %v1968
  %v2307 = vmul.f32 %v995, %v1969
  %v2308 = vmul.f32 %v997, %v1970
  %v2309 = vmul.f32 %v999, %v1971
  %v2310 = vsel %vm1153, %v2302, 0.0
  %v2311 = vsel %vm1153, %v2303, 0.0
  %v2312 = vadd.f32 %v2310, %v2311
  %v2313 = vsel %vm1153, %v2304, 0.0
  %v2314 = vadd.f32 %v2312, %v2313
  %v2315 = vsel %vm1153, %v2305, 0.0
  %v2316 = vadd.f32 %v2314, %v2315
  %v2317 = vsel %vm1153, %v2306, 0.0
  %v2318 = vadd.f32 %v2316, %v2317
  %v2319 = vsel %vm1153, %v2307, 0.0
  %v2320 = vadd.f32 %v2318, %v2319
  %v2321 = vsel %vm1153, %v2308, 0.0
  %v2322 = vadd.f32 %v2320, %v2321
  %v2323 = vsel %vm1153, %v2309, 0.0
  %v2324 = vadd.f32 %v2322, %v2323
  %2325 = vadd.xlane.f32.xlu0 %v2324
  %v2326 = vpop.xlane.xlu0 %2325
  %v2327 = vrot.slane %v2326, 4
  %v2328 = vadd.f32 %v2326, %v2327
  %v2329 = vrot.slane %v2328, 2
  %v2330 = vadd.f32 %v2328, %v2329
  %v2331 = vrot.slane %v2330, 1
  %v2332 = vadd.f32 %v2330, %v2331
  %s2333 = vtos %v2332
  %v2334 = vstv %s2333
  %v2335 = vrsqrt.pop %v2334
  %v2336 = vmul.f32 %v2335, %v2334
  %v2337 = vmul.f32 %v2336, %v2335
  %v2338 = vmul.f32 0.5, %v2337
  %v2339 = vsub.f32 1.5, %v2338
  %v2340 = vmul.f32 %v2335, %v2339
  %v2341 = vmul.f32 %v2334, %v2340
  %vm2342 = vcmp.eq.f32.partialorder %v2334, inf
  %v2343 = vsel %vm2342, %v2334, %v2341
  %vm2344 = vcmp.eq.f32.partialorder %v2334, 0.0
  %v2345 = vand.u32 %v2334, 2147483648
  %v2346 = vsel %vm2344, %v2345, %v2343
  %s2347 = vtos %v2346
  %s2348 = sadd.f32 %s2301, %s2347
  %s2349 = smul.f32 %s2070, %s2144
  %s2350 = sadd.f32 %s1905, %s2349
  %s2351 = smul.f32 %s2070, %s2348
  %s2352 = sadd.f32 %s1907, %s2351
  %vm2353 = vcmp.eq.f32.partialorder %v168, 3.0
  %vm2354 = vcmp.eq.f32.partialorder %v169, 3.0
  %vm2355 = vcmp.eq.f32.partialorder %v170, 3.0
  %vm2356 = vcmp.eq.f32.partialorder %v171, 3.0
  %vm2357 = vcmp.eq.f32.partialorder %v172, 3.0
  %vm2358 = vcmp.eq.f32.partialorder %v173, 3.0
  %vm2359 = vcmp.eq.f32.partialorder %v174, 3.0
  %vm2360 = vcmp.eq.f32.partialorder %v175, 3.0
  %v2361 = vsel %vm2353, 1, 0
  %v2362 = vsel %vm2354, 1, 0
  %v2363 = vsel %vm2355, 1, 0
  %v2364 = vsel %vm2356, 1, 0
  %v2365 = vsel %vm2357, 1, 0
  %v2366 = vsel %vm2358, 1, 0
  %v2367 = vsel %vm2359, 1, 0
  %v2368 = vsel %vm2360, 1, 0
  %v2369 = vcvt.s32.f32 %v2361
  %v2370 = vcvt.s32.f32 %v2362
  %v2371 = vcvt.s32.f32 %v2363
  %v2372 = vcvt.s32.f32 %v2364
  %v2373 = vcvt.s32.f32 %v2365
  %v2374 = vcvt.s32.f32 %v2366
  %v2375 = vcvt.s32.f32 %v2367
  %v2376 = vcvt.s32.f32 %v2368
  %vm2377 = vcmp.ge.f32.partialorder %v1009, 24.0
  %vm2378 = vcmp.ge.f32.partialorder %v1010, 24.0
  %vm2379 = vcmp.ge.f32.partialorder %v1011, 24.0
  %vm2380 = vcmp.ge.f32.partialorder %v1012, 24.0
  %vm2381 = vcmp.ge.f32.partialorder %v1013, 24.0
  %vm2382 = vcmp.ge.f32.partialorder %v1014, 24.0
  %vm2383 = vcmp.ge.f32.partialorder %v1015, 24.0
  %vm2384 = vcmp.ge.f32.partialorder %v1016, 24.0
  %vm2385 = vcmp.lt.f32.partialorder %v1009, 32.0
  %vm2386 = vcmp.lt.f32.partialorder %v1010, 32.0
  %vm2387 = vcmp.lt.f32.partialorder %v1011, 32.0
  %vm2388 = vcmp.lt.f32.partialorder %v1012, 32.0
  %vm2389 = vcmp.lt.f32.partialorder %v1013, 32.0
  %vm2390 = vcmp.lt.f32.partialorder %v1014, 32.0
  %vm2391 = vcmp.lt.f32.partialorder %v1015, 32.0
  %vm2392 = vcmp.lt.f32.partialorder %v1016, 32.0
  %vm2393 = vmand %vm2377, %vm2385
  %vm2394 = vmand %vm2378, %vm2386
  %vm2395 = vmand %vm2379, %vm2387
  %vm2396 = vmand %vm2380, %vm2388
  %vm2397 = vmand %vm2381, %vm2389
  %vm2398 = vmand %vm2382, %vm2390
  %vm2399 = vmand %vm2383, %vm2391
  %vm2400 = vmand %vm2384, %vm2392
  %v2401 = vsel %vm2393, 1, 0
  %v2402 = vsel %vm2394, 1, 0
  %v2403 = vsel %vm2395, 1, 0
  %v2404 = vsel %vm2396, 1, 0
  %v2405 = vsel %vm2397, 1, 0
  %v2406 = vsel %vm2398, 1, 0
  %v2407 = vsel %vm2399, 1, 0
  %v2408 = vsel %vm2400, 1, 0
  %v2409 = vcvt.s32.f32 %v2401
  %v2410 = vcvt.s32.f32 %v2402
  %v2411 = vcvt.s32.f32 %v2403
  %v2412 = vcvt.s32.f32 %v2404
  %v2413 = vcvt.s32.f32 %v2405
  %v2414 = vcvt.s32.f32 %v2406
  %v2415 = vcvt.s32.f32 %v2407
  %v2416 = vcvt.s32.f32 %v2408
  %2425 = vrot.lane.b32.xlu0 %v2369, 126
  %v2426 = vpop.permute.xlu0 %2425
  %2427 = vrot.lane.b32.xlu0 %v2370, 126
  %v2428 = vpop.permute.xlu0 %2427
  %2429 = vrot.lane.b32.xlu0 %v2371, 126
  %v2430 = vpop.permute.xlu0 %2429
  %2431 = vrot.lane.b32.xlu0 %v2372, 126
  %v2432 = vpop.permute.xlu0 %2431
  %2433 = vrot.lane.b32.xlu0 %v2373, 126
  %v2434 = vpop.permute.xlu0 %2433
  %2435 = vrot.lane.b32.xlu0 %v2374, 126
  %v2436 = vpop.permute.xlu0 %2435
  %2437 = vrot.lane.b32.xlu0 %v2375, 126
  %v2438 = vpop.permute.xlu0 %2437
  %2439 = vrot.lane.b32.xlu0 %v2376, 126
  %v2440 = vpop.permute.xlu0 %2439
  %v2449 = vmul.f32 %v168, %v2426
  %v2450 = vmul.f32 %v169, %v2428
  %v2451 = vmul.f32 %v170, %v2430
  %v2452 = vmul.f32 %v171, %v2432
  %v2453 = vmul.f32 %v172, %v2434
  %v2454 = vmul.f32 %v173, %v2436
  %v2455 = vmul.f32 %v174, %v2438
  %v2456 = vmul.f32 %v175, %v2440
  %2465 = vrot.lane.b32.xlu0 %v2449, 127
  %v2466 = vpop.permute.xlu0 %2465
  %2467 = vrot.lane.b32.xlu0 %v2450, 127
  %v2468 = vpop.permute.xlu0 %2467
  %2469 = vrot.lane.b32.xlu0 %v2451, 127
  %v2470 = vpop.permute.xlu0 %2469
  %2471 = vrot.lane.b32.xlu0 %v2452, 127
  %v2472 = vpop.permute.xlu0 %2471
  %2473 = vrot.lane.b32.xlu0 %v2453, 127
  %v2474 = vpop.permute.xlu0 %2473
  %2475 = vrot.lane.b32.xlu0 %v2454, 127
  %v2476 = vpop.permute.xlu0 %2475
  %2477 = vrot.lane.b32.xlu0 %v2455, 127
  %v2478 = vpop.permute.xlu0 %2477
  %2479 = vrot.lane.b32.xlu0 %v2456, 127
  %v2480 = vpop.permute.xlu0 %2479
  %v2489 = vsel %vm1153, %v2466, 0.0
  %v2490 = vsel %vm1153, %v2468, 0.0
  %v2491 = vadd.f32 %v2489, %v2490
  %v2492 = vsel %vm1153, %v2470, 0.0
  %v2493 = vadd.f32 %v2491, %v2492
  %v2494 = vsel %vm1153, %v2472, 0.0
  %v2495 = vadd.f32 %v2493, %v2494
  %v2496 = vsel %vm1153, %v2474, 0.0
  %v2497 = vadd.f32 %v2495, %v2496
  %v2498 = vsel %vm1153, %v2476, 0.0
  %v2499 = vadd.f32 %v2497, %v2498
  %v2500 = vsel %vm1153, %v2478, 0.0
  %v2501 = vadd.f32 %v2499, %v2500
  %v2502 = vsel %vm1153, %v2480, 0.0
  %v2503 = vadd.f32 %v2501, %v2502
  %2504 = vadd.xlane.f32.xlu0 %v2503
  %v2505 = vpop.xlane.xlu0 %2504
  %v2506 = vrot.slane %v2505, 4
  %v2507 = vadd.f32 %v2505, %v2506
  %v2508 = vrot.slane %v2507, 2
  %v2509 = vadd.f32 %v2507, %v2508
  %v2510 = vrot.slane %v2509, 1
  %v2511 = vadd.f32 %v2509, %v2510
  %s2512 = vtos %v2511
  %p2513 = scmp.gt.f32.partialorder %s2512, 0.0
  %s2514 = scalar_select %p2513, 1, 0
  %s2515 = scvt.s32.f32 %s2514
  %2516 = vrot.lane.b32.xlu0 %v2369, 125
  %v2517 = vpop.permute.xlu0 %2516
  %2518 = vrot.lane.b32.xlu0 %v2370, 125
  %v2519 = vpop.permute.xlu0 %2518
  %2520 = vrot.lane.b32.xlu0 %v2371, 125
  %v2521 = vpop.permute.xlu0 %2520
  %2522 = vrot.lane.b32.xlu0 %v2372, 125
  %v2523 = vpop.permute.xlu0 %2522
  %2524 = vrot.lane.b32.xlu0 %v2373, 125
  %v2525 = vpop.permute.xlu0 %2524
  %2526 = vrot.lane.b32.xlu0 %v2374, 125
  %v2527 = vpop.permute.xlu0 %2526
  %2528 = vrot.lane.b32.xlu0 %v2375, 125
  %v2529 = vpop.permute.xlu0 %2528
  %2530 = vrot.lane.b32.xlu0 %v2376, 125
  %v2531 = vpop.permute.xlu0 %2530
  %v2540 = vmul.f32 %v904, %v2517
  %v2541 = vmul.f32 %v905, %v2519
  %v2542 = vmul.f32 %v906, %v2521
  %v2543 = vmul.f32 %v907, %v2523
  %v2544 = vmul.f32 %v908, %v2525
  %v2545 = vmul.f32 %v909, %v2527
  %v2546 = vmul.f32 %v910, %v2529
  %v2547 = vmul.f32 %v911, %v2531
  %v2548 = vsel %vm1153, %v2540, 0.0
  %v2549 = vsel %vm1153, %v2541, 0.0
  %v2550 = vadd.f32 %v2548, %v2549
  %v2551 = vsel %vm1153, %v2542, 0.0
  %v2552 = vadd.f32 %v2550, %v2551
  %v2553 = vsel %vm1153, %v2543, 0.0
  %v2554 = vadd.f32 %v2552, %v2553
  %v2555 = vsel %vm1153, %v2544, 0.0
  %v2556 = vadd.f32 %v2554, %v2555
  %v2557 = vsel %vm1153, %v2545, 0.0
  %v2558 = vadd.f32 %v2556, %v2557
  %v2559 = vsel %vm1153, %v2546, 0.0
  %v2560 = vadd.f32 %v2558, %v2559
  %v2561 = vsel %vm1153, %v2547, 0.0
  %v2562 = vadd.f32 %v2560, %v2561
  %2563 = vadd.xlane.f32.xlu0 %v2562
  %v2564 = vpop.xlane.xlu0 %2563
  %v2565 = vrot.slane %v2564, 4
  %v2566 = vadd.f32 %v2564, %v2565
  %v2567 = vrot.slane %v2566, 2
  %v2568 = vadd.f32 %v2566, %v2567
  %v2569 = vrot.slane %v2568, 1
  %v2570 = vadd.f32 %v2568, %v2569
  %s2571 = vtos %v2570
  %s2572 = smax.f32 %s2512, 1.0
  %v2573 = vstv %s2572
  %v2574 = vrcp.pop %v2573
  %v2575 = vmul.f32 %v2573, %v2574
  %v2576 = vsub.f32 1.0, %v2575
  %v2577 = vmul.f32 %v2574, %v2576
  %v2578 = vadd.f32 %v2574, %v2577
  %vm2579 = vweird.f32 %v2573
  %vm2580 = vweird.f32 %v2574
  %vm2581 = vmor %vm2579, %vm2580
  %v2582 = vsel %vm2581, %v2574, %v2578
  %v2583 = vand.u32 2147483647, %v2573
  %vm2584 = vcmp.eq.f32.partialorder %v2583, 8.507059e+37
  %v2585 = vand.u32 %v2573, 2147483648
  %v2586 = vor.u32 1.1754944e-38, %v2585
  %v2587 = vsel %vm2584, %v2586, %v2582
  %s2588 = vtos %v2587
  %s2589 = smul.f32 %s2571, %s2588
  %v2590 = vmul.f32 %v936, %v2426
  %v2591 = vmul.f32 %v937, %v2428
  %v2592 = vmul.f32 %v938, %v2430
  %v2593 = vmul.f32 %v939, %v2432
  %v2594 = vmul.f32 %v940, %v2434
  %v2595 = vmul.f32 %v941, %v2436
  %v2596 = vmul.f32 %v942, %v2438
  %v2597 = vmul.f32 %v943, %v2440
  %2606 = vrot.lane.b32.xlu0 %v2590, 127
  %v2607 = vpop.permute.xlu0 %2606
  %2608 = vrot.lane.b32.xlu0 %v2591, 127
  %v2609 = vpop.permute.xlu0 %2608
  %2610 = vrot.lane.b32.xlu0 %v2592, 127
  %v2611 = vpop.permute.xlu0 %2610
  %2612 = vrot.lane.b32.xlu0 %v2593, 127
  %v2613 = vpop.permute.xlu0 %2612
  %2614 = vrot.lane.b32.xlu0 %v2594, 127
  %v2615 = vpop.permute.xlu0 %2614
  %2616 = vrot.lane.b32.xlu0 %v2595, 127
  %v2617 = vpop.permute.xlu0 %2616
  %2618 = vrot.lane.b32.xlu0 %v2596, 127
  %v2619 = vpop.permute.xlu0 %2618
  %2620 = vrot.lane.b32.xlu0 %v2597, 127
  %v2621 = vpop.permute.xlu0 %2620
  %v2630 = vsel %vm1153, %v2607, 0.0
  %v2631 = vsel %vm1153, %v2609, 0.0
  %v2632 = vadd.f32 %v2630, %v2631
  %v2633 = vsel %vm1153, %v2611, 0.0
  %v2634 = vadd.f32 %v2632, %v2633
  %v2635 = vsel %vm1153, %v2613, 0.0
  %v2636 = vadd.f32 %v2634, %v2635
  %v2637 = vsel %vm1153, %v2615, 0.0
  %v2638 = vadd.f32 %v2636, %v2637
  %v2639 = vsel %vm1153, %v2617, 0.0
  %v2640 = vadd.f32 %v2638, %v2639
  %v2641 = vsel %vm1153, %v2619, 0.0
  %v2642 = vadd.f32 %v2640, %v2641
  %v2643 = vsel %vm1153, %v2621, 0.0
  %v2644 = vadd.f32 %v2642, %v2643
  %2645 = vadd.xlane.f32.xlu0 %v2644
  %v2646 = vpop.xlane.xlu0 %2645
  %v2647 = vrot.slane %v2646, 4
  %v2648 = vadd.f32 %v2646, %v2647
  %v2649 = vrot.slane %v2648, 2
  %v2650 = vadd.f32 %v2648, %v2649
  %v2651 = vrot.slane %v2650, 1
  %v2652 = vadd.f32 %v2650, %v2651
  %s2653 = vtos %v2652
  %v2654 = vstv %s2653
  %v2655 = vrsqrt.pop %v2654
  %v2656 = vmul.f32 %v2655, %v2654
  %v2657 = vmul.f32 %v2656, %v2655
  %v2658 = vmul.f32 0.5, %v2657
  %v2659 = vsub.f32 1.5, %v2658
  %v2660 = vmul.f32 %v2655, %v2659
  %v2661 = vmul.f32 %v2654, %v2660
  %vm2662 = vcmp.eq.f32.partialorder %v2654, inf
  %v2663 = vsel %vm2662, %v2654, %v2661
  %vm2664 = vcmp.eq.f32.partialorder %v2654, 0.0
  %v2665 = vand.u32 %v2654, 2147483648
  %v2666 = vsel %vm2664, %v2665, %v2663
  %s2667 = vtos %v2666
  %v2668 = vmul.f32 %v968, %v2426
  %v2669 = vmul.f32 %v969, %v2428
  %v2670 = vmul.f32 %v970, %v2430
  %v2671 = vmul.f32 %v971, %v2432
  %v2672 = vmul.f32 %v972, %v2434
  %v2673 = vmul.f32 %v973, %v2436
  %v2674 = vmul.f32 %v974, %v2438
  %v2675 = vmul.f32 %v975, %v2440
  %2684 = vrot.lane.b32.xlu0 %v2668, 127
  %v2685 = vpop.permute.xlu0 %2684
  %2686 = vrot.lane.b32.xlu0 %v2669, 127
  %v2687 = vpop.permute.xlu0 %2686
  %2688 = vrot.lane.b32.xlu0 %v2670, 127
  %v2689 = vpop.permute.xlu0 %2688
  %2690 = vrot.lane.b32.xlu0 %v2671, 127
  %v2691 = vpop.permute.xlu0 %2690
  %2692 = vrot.lane.b32.xlu0 %v2672, 127
  %v2693 = vpop.permute.xlu0 %2692
  %2694 = vrot.lane.b32.xlu0 %v2673, 127
  %v2695 = vpop.permute.xlu0 %2694
  %2696 = vrot.lane.b32.xlu0 %v2674, 127
  %v2697 = vpop.permute.xlu0 %2696
  %2698 = vrot.lane.b32.xlu0 %v2675, 127
  %v2699 = vpop.permute.xlu0 %2698
  %v2708 = vsel %vm1153, %v2685, 0.0
  %v2709 = vsel %vm1153, %v2687, 0.0
  %v2710 = vadd.f32 %v2708, %v2709
  %v2711 = vsel %vm1153, %v2689, 0.0
  %v2712 = vadd.f32 %v2710, %v2711
  %v2713 = vsel %vm1153, %v2691, 0.0
  %v2714 = vadd.f32 %v2712, %v2713
  %v2715 = vsel %vm1153, %v2693, 0.0
  %v2716 = vadd.f32 %v2714, %v2715
  %v2717 = vsel %vm1153, %v2695, 0.0
  %v2718 = vadd.f32 %v2716, %v2717
  %v2719 = vsel %vm1153, %v2697, 0.0
  %v2720 = vadd.f32 %v2718, %v2719
  %v2721 = vsel %vm1153, %v2699, 0.0
  %v2722 = vadd.f32 %v2720, %v2721
  %2723 = vadd.xlane.f32.xlu0 %v2722
  %v2724 = vpop.xlane.xlu0 %2723
  %v2725 = vrot.slane %v2724, 4
  %v2726 = vadd.f32 %v2724, %v2725
  %v2727 = vrot.slane %v2726, 2
  %v2728 = vadd.f32 %v2726, %v2727
  %v2729 = vrot.slane %v2728, 1
  %v2730 = vadd.f32 %v2728, %v2729
  %s2731 = vtos %v2730
  %v2732 = vstv %s2731
  %v2733 = vrsqrt.pop %v2732
  %v2734 = vmul.f32 %v2733, %v2732
  %v2735 = vmul.f32 %v2734, %v2733
  %v2736 = vmul.f32 0.5, %v2735
  %v2737 = vsub.f32 1.5, %v2736
  %v2738 = vmul.f32 %v2733, %v2737
  %v2739 = vmul.f32 %v2732, %v2738
  %vm2740 = vcmp.eq.f32.partialorder %v2732, inf
  %v2741 = vsel %vm2740, %v2732, %v2739
  %vm2742 = vcmp.eq.f32.partialorder %v2732, 0.0
  %v2743 = vand.u32 %v2732, 2147483648
  %v2744 = vsel %vm2742, %v2743, %v2741
  %s2745 = vtos %v2744
  %s2746 = sadd.f32 %s2667, %s2745
  %v2747 = vmul.f32 %v985, %v2409
  %v2748 = vmul.f32 %v987, %v2410
  %v2749 = vmul.f32 %v989, %v2411
  %v2750 = vmul.f32 %v991, %v2412
  %v2751 = vmul.f32 %v993, %v2413
  %v2752 = vmul.f32 %v995, %v2414
  %v2753 = vmul.f32 %v997, %v2415
  %v2754 = vmul.f32 %v999, %v2416
  %v2755 = vsel %vm1153, %v2747, 0.0
  %v2756 = vsel %vm1153, %v2748, 0.0
  %v2757 = vadd.f32 %v2755, %v2756
  %v2758 = vsel %vm1153, %v2749, 0.0
  %v2759 = vadd.f32 %v2757, %v2758
  %v2760 = vsel %vm1153, %v2750, 0.0
  %v2761 = vadd.f32 %v2759, %v2760
  %v2762 = vsel %vm1153, %v2751, 0.0
  %v2763 = vadd.f32 %v2761, %v2762
  %v2764 = vsel %vm1153, %v2752, 0.0
  %v2765 = vadd.f32 %v2763, %v2764
  %v2766 = vsel %vm1153, %v2753, 0.0
  %v2767 = vadd.f32 %v2765, %v2766
  %v2768 = vsel %vm1153, %v2754, 0.0
  %v2769 = vadd.f32 %v2767, %v2768
  %2770 = vadd.xlane.f32.xlu0 %v2769
  %v2771 = vpop.xlane.xlu0 %2770
  %v2772 = vrot.slane %v2771, 4
  %v2773 = vadd.f32 %v2771, %v2772
  %v2774 = vrot.slane %v2773, 2
  %v2775 = vadd.f32 %v2773, %v2774
  %v2776 = vrot.slane %v2775, 1
  %v2777 = vadd.f32 %v2775, %v2776
  %s2778 = vtos %v2777
  %v2779 = vstv %s2778
  %v2780 = vrsqrt.pop %v2779
  %v2781 = vmul.f32 %v2780, %v2779
  %v2782 = vmul.f32 %v2781, %v2780
  %v2783 = vmul.f32 0.5, %v2782
  %v2784 = vsub.f32 1.5, %v2783
  %v2785 = vmul.f32 %v2780, %v2784
  %v2786 = vmul.f32 %v2779, %v2785
  %vm2787 = vcmp.eq.f32.partialorder %v2779, inf
  %v2788 = vsel %vm2787, %v2779, %v2786
  %vm2789 = vcmp.eq.f32.partialorder %v2779, 0.0
  %v2790 = vand.u32 %v2779, 2147483648
  %v2791 = vsel %vm2789, %v2790, %v2788
  %s2792 = vtos %v2791
  %s2793 = sadd.f32 %s2746, %s2792
  %s2794 = smul.f32 %s2515, %s2589
  %s2795 = sadd.f32 %s2350, %s2794
  %s2796 = smul.f32 %s2515, %s2793
  %s2797 = sadd.f32 %s2352, %s2796
  %vm2798 = vcmp.eq.f32.partialorder %v168, 4.0
  %vm2799 = vcmp.eq.f32.partialorder %v169, 4.0
  %vm2800 = vcmp.eq.f32.partialorder %v170, 4.0
  %vm2801 = vcmp.eq.f32.partialorder %v171, 4.0
  %vm2802 = vcmp.eq.f32.partialorder %v172, 4.0
  %vm2803 = vcmp.eq.f32.partialorder %v173, 4.0
  %vm2804 = vcmp.eq.f32.partialorder %v174, 4.0
  %vm2805 = vcmp.eq.f32.partialorder %v175, 4.0
  %v2806 = vsel %vm2798, 1, 0
  %v2807 = vsel %vm2799, 1, 0
  %v2808 = vsel %vm2800, 1, 0
  %v2809 = vsel %vm2801, 1, 0
  %v2810 = vsel %vm2802, 1, 0
  %v2811 = vsel %vm2803, 1, 0
  %v2812 = vsel %vm2804, 1, 0
  %v2813 = vsel %vm2805, 1, 0
  %v2814 = vcvt.s32.f32 %v2806
  %v2815 = vcvt.s32.f32 %v2807
  %v2816 = vcvt.s32.f32 %v2808
  %v2817 = vcvt.s32.f32 %v2809
  %v2818 = vcvt.s32.f32 %v2810
  %v2819 = vcvt.s32.f32 %v2811
  %v2820 = vcvt.s32.f32 %v2812
  %v2821 = vcvt.s32.f32 %v2813
  %vm2822 = vcmp.ge.f32.partialorder %v1009, 32.0
  %vm2823 = vcmp.ge.f32.partialorder %v1010, 32.0
  %vm2824 = vcmp.ge.f32.partialorder %v1011, 32.0
  %vm2825 = vcmp.ge.f32.partialorder %v1012, 32.0
  %vm2826 = vcmp.ge.f32.partialorder %v1013, 32.0
  %vm2827 = vcmp.ge.f32.partialorder %v1014, 32.0
  %vm2828 = vcmp.ge.f32.partialorder %v1015, 32.0
  %vm2829 = vcmp.ge.f32.partialorder %v1016, 32.0
  %vm2830 = vcmp.lt.f32.partialorder %v1009, 40.0
  %vm2831 = vcmp.lt.f32.partialorder %v1010, 40.0
  %vm2832 = vcmp.lt.f32.partialorder %v1011, 40.0
  %vm2833 = vcmp.lt.f32.partialorder %v1012, 40.0
  %vm2834 = vcmp.lt.f32.partialorder %v1013, 40.0
  %vm2835 = vcmp.lt.f32.partialorder %v1014, 40.0
  %vm2836 = vcmp.lt.f32.partialorder %v1015, 40.0
  %vm2837 = vcmp.lt.f32.partialorder %v1016, 40.0
  %vm2838 = vmand %vm2822, %vm2830
  %vm2839 = vmand %vm2823, %vm2831
  %vm2840 = vmand %vm2824, %vm2832
  %vm2841 = vmand %vm2825, %vm2833
  %vm2842 = vmand %vm2826, %vm2834
  %vm2843 = vmand %vm2827, %vm2835
  %vm2844 = vmand %vm2828, %vm2836
  %vm2845 = vmand %vm2829, %vm2837
  %v2846 = vsel %vm2838, 1, 0
  %v2847 = vsel %vm2839, 1, 0
  %v2848 = vsel %vm2840, 1, 0
  %v2849 = vsel %vm2841, 1, 0
  %v2850 = vsel %vm2842, 1, 0
  %v2851 = vsel %vm2843, 1, 0
  %v2852 = vsel %vm2844, 1, 0
  %v2853 = vsel %vm2845, 1, 0
  %v2854 = vcvt.s32.f32 %v2846
  %v2855 = vcvt.s32.f32 %v2847
  %v2856 = vcvt.s32.f32 %v2848
  %v2857 = vcvt.s32.f32 %v2849
  %v2858 = vcvt.s32.f32 %v2850
  %v2859 = vcvt.s32.f32 %v2851
  %v2860 = vcvt.s32.f32 %v2852
  %v2861 = vcvt.s32.f32 %v2853
  %2870 = vrot.lane.b32.xlu0 %v2814, 126
  %v2871 = vpop.permute.xlu0 %2870
  %2872 = vrot.lane.b32.xlu0 %v2815, 126
  %v2873 = vpop.permute.xlu0 %2872
  %2874 = vrot.lane.b32.xlu0 %v2816, 126
  %v2875 = vpop.permute.xlu0 %2874
  %2876 = vrot.lane.b32.xlu0 %v2817, 126
  %v2877 = vpop.permute.xlu0 %2876
  %2878 = vrot.lane.b32.xlu0 %v2818, 126
  %v2879 = vpop.permute.xlu0 %2878
  %2880 = vrot.lane.b32.xlu0 %v2819, 126
  %v2881 = vpop.permute.xlu0 %2880
  %2882 = vrot.lane.b32.xlu0 %v2820, 126
  %v2883 = vpop.permute.xlu0 %2882
  %2884 = vrot.lane.b32.xlu0 %v2821, 126
  %v2885 = vpop.permute.xlu0 %2884
  %v2894 = vmul.f32 %v168, %v2871
  %v2895 = vmul.f32 %v169, %v2873
  %v2896 = vmul.f32 %v170, %v2875
  %v2897 = vmul.f32 %v171, %v2877
  %v2898 = vmul.f32 %v172, %v2879
  %v2899 = vmul.f32 %v173, %v2881
  %v2900 = vmul.f32 %v174, %v2883
  %v2901 = vmul.f32 %v175, %v2885
  %2910 = vrot.lane.b32.xlu0 %v2894, 127
  %v2911 = vpop.permute.xlu0 %2910
  %2912 = vrot.lane.b32.xlu0 %v2895, 127
  %v2913 = vpop.permute.xlu0 %2912
  %2914 = vrot.lane.b32.xlu0 %v2896, 127
  %v2915 = vpop.permute.xlu0 %2914
  %2916 = vrot.lane.b32.xlu0 %v2897, 127
  %v2917 = vpop.permute.xlu0 %2916
  %2918 = vrot.lane.b32.xlu0 %v2898, 127
  %v2919 = vpop.permute.xlu0 %2918
  %2920 = vrot.lane.b32.xlu0 %v2899, 127
  %v2921 = vpop.permute.xlu0 %2920
  %2922 = vrot.lane.b32.xlu0 %v2900, 127
  %v2923 = vpop.permute.xlu0 %2922
  %2924 = vrot.lane.b32.xlu0 %v2901, 127
  %v2925 = vpop.permute.xlu0 %2924
  %v2934 = vsel %vm1153, %v2911, 0.0
  %v2935 = vsel %vm1153, %v2913, 0.0
  %v2936 = vadd.f32 %v2934, %v2935
  %v2937 = vsel %vm1153, %v2915, 0.0
  %v2938 = vadd.f32 %v2936, %v2937
  %v2939 = vsel %vm1153, %v2917, 0.0
  %v2940 = vadd.f32 %v2938, %v2939
  %v2941 = vsel %vm1153, %v2919, 0.0
  %v2942 = vadd.f32 %v2940, %v2941
  %v2943 = vsel %vm1153, %v2921, 0.0
  %v2944 = vadd.f32 %v2942, %v2943
  %v2945 = vsel %vm1153, %v2923, 0.0
  %v2946 = vadd.f32 %v2944, %v2945
  %v2947 = vsel %vm1153, %v2925, 0.0
  %v2948 = vadd.f32 %v2946, %v2947
  %2949 = vadd.xlane.f32.xlu0 %v2948
  %v2950 = vpop.xlane.xlu0 %2949
  %v2951 = vrot.slane %v2950, 4
  %v2952 = vadd.f32 %v2950, %v2951
  %v2953 = vrot.slane %v2952, 2
  %v2954 = vadd.f32 %v2952, %v2953
  %v2955 = vrot.slane %v2954, 1
  %v2956 = vadd.f32 %v2954, %v2955
  %s2957 = vtos %v2956
  %p2958 = scmp.gt.f32.partialorder %s2957, 0.0
  %s2959 = scalar_select %p2958, 1, 0
  %s2960 = scvt.s32.f32 %s2959
  %2961 = vrot.lane.b32.xlu0 %v2814, 125
  %v2962 = vpop.permute.xlu0 %2961
  %2963 = vrot.lane.b32.xlu0 %v2815, 125
  %v2964 = vpop.permute.xlu0 %2963
  %2965 = vrot.lane.b32.xlu0 %v2816, 125
  %v2966 = vpop.permute.xlu0 %2965
  %2967 = vrot.lane.b32.xlu0 %v2817, 125
  %v2968 = vpop.permute.xlu0 %2967
  %2969 = vrot.lane.b32.xlu0 %v2818, 125
  %v2970 = vpop.permute.xlu0 %2969
  %2971 = vrot.lane.b32.xlu0 %v2819, 125
  %v2972 = vpop.permute.xlu0 %2971
  %2973 = vrot.lane.b32.xlu0 %v2820, 125
  %v2974 = vpop.permute.xlu0 %2973
  %2975 = vrot.lane.b32.xlu0 %v2821, 125
  %v2976 = vpop.permute.xlu0 %2975
  %v2985 = vmul.f32 %v904, %v2962
  %v2986 = vmul.f32 %v905, %v2964
  %v2987 = vmul.f32 %v906, %v2966
  %v2988 = vmul.f32 %v907, %v2968
  %v2989 = vmul.f32 %v908, %v2970
  %v2990 = vmul.f32 %v909, %v2972
  %v2991 = vmul.f32 %v910, %v2974
  %v2992 = vmul.f32 %v911, %v2976
  %v2993 = vsel %vm1153, %v2985, 0.0
  %v2994 = vsel %vm1153, %v2986, 0.0
  %v2995 = vadd.f32 %v2993, %v2994
  %v2996 = vsel %vm1153, %v2987, 0.0
  %v2997 = vadd.f32 %v2995, %v2996
  %v2998 = vsel %vm1153, %v2988, 0.0
  %v2999 = vadd.f32 %v2997, %v2998
  %v3000 = vsel %vm1153, %v2989, 0.0
  %v3001 = vadd.f32 %v2999, %v3000
  %v3002 = vsel %vm1153, %v2990, 0.0
  %v3003 = vadd.f32 %v3001, %v3002
  %v3004 = vsel %vm1153, %v2991, 0.0
  %v3005 = vadd.f32 %v3003, %v3004
  %v3006 = vsel %vm1153, %v2992, 0.0
  %v3007 = vadd.f32 %v3005, %v3006
  %3008 = vadd.xlane.f32.xlu0 %v3007
  %v3009 = vpop.xlane.xlu0 %3008
  %v3010 = vrot.slane %v3009, 4
  %v3011 = vadd.f32 %v3009, %v3010
  %v3012 = vrot.slane %v3011, 2
  %v3013 = vadd.f32 %v3011, %v3012
  %v3014 = vrot.slane %v3013, 1
  %v3015 = vadd.f32 %v3013, %v3014
  %s3016 = vtos %v3015
  %s3017 = smax.f32 %s2957, 1.0
  %v3018 = vstv %s3017
  %v3019 = vrcp.pop %v3018
  %v3020 = vmul.f32 %v3018, %v3019
  %v3021 = vsub.f32 1.0, %v3020
  %v3022 = vmul.f32 %v3019, %v3021
  %v3023 = vadd.f32 %v3019, %v3022
  %vm3024 = vweird.f32 %v3018
  %vm3025 = vweird.f32 %v3019
  %vm3026 = vmor %vm3024, %vm3025
  %v3027 = vsel %vm3026, %v3019, %v3023
  %v3028 = vand.u32 2147483647, %v3018
  %vm3029 = vcmp.eq.f32.partialorder %v3028, 8.507059e+37
  %v3030 = vand.u32 %v3018, 2147483648
  %v3031 = vor.u32 1.1754944e-38, %v3030
  %v3032 = vsel %vm3029, %v3031, %v3027
  %s3033 = vtos %v3032
  %s3034 = smul.f32 %s3016, %s3033
  %v3035 = vmul.f32 %v936, %v2871
  %v3036 = vmul.f32 %v937, %v2873
  %v3037 = vmul.f32 %v938, %v2875
  %v3038 = vmul.f32 %v939, %v2877
  %v3039 = vmul.f32 %v940, %v2879
  %v3040 = vmul.f32 %v941, %v2881
  %v3041 = vmul.f32 %v942, %v2883
  %v3042 = vmul.f32 %v943, %v2885
  %3051 = vrot.lane.b32.xlu0 %v3035, 127
  %v3052 = vpop.permute.xlu0 %3051
  %3053 = vrot.lane.b32.xlu0 %v3036, 127
  %v3054 = vpop.permute.xlu0 %3053
  %3055 = vrot.lane.b32.xlu0 %v3037, 127
  %v3056 = vpop.permute.xlu0 %3055
  %3057 = vrot.lane.b32.xlu0 %v3038, 127
  %v3058 = vpop.permute.xlu0 %3057
  %3059 = vrot.lane.b32.xlu0 %v3039, 127
  %v3060 = vpop.permute.xlu0 %3059
  %3061 = vrot.lane.b32.xlu0 %v3040, 127
  %v3062 = vpop.permute.xlu0 %3061
  %3063 = vrot.lane.b32.xlu0 %v3041, 127
  %v3064 = vpop.permute.xlu0 %3063
  %3065 = vrot.lane.b32.xlu0 %v3042, 127
  %v3066 = vpop.permute.xlu0 %3065
  %v3075 = vsel %vm1153, %v3052, 0.0
  %v3076 = vsel %vm1153, %v3054, 0.0
  %v3077 = vadd.f32 %v3075, %v3076
  %v3078 = vsel %vm1153, %v3056, 0.0
  %v3079 = vadd.f32 %v3077, %v3078
  %v3080 = vsel %vm1153, %v3058, 0.0
  %v3081 = vadd.f32 %v3079, %v3080
  %v3082 = vsel %vm1153, %v3060, 0.0
  %v3083 = vadd.f32 %v3081, %v3082
  %v3084 = vsel %vm1153, %v3062, 0.0
  %v3085 = vadd.f32 %v3083, %v3084
  %v3086 = vsel %vm1153, %v3064, 0.0
  %v3087 = vadd.f32 %v3085, %v3086
  %v3088 = vsel %vm1153, %v3066, 0.0
  %v3089 = vadd.f32 %v3087, %v3088
  %3090 = vadd.xlane.f32.xlu0 %v3089
  %v3091 = vpop.xlane.xlu0 %3090
  %v3092 = vrot.slane %v3091, 4
  %v3093 = vadd.f32 %v3091, %v3092
  %v3094 = vrot.slane %v3093, 2
  %v3095 = vadd.f32 %v3093, %v3094
  %v3096 = vrot.slane %v3095, 1
  %v3097 = vadd.f32 %v3095, %v3096
  %s3098 = vtos %v3097
  %v3099 = vstv %s3098
  %v3100 = vrsqrt.pop %v3099
  %v3101 = vmul.f32 %v3100, %v3099
  %v3102 = vmul.f32 %v3101, %v3100
  %v3103 = vmul.f32 0.5, %v3102
  %v3104 = vsub.f32 1.5, %v3103
  %v3105 = vmul.f32 %v3100, %v3104
  %v3106 = vmul.f32 %v3099, %v3105
  %vm3107 = vcmp.eq.f32.partialorder %v3099, inf
  %v3108 = vsel %vm3107, %v3099, %v3106
  %vm3109 = vcmp.eq.f32.partialorder %v3099, 0.0
  %v3110 = vand.u32 %v3099, 2147483648
  %v3111 = vsel %vm3109, %v3110, %v3108
  %s3112 = vtos %v3111
  %v3113 = vmul.f32 %v968, %v2871
  %v3114 = vmul.f32 %v969, %v2873
  %v3115 = vmul.f32 %v970, %v2875
  %v3116 = vmul.f32 %v971, %v2877
  %v3117 = vmul.f32 %v972, %v2879
  %v3118 = vmul.f32 %v973, %v2881
  %v3119 = vmul.f32 %v974, %v2883
  %v3120 = vmul.f32 %v975, %v2885
  %3129 = vrot.lane.b32.xlu0 %v3113, 127
  %v3130 = vpop.permute.xlu0 %3129
  %3131 = vrot.lane.b32.xlu0 %v3114, 127
  %v3132 = vpop.permute.xlu0 %3131
  %3133 = vrot.lane.b32.xlu0 %v3115, 127
  %v3134 = vpop.permute.xlu0 %3133
  %3135 = vrot.lane.b32.xlu0 %v3116, 127
  %v3136 = vpop.permute.xlu0 %3135
  %3137 = vrot.lane.b32.xlu0 %v3117, 127
  %v3138 = vpop.permute.xlu0 %3137
  %3139 = vrot.lane.b32.xlu0 %v3118, 127
  %v3140 = vpop.permute.xlu0 %3139
  %3141 = vrot.lane.b32.xlu0 %v3119, 127
  %v3142 = vpop.permute.xlu0 %3141
  %3143 = vrot.lane.b32.xlu0 %v3120, 127
  %v3144 = vpop.permute.xlu0 %3143
  %v3153 = vsel %vm1153, %v3130, 0.0
  %v3154 = vsel %vm1153, %v3132, 0.0
  %v3155 = vadd.f32 %v3153, %v3154
  %v3156 = vsel %vm1153, %v3134, 0.0
  %v3157 = vadd.f32 %v3155, %v3156
  %v3158 = vsel %vm1153, %v3136, 0.0
  %v3159 = vadd.f32 %v3157, %v3158
  %v3160 = vsel %vm1153, %v3138, 0.0
  %v3161 = vadd.f32 %v3159, %v3160
  %v3162 = vsel %vm1153, %v3140, 0.0
  %v3163 = vadd.f32 %v3161, %v3162
  %v3164 = vsel %vm1153, %v3142, 0.0
  %v3165 = vadd.f32 %v3163, %v3164
  %v3166 = vsel %vm1153, %v3144, 0.0
  %v3167 = vadd.f32 %v3165, %v3166
  %3168 = vadd.xlane.f32.xlu0 %v3167
  %v3169 = vpop.xlane.xlu0 %3168
  %v3170 = vrot.slane %v3169, 4
  %v3171 = vadd.f32 %v3169, %v3170
  %v3172 = vrot.slane %v3171, 2
  %v3173 = vadd.f32 %v3171, %v3172
  %v3174 = vrot.slane %v3173, 1
  %v3175 = vadd.f32 %v3173, %v3174
  %s3176 = vtos %v3175
  %v3177 = vstv %s3176
  %v3178 = vrsqrt.pop %v3177
  %v3179 = vmul.f32 %v3178, %v3177
  %v3180 = vmul.f32 %v3179, %v3178
  %v3181 = vmul.f32 0.5, %v3180
  %v3182 = vsub.f32 1.5, %v3181
  %v3183 = vmul.f32 %v3178, %v3182
  %v3184 = vmul.f32 %v3177, %v3183
  %vm3185 = vcmp.eq.f32.partialorder %v3177, inf
  %v3186 = vsel %vm3185, %v3177, %v3184
  %vm3187 = vcmp.eq.f32.partialorder %v3177, 0.0
  %v3188 = vand.u32 %v3177, 2147483648
  %v3189 = vsel %vm3187, %v3188, %v3186
  %s3190 = vtos %v3189
  %s3191 = sadd.f32 %s3112, %s3190
  %v3192 = vmul.f32 %v985, %v2854
  %v3193 = vmul.f32 %v987, %v2855
  %v3194 = vmul.f32 %v989, %v2856
  %v3195 = vmul.f32 %v991, %v2857
  %v3196 = vmul.f32 %v993, %v2858
  %v3197 = vmul.f32 %v995, %v2859
  %v3198 = vmul.f32 %v997, %v2860
  %v3199 = vmul.f32 %v999, %v2861
  %v3200 = vsel %vm1153, %v3192, 0.0
  %v3201 = vsel %vm1153, %v3193, 0.0
  %v3202 = vadd.f32 %v3200, %v3201
  %v3203 = vsel %vm1153, %v3194, 0.0
  %v3204 = vadd.f32 %v3202, %v3203
  %v3205 = vsel %vm1153, %v3195, 0.0
  %v3206 = vadd.f32 %v3204, %v3205
  %v3207 = vsel %vm1153, %v3196, 0.0
  %v3208 = vadd.f32 %v3206, %v3207
  %v3209 = vsel %vm1153, %v3197, 0.0
  %v3210 = vadd.f32 %v3208, %v3209
  %v3211 = vsel %vm1153, %v3198, 0.0
  %v3212 = vadd.f32 %v3210, %v3211
  %v3213 = vsel %vm1153, %v3199, 0.0
  %v3214 = vadd.f32 %v3212, %v3213
  %3215 = vadd.xlane.f32.xlu0 %v3214
  %v3216 = vpop.xlane.xlu0 %3215
  %v3217 = vrot.slane %v3216, 4
  %v3218 = vadd.f32 %v3216, %v3217
  %v3219 = vrot.slane %v3218, 2
  %v3220 = vadd.f32 %v3218, %v3219
  %v3221 = vrot.slane %v3220, 1
  %v3222 = vadd.f32 %v3220, %v3221
  %s3223 = vtos %v3222
  %v3224 = vstv %s3223
  %v3225 = vrsqrt.pop %v3224
  %v3226 = vmul.f32 %v3225, %v3224
  %v3227 = vmul.f32 %v3226, %v3225
  %v3228 = vmul.f32 0.5, %v3227
  %v3229 = vsub.f32 1.5, %v3228
  %v3230 = vmul.f32 %v3225, %v3229
  %v3231 = vmul.f32 %v3224, %v3230
  %vm3232 = vcmp.eq.f32.partialorder %v3224, inf
  %v3233 = vsel %vm3232, %v3224, %v3231
  %vm3234 = vcmp.eq.f32.partialorder %v3224, 0.0
  %v3235 = vand.u32 %v3224, 2147483648
  %v3236 = vsel %vm3234, %v3235, %v3233
  %s3237 = vtos %v3236
  %s3238 = sadd.f32 %s3191, %s3237
  %s3239 = smul.f32 %s2960, %s3034
  %s3240 = sadd.f32 %s2795, %s3239
  %s3241 = smul.f32 %s2960, %s3238
  %s3242 = sadd.f32 %s2797, %s3241
  %vm3243 = vcmp.eq.f32.partialorder %v168, 5.0
  %vm3244 = vcmp.eq.f32.partialorder %v169, 5.0
  %vm3245 = vcmp.eq.f32.partialorder %v170, 5.0
  %vm3246 = vcmp.eq.f32.partialorder %v171, 5.0
  %vm3247 = vcmp.eq.f32.partialorder %v172, 5.0
  %vm3248 = vcmp.eq.f32.partialorder %v173, 5.0
  %vm3249 = vcmp.eq.f32.partialorder %v174, 5.0
  %vm3250 = vcmp.eq.f32.partialorder %v175, 5.0
  %v3251 = vsel %vm3243, 1, 0
  %v3252 = vsel %vm3244, 1, 0
  %v3253 = vsel %vm3245, 1, 0
  %v3254 = vsel %vm3246, 1, 0
  %v3255 = vsel %vm3247, 1, 0
  %v3256 = vsel %vm3248, 1, 0
  %v3257 = vsel %vm3249, 1, 0
  %v3258 = vsel %vm3250, 1, 0
  %v3259 = vcvt.s32.f32 %v3251
  %v3260 = vcvt.s32.f32 %v3252
  %v3261 = vcvt.s32.f32 %v3253
  %v3262 = vcvt.s32.f32 %v3254
  %v3263 = vcvt.s32.f32 %v3255
  %v3264 = vcvt.s32.f32 %v3256
  %v3265 = vcvt.s32.f32 %v3257
  %v3266 = vcvt.s32.f32 %v3258
  %vm3267 = vcmp.ge.f32.partialorder %v1009, 40.0
  %vm3268 = vcmp.ge.f32.partialorder %v1010, 40.0
  %vm3269 = vcmp.ge.f32.partialorder %v1011, 40.0
  %vm3270 = vcmp.ge.f32.partialorder %v1012, 40.0
  %vm3271 = vcmp.ge.f32.partialorder %v1013, 40.0
  %vm3272 = vcmp.ge.f32.partialorder %v1014, 40.0
  %vm3273 = vcmp.ge.f32.partialorder %v1015, 40.0
  %vm3274 = vcmp.ge.f32.partialorder %v1016, 40.0
  %vm3275 = vcmp.lt.f32.partialorder %v1009, 48.0
  %vm3276 = vcmp.lt.f32.partialorder %v1010, 48.0
  %vm3277 = vcmp.lt.f32.partialorder %v1011, 48.0
  %vm3278 = vcmp.lt.f32.partialorder %v1012, 48.0
  %vm3279 = vcmp.lt.f32.partialorder %v1013, 48.0
  %vm3280 = vcmp.lt.f32.partialorder %v1014, 48.0
  %vm3281 = vcmp.lt.f32.partialorder %v1015, 48.0
  %vm3282 = vcmp.lt.f32.partialorder %v1016, 48.0
  %vm3283 = vmand %vm3267, %vm3275
  %vm3284 = vmand %vm3268, %vm3276
  %vm3285 = vmand %vm3269, %vm3277
  %vm3286 = vmand %vm3270, %vm3278
  %vm3287 = vmand %vm3271, %vm3279
  %vm3288 = vmand %vm3272, %vm3280
  %vm3289 = vmand %vm3273, %vm3281
  %vm3290 = vmand %vm3274, %vm3282
  %v3291 = vsel %vm3283, 1, 0
  %v3292 = vsel %vm3284, 1, 0
  %v3293 = vsel %vm3285, 1, 0
  %v3294 = vsel %vm3286, 1, 0
  %v3295 = vsel %vm3287, 1, 0
  %v3296 = vsel %vm3288, 1, 0
  %v3297 = vsel %vm3289, 1, 0
  %v3298 = vsel %vm3290, 1, 0
  %v3299 = vcvt.s32.f32 %v3291
  %v3300 = vcvt.s32.f32 %v3292
  %v3301 = vcvt.s32.f32 %v3293
  %v3302 = vcvt.s32.f32 %v3294
  %v3303 = vcvt.s32.f32 %v3295
  %v3304 = vcvt.s32.f32 %v3296
  %v3305 = vcvt.s32.f32 %v3297
  %v3306 = vcvt.s32.f32 %v3298
  %3315 = vrot.lane.b32.xlu0 %v3259, 126
  %v3316 = vpop.permute.xlu0 %3315
  %3317 = vrot.lane.b32.xlu0 %v3260, 126
  %v3318 = vpop.permute.xlu0 %3317
  %3319 = vrot.lane.b32.xlu0 %v3261, 126
  %v3320 = vpop.permute.xlu0 %3319
  %3321 = vrot.lane.b32.xlu0 %v3262, 126
  %v3322 = vpop.permute.xlu0 %3321
  %3323 = vrot.lane.b32.xlu0 %v3263, 126
  %v3324 = vpop.permute.xlu0 %3323
  %3325 = vrot.lane.b32.xlu0 %v3264, 126
  %v3326 = vpop.permute.xlu0 %3325
  %3327 = vrot.lane.b32.xlu0 %v3265, 126
  %v3328 = vpop.permute.xlu0 %3327
  %3329 = vrot.lane.b32.xlu0 %v3266, 126
  %v3330 = vpop.permute.xlu0 %3329
  %v3339 = vmul.f32 %v168, %v3316
  %v3340 = vmul.f32 %v169, %v3318
  %v3341 = vmul.f32 %v170, %v3320
  %v3342 = vmul.f32 %v171, %v3322
  %v3343 = vmul.f32 %v172, %v3324
  %v3344 = vmul.f32 %v173, %v3326
  %v3345 = vmul.f32 %v174, %v3328
  %v3346 = vmul.f32 %v175, %v3330
  %3355 = vrot.lane.b32.xlu0 %v3339, 127
  %v3356 = vpop.permute.xlu0 %3355
  %3357 = vrot.lane.b32.xlu0 %v3340, 127
  %v3358 = vpop.permute.xlu0 %3357
  %3359 = vrot.lane.b32.xlu0 %v3341, 127
  %v3360 = vpop.permute.xlu0 %3359
  %3361 = vrot.lane.b32.xlu0 %v3342, 127
  %v3362 = vpop.permute.xlu0 %3361
  %3363 = vrot.lane.b32.xlu0 %v3343, 127
  %v3364 = vpop.permute.xlu0 %3363
  %3365 = vrot.lane.b32.xlu0 %v3344, 127
  %v3366 = vpop.permute.xlu0 %3365
  %3367 = vrot.lane.b32.xlu0 %v3345, 127
  %v3368 = vpop.permute.xlu0 %3367
  %3369 = vrot.lane.b32.xlu0 %v3346, 127
  %v3370 = vpop.permute.xlu0 %3369
  %v3379 = vsel %vm1153, %v3356, 0.0
  %v3380 = vsel %vm1153, %v3358, 0.0
  %v3381 = vadd.f32 %v3379, %v3380
  %v3382 = vsel %vm1153, %v3360, 0.0
  %v3383 = vadd.f32 %v3381, %v3382
  %v3384 = vsel %vm1153, %v3362, 0.0
  %v3385 = vadd.f32 %v3383, %v3384
  %v3386 = vsel %vm1153, %v3364, 0.0
  %v3387 = vadd.f32 %v3385, %v3386
  %v3388 = vsel %vm1153, %v3366, 0.0
  %v3389 = vadd.f32 %v3387, %v3388
  %v3390 = vsel %vm1153, %v3368, 0.0
  %v3391 = vadd.f32 %v3389, %v3390
  %v3392 = vsel %vm1153, %v3370, 0.0
  %v3393 = vadd.f32 %v3391, %v3392
  %3394 = vadd.xlane.f32.xlu0 %v3393
  %v3395 = vpop.xlane.xlu0 %3394
  %v3396 = vrot.slane %v3395, 4
  %v3397 = vadd.f32 %v3395, %v3396
  %v3398 = vrot.slane %v3397, 2
  %v3399 = vadd.f32 %v3397, %v3398
  %v3400 = vrot.slane %v3399, 1
  %v3401 = vadd.f32 %v3399, %v3400
  %s3402 = vtos %v3401
  %p3403 = scmp.gt.f32.partialorder %s3402, 0.0
  %s3404 = scalar_select %p3403, 1, 0
  %s3405 = scvt.s32.f32 %s3404
  %3406 = vrot.lane.b32.xlu0 %v3259, 125
  %v3407 = vpop.permute.xlu0 %3406
  %3408 = vrot.lane.b32.xlu0 %v3260, 125
  %v3409 = vpop.permute.xlu0 %3408
  %3410 = vrot.lane.b32.xlu0 %v3261, 125
  %v3411 = vpop.permute.xlu0 %3410
  %3412 = vrot.lane.b32.xlu0 %v3262, 125
  %v3413 = vpop.permute.xlu0 %3412
  %3414 = vrot.lane.b32.xlu0 %v3263, 125
  %v3415 = vpop.permute.xlu0 %3414
  %3416 = vrot.lane.b32.xlu0 %v3264, 125
  %v3417 = vpop.permute.xlu0 %3416
  %3418 = vrot.lane.b32.xlu0 %v3265, 125
  %v3419 = vpop.permute.xlu0 %3418
  %3420 = vrot.lane.b32.xlu0 %v3266, 125
  %v3421 = vpop.permute.xlu0 %3420
  %v3430 = vmul.f32 %v904, %v3407
  %v3431 = vmul.f32 %v905, %v3409
  %v3432 = vmul.f32 %v906, %v3411
  %v3433 = vmul.f32 %v907, %v3413
  %v3434 = vmul.f32 %v908, %v3415
  %v3435 = vmul.f32 %v909, %v3417
  %v3436 = vmul.f32 %v910, %v3419
  %v3437 = vmul.f32 %v911, %v3421
  %v3438 = vsel %vm1153, %v3430, 0.0
  %v3439 = vsel %vm1153, %v3431, 0.0
  %v3440 = vadd.f32 %v3438, %v3439
  %v3441 = vsel %vm1153, %v3432, 0.0
  %v3442 = vadd.f32 %v3440, %v3441
  %v3443 = vsel %vm1153, %v3433, 0.0
  %v3444 = vadd.f32 %v3442, %v3443
  %v3445 = vsel %vm1153, %v3434, 0.0
  %v3446 = vadd.f32 %v3444, %v3445
  %v3447 = vsel %vm1153, %v3435, 0.0
  %v3448 = vadd.f32 %v3446, %v3447
  %v3449 = vsel %vm1153, %v3436, 0.0
  %v3450 = vadd.f32 %v3448, %v3449
  %v3451 = vsel %vm1153, %v3437, 0.0
  %v3452 = vadd.f32 %v3450, %v3451
  %3453 = vadd.xlane.f32.xlu0 %v3452
  %v3454 = vpop.xlane.xlu0 %3453
  %v3455 = vrot.slane %v3454, 4
  %v3456 = vadd.f32 %v3454, %v3455
  %v3457 = vrot.slane %v3456, 2
  %v3458 = vadd.f32 %v3456, %v3457
  %v3459 = vrot.slane %v3458, 1
  %v3460 = vadd.f32 %v3458, %v3459
  %s3461 = vtos %v3460
  %s3462 = smax.f32 %s3402, 1.0
  %v3463 = vstv %s3462
  %v3464 = vrcp.pop %v3463
  %v3465 = vmul.f32 %v3463, %v3464
  %v3466 = vsub.f32 1.0, %v3465
  %v3467 = vmul.f32 %v3464, %v3466
  %v3468 = vadd.f32 %v3464, %v3467
  %vm3469 = vweird.f32 %v3463
  %vm3470 = vweird.f32 %v3464
  %vm3471 = vmor %vm3469, %vm3470
  %v3472 = vsel %vm3471, %v3464, %v3468
  %v3473 = vand.u32 2147483647, %v3463
  %vm3474 = vcmp.eq.f32.partialorder %v3473, 8.507059e+37
  %v3475 = vand.u32 %v3463, 2147483648
  %v3476 = vor.u32 1.1754944e-38, %v3475
  %v3477 = vsel %vm3474, %v3476, %v3472
  %s3478 = vtos %v3477
  %s3479 = smul.f32 %s3461, %s3478
  %v3480 = vmul.f32 %v936, %v3316
  %v3481 = vmul.f32 %v937, %v3318
  %v3482 = vmul.f32 %v938, %v3320
  %v3483 = vmul.f32 %v939, %v3322
  %v3484 = vmul.f32 %v940, %v3324
  %v3485 = vmul.f32 %v941, %v3326
  %v3486 = vmul.f32 %v942, %v3328
  %v3487 = vmul.f32 %v943, %v3330
  %3496 = vrot.lane.b32.xlu0 %v3480, 127
  %v3497 = vpop.permute.xlu0 %3496
  %3498 = vrot.lane.b32.xlu0 %v3481, 127
  %v3499 = vpop.permute.xlu0 %3498
  %3500 = vrot.lane.b32.xlu0 %v3482, 127
  %v3501 = vpop.permute.xlu0 %3500
  %3502 = vrot.lane.b32.xlu0 %v3483, 127
  %v3503 = vpop.permute.xlu0 %3502
  %3504 = vrot.lane.b32.xlu0 %v3484, 127
  %v3505 = vpop.permute.xlu0 %3504
  %3506 = vrot.lane.b32.xlu0 %v3485, 127
  %v3507 = vpop.permute.xlu0 %3506
  %3508 = vrot.lane.b32.xlu0 %v3486, 127
  %v3509 = vpop.permute.xlu0 %3508
  %3510 = vrot.lane.b32.xlu0 %v3487, 127
  %v3511 = vpop.permute.xlu0 %3510
  %v3520 = vsel %vm1153, %v3497, 0.0
  %v3521 = vsel %vm1153, %v3499, 0.0
  %v3522 = vadd.f32 %v3520, %v3521
  %v3523 = vsel %vm1153, %v3501, 0.0
  %v3524 = vadd.f32 %v3522, %v3523
  %v3525 = vsel %vm1153, %v3503, 0.0
  %v3526 = vadd.f32 %v3524, %v3525
  %v3527 = vsel %vm1153, %v3505, 0.0
  %v3528 = vadd.f32 %v3526, %v3527
  %v3529 = vsel %vm1153, %v3507, 0.0
  %v3530 = vadd.f32 %v3528, %v3529
  %v3531 = vsel %vm1153, %v3509, 0.0
  %v3532 = vadd.f32 %v3530, %v3531
  %v3533 = vsel %vm1153, %v3511, 0.0
  %v3534 = vadd.f32 %v3532, %v3533
  %3535 = vadd.xlane.f32.xlu0 %v3534
  %v3536 = vpop.xlane.xlu0 %3535
  %v3537 = vrot.slane %v3536, 4
  %v3538 = vadd.f32 %v3536, %v3537
  %v3539 = vrot.slane %v3538, 2
  %v3540 = vadd.f32 %v3538, %v3539
  %v3541 = vrot.slane %v3540, 1
  %v3542 = vadd.f32 %v3540, %v3541
  %s3543 = vtos %v3542
  %v3544 = vstv %s3543
  %v3545 = vrsqrt.pop %v3544
  %v3546 = vmul.f32 %v3545, %v3544
  %v3547 = vmul.f32 %v3546, %v3545
  %v3548 = vmul.f32 0.5, %v3547
  %v3549 = vsub.f32 1.5, %v3548
  %v3550 = vmul.f32 %v3545, %v3549
  %v3551 = vmul.f32 %v3544, %v3550
  %vm3552 = vcmp.eq.f32.partialorder %v3544, inf
  %v3553 = vsel %vm3552, %v3544, %v3551
  %vm3554 = vcmp.eq.f32.partialorder %v3544, 0.0
  %v3555 = vand.u32 %v3544, 2147483648
  %v3556 = vsel %vm3554, %v3555, %v3553
  %s3557 = vtos %v3556
  %v3558 = vmul.f32 %v968, %v3316
  %v3559 = vmul.f32 %v969, %v3318
  %v3560 = vmul.f32 %v970, %v3320
  %v3561 = vmul.f32 %v971, %v3322
  %v3562 = vmul.f32 %v972, %v3324
  %v3563 = vmul.f32 %v973, %v3326
  %v3564 = vmul.f32 %v974, %v3328
  %v3565 = vmul.f32 %v975, %v3330
  %3574 = vrot.lane.b32.xlu0 %v3558, 127
  %v3575 = vpop.permute.xlu0 %3574
  %3576 = vrot.lane.b32.xlu0 %v3559, 127
  %v3577 = vpop.permute.xlu0 %3576
  %3578 = vrot.lane.b32.xlu0 %v3560, 127
  %v3579 = vpop.permute.xlu0 %3578
  %3580 = vrot.lane.b32.xlu0 %v3561, 127
  %v3581 = vpop.permute.xlu0 %3580
  %3582 = vrot.lane.b32.xlu0 %v3562, 127
  %v3583 = vpop.permute.xlu0 %3582
  %3584 = vrot.lane.b32.xlu0 %v3563, 127
  %v3585 = vpop.permute.xlu0 %3584
  %3586 = vrot.lane.b32.xlu0 %v3564, 127
  %v3587 = vpop.permute.xlu0 %3586
  %3588 = vrot.lane.b32.xlu0 %v3565, 127
  %v3589 = vpop.permute.xlu0 %3588
  %v3598 = vsel %vm1153, %v3575, 0.0
  %v3599 = vsel %vm1153, %v3577, 0.0
  %v3600 = vadd.f32 %v3598, %v3599
  %v3601 = vsel %vm1153, %v3579, 0.0
  %v3602 = vadd.f32 %v3600, %v3601
  %v3603 = vsel %vm1153, %v3581, 0.0
  %v3604 = vadd.f32 %v3602, %v3603
  %v3605 = vsel %vm1153, %v3583, 0.0
  %v3606 = vadd.f32 %v3604, %v3605
  %v3607 = vsel %vm1153, %v3585, 0.0
  %v3608 = vadd.f32 %v3606, %v3607
  %v3609 = vsel %vm1153, %v3587, 0.0
  %v3610 = vadd.f32 %v3608, %v3609
  %v3611 = vsel %vm1153, %v3589, 0.0
  %v3612 = vadd.f32 %v3610, %v3611
  %3613 = vadd.xlane.f32.xlu0 %v3612
  %v3614 = vpop.xlane.xlu0 %3613
  %v3615 = vrot.slane %v3614, 4
  %v3616 = vadd.f32 %v3614, %v3615
  %v3617 = vrot.slane %v3616, 2
  %v3618 = vadd.f32 %v3616, %v3617
  %v3619 = vrot.slane %v3618, 1
  %v3620 = vadd.f32 %v3618, %v3619
  %s3621 = vtos %v3620
  %v3622 = vstv %s3621
  %v3623 = vrsqrt.pop %v3622
  %v3624 = vmul.f32 %v3623, %v3622
  %v3625 = vmul.f32 %v3624, %v3623
  %v3626 = vmul.f32 0.5, %v3625
  %v3627 = vsub.f32 1.5, %v3626
  %v3628 = vmul.f32 %v3623, %v3627
  %v3629 = vmul.f32 %v3622, %v3628
  %vm3630 = vcmp.eq.f32.partialorder %v3622, inf
  %v3631 = vsel %vm3630, %v3622, %v3629
  %vm3632 = vcmp.eq.f32.partialorder %v3622, 0.0
  %v3633 = vand.u32 %v3622, 2147483648
  %v3634 = vsel %vm3632, %v3633, %v3631
  %s3635 = vtos %v3634
  %s3636 = sadd.f32 %s3557, %s3635
  %v3637 = vmul.f32 %v985, %v3299
  %v3638 = vmul.f32 %v987, %v3300
  %v3639 = vmul.f32 %v989, %v3301
  %v3640 = vmul.f32 %v991, %v3302
  %v3641 = vmul.f32 %v993, %v3303
  %v3642 = vmul.f32 %v995, %v3304
  %v3643 = vmul.f32 %v997, %v3305
  %v3644 = vmul.f32 %v999, %v3306
  %v3645 = vsel %vm1153, %v3637, 0.0
  %v3646 = vsel %vm1153, %v3638, 0.0
  %v3647 = vadd.f32 %v3645, %v3646
  %v3648 = vsel %vm1153, %v3639, 0.0
  %v3649 = vadd.f32 %v3647, %v3648
  %v3650 = vsel %vm1153, %v3640, 0.0
  %v3651 = vadd.f32 %v3649, %v3650
  %v3652 = vsel %vm1153, %v3641, 0.0
  %v3653 = vadd.f32 %v3651, %v3652
  %v3654 = vsel %vm1153, %v3642, 0.0
  %v3655 = vadd.f32 %v3653, %v3654
  %v3656 = vsel %vm1153, %v3643, 0.0
  %v3657 = vadd.f32 %v3655, %v3656
  %v3658 = vsel %vm1153, %v3644, 0.0
  %v3659 = vadd.f32 %v3657, %v3658
  %3660 = vadd.xlane.f32.xlu0 %v3659
  %v3661 = vpop.xlane.xlu0 %3660
  %v3662 = vrot.slane %v3661, 4
  %v3663 = vadd.f32 %v3661, %v3662
  %v3664 = vrot.slane %v3663, 2
  %v3665 = vadd.f32 %v3663, %v3664
  %v3666 = vrot.slane %v3665, 1
  %v3667 = vadd.f32 %v3665, %v3666
  %s3668 = vtos %v3667
  %v3669 = vstv %s3668
  %v3670 = vrsqrt.pop %v3669
  %v3671 = vmul.f32 %v3670, %v3669
  %v3672 = vmul.f32 %v3671, %v3670
  %v3673 = vmul.f32 0.5, %v3672
  %v3674 = vsub.f32 1.5, %v3673
  %v3675 = vmul.f32 %v3670, %v3674
  %v3676 = vmul.f32 %v3669, %v3675
  %vm3677 = vcmp.eq.f32.partialorder %v3669, inf
  %v3678 = vsel %vm3677, %v3669, %v3676
  %vm3679 = vcmp.eq.f32.partialorder %v3669, 0.0
  %v3680 = vand.u32 %v3669, 2147483648
  %v3681 = vsel %vm3679, %v3680, %v3678
  %s3682 = vtos %v3681
  %s3683 = sadd.f32 %s3636, %s3682
  %s3684 = smul.f32 %s3405, %s3479
  %s3685 = sadd.f32 %s3240, %s3684
  %s3686 = smul.f32 %s3405, %s3683
  %s3687 = sadd.f32 %s3242, %s3686
  %vm3688 = vcmp.eq.f32.partialorder %v168, 6.0
  %vm3689 = vcmp.eq.f32.partialorder %v169, 6.0
  %vm3690 = vcmp.eq.f32.partialorder %v170, 6.0
  %vm3691 = vcmp.eq.f32.partialorder %v171, 6.0
  %vm3692 = vcmp.eq.f32.partialorder %v172, 6.0
  %vm3693 = vcmp.eq.f32.partialorder %v173, 6.0
  %vm3694 = vcmp.eq.f32.partialorder %v174, 6.0
  %vm3695 = vcmp.eq.f32.partialorder %v175, 6.0
  %v3696 = vsel %vm3688, 1, 0
  %v3697 = vsel %vm3689, 1, 0
  %v3698 = vsel %vm3690, 1, 0
  %v3699 = vsel %vm3691, 1, 0
  %v3700 = vsel %vm3692, 1, 0
  %v3701 = vsel %vm3693, 1, 0
  %v3702 = vsel %vm3694, 1, 0
  %v3703 = vsel %vm3695, 1, 0
  %v3704 = vcvt.s32.f32 %v3696
  %v3705 = vcvt.s32.f32 %v3697
  %v3706 = vcvt.s32.f32 %v3698
  %v3707 = vcvt.s32.f32 %v3699
  %v3708 = vcvt.s32.f32 %v3700
  %v3709 = vcvt.s32.f32 %v3701
  %v3710 = vcvt.s32.f32 %v3702
  %v3711 = vcvt.s32.f32 %v3703
  %vm3712 = vcmp.ge.f32.partialorder %v1009, 48.0
  %vm3713 = vcmp.ge.f32.partialorder %v1010, 48.0
  %vm3714 = vcmp.ge.f32.partialorder %v1011, 48.0
  %vm3715 = vcmp.ge.f32.partialorder %v1012, 48.0
  %vm3716 = vcmp.ge.f32.partialorder %v1013, 48.0
  %vm3717 = vcmp.ge.f32.partialorder %v1014, 48.0
  %vm3718 = vcmp.ge.f32.partialorder %v1015, 48.0
  %vm3719 = vcmp.ge.f32.partialorder %v1016, 48.0
  %vm3720 = vcmp.lt.f32.partialorder %v1009, 56.0
  %vm3721 = vcmp.lt.f32.partialorder %v1010, 56.0
  %vm3722 = vcmp.lt.f32.partialorder %v1011, 56.0
  %vm3723 = vcmp.lt.f32.partialorder %v1012, 56.0
  %vm3724 = vcmp.lt.f32.partialorder %v1013, 56.0
  %vm3725 = vcmp.lt.f32.partialorder %v1014, 56.0
  %vm3726 = vcmp.lt.f32.partialorder %v1015, 56.0
  %vm3727 = vcmp.lt.f32.partialorder %v1016, 56.0
  %vm3728 = vmand %vm3712, %vm3720
  %vm3729 = vmand %vm3713, %vm3721
  %vm3730 = vmand %vm3714, %vm3722
  %vm3731 = vmand %vm3715, %vm3723
  %vm3732 = vmand %vm3716, %vm3724
  %vm3733 = vmand %vm3717, %vm3725
  %vm3734 = vmand %vm3718, %vm3726
  %vm3735 = vmand %vm3719, %vm3727
  %v3736 = vsel %vm3728, 1, 0
  %v3737 = vsel %vm3729, 1, 0
  %v3738 = vsel %vm3730, 1, 0
  %v3739 = vsel %vm3731, 1, 0
  %v3740 = vsel %vm3732, 1, 0
  %v3741 = vsel %vm3733, 1, 0
  %v3742 = vsel %vm3734, 1, 0
  %v3743 = vsel %vm3735, 1, 0
  %v3744 = vcvt.s32.f32 %v3736
  %v3745 = vcvt.s32.f32 %v3737
  %v3746 = vcvt.s32.f32 %v3738
  %v3747 = vcvt.s32.f32 %v3739
  %v3748 = vcvt.s32.f32 %v3740
  %v3749 = vcvt.s32.f32 %v3741
  %v3750 = vcvt.s32.f32 %v3742
  %v3751 = vcvt.s32.f32 %v3743
  %3760 = vrot.lane.b32.xlu0 %v3704, 126
  %v3761 = vpop.permute.xlu0 %3760
  %3762 = vrot.lane.b32.xlu0 %v3705, 126
  %v3763 = vpop.permute.xlu0 %3762
  %3764 = vrot.lane.b32.xlu0 %v3706, 126
  %v3765 = vpop.permute.xlu0 %3764
  %3766 = vrot.lane.b32.xlu0 %v3707, 126
  %v3767 = vpop.permute.xlu0 %3766
  %3768 = vrot.lane.b32.xlu0 %v3708, 126
  %v3769 = vpop.permute.xlu0 %3768
  %3770 = vrot.lane.b32.xlu0 %v3709, 126
  %v3771 = vpop.permute.xlu0 %3770
  %3772 = vrot.lane.b32.xlu0 %v3710, 126
  %v3773 = vpop.permute.xlu0 %3772
  %3774 = vrot.lane.b32.xlu0 %v3711, 126
  %v3775 = vpop.permute.xlu0 %3774
  %v3784 = vmul.f32 %v168, %v3761
  %v3785 = vmul.f32 %v169, %v3763
  %v3786 = vmul.f32 %v170, %v3765
  %v3787 = vmul.f32 %v171, %v3767
  %v3788 = vmul.f32 %v172, %v3769
  %v3789 = vmul.f32 %v173, %v3771
  %v3790 = vmul.f32 %v174, %v3773
  %v3791 = vmul.f32 %v175, %v3775
  %3800 = vrot.lane.b32.xlu0 %v3784, 127
  %v3801 = vpop.permute.xlu0 %3800
  %3802 = vrot.lane.b32.xlu0 %v3785, 127
  %v3803 = vpop.permute.xlu0 %3802
  %3804 = vrot.lane.b32.xlu0 %v3786, 127
  %v3805 = vpop.permute.xlu0 %3804
  %3806 = vrot.lane.b32.xlu0 %v3787, 127
  %v3807 = vpop.permute.xlu0 %3806
  %3808 = vrot.lane.b32.xlu0 %v3788, 127
  %v3809 = vpop.permute.xlu0 %3808
  %3810 = vrot.lane.b32.xlu0 %v3789, 127
  %v3811 = vpop.permute.xlu0 %3810
  %3812 = vrot.lane.b32.xlu0 %v3790, 127
  %v3813 = vpop.permute.xlu0 %3812
  %3814 = vrot.lane.b32.xlu0 %v3791, 127
  %v3815 = vpop.permute.xlu0 %3814
  %v3824 = vsel %vm1153, %v3801, 0.0
  %v3825 = vsel %vm1153, %v3803, 0.0
  %v3826 = vadd.f32 %v3824, %v3825
  %v3827 = vsel %vm1153, %v3805, 0.0
  %v3828 = vadd.f32 %v3826, %v3827
  %v3829 = vsel %vm1153, %v3807, 0.0
  %v3830 = vadd.f32 %v3828, %v3829
  %v3831 = vsel %vm1153, %v3809, 0.0
  %v3832 = vadd.f32 %v3830, %v3831
  %v3833 = vsel %vm1153, %v3811, 0.0
  %v3834 = vadd.f32 %v3832, %v3833
  %v3835 = vsel %vm1153, %v3813, 0.0
  %v3836 = vadd.f32 %v3834, %v3835
  %v3837 = vsel %vm1153, %v3815, 0.0
  %v3838 = vadd.f32 %v3836, %v3837
  %3839 = vadd.xlane.f32.xlu0 %v3838
  %v3840 = vpop.xlane.xlu0 %3839
  %v3841 = vrot.slane %v3840, 4
  %v3842 = vadd.f32 %v3840, %v3841
  %v3843 = vrot.slane %v3842, 2
  %v3844 = vadd.f32 %v3842, %v3843
  %v3845 = vrot.slane %v3844, 1
  %v3846 = vadd.f32 %v3844, %v3845
  %s3847 = vtos %v3846
  %p3848 = scmp.gt.f32.partialorder %s3847, 0.0
  %s3849 = scalar_select %p3848, 1, 0
  %s3850 = scvt.s32.f32 %s3849
  %3851 = vrot.lane.b32.xlu0 %v3704, 125
  %v3852 = vpop.permute.xlu0 %3851
  %3853 = vrot.lane.b32.xlu0 %v3705, 125
  %v3854 = vpop.permute.xlu0 %3853
  %3855 = vrot.lane.b32.xlu0 %v3706, 125
  %v3856 = vpop.permute.xlu0 %3855
  %3857 = vrot.lane.b32.xlu0 %v3707, 125
  %v3858 = vpop.permute.xlu0 %3857
  %3859 = vrot.lane.b32.xlu0 %v3708, 125
  %v3860 = vpop.permute.xlu0 %3859
  %3861 = vrot.lane.b32.xlu0 %v3709, 125
  %v3862 = vpop.permute.xlu0 %3861
  %3863 = vrot.lane.b32.xlu0 %v3710, 125
  %v3864 = vpop.permute.xlu0 %3863
  %3865 = vrot.lane.b32.xlu0 %v3711, 125
  %v3866 = vpop.permute.xlu0 %3865
  %v3875 = vmul.f32 %v904, %v3852
  %v3876 = vmul.f32 %v905, %v3854
  %v3877 = vmul.f32 %v906, %v3856
  %v3878 = vmul.f32 %v907, %v3858
  %v3879 = vmul.f32 %v908, %v3860
  %v3880 = vmul.f32 %v909, %v3862
  %v3881 = vmul.f32 %v910, %v3864
  %v3882 = vmul.f32 %v911, %v3866
  %v3883 = vsel %vm1153, %v3875, 0.0
  %v3884 = vsel %vm1153, %v3876, 0.0
  %v3885 = vadd.f32 %v3883, %v3884
  %v3886 = vsel %vm1153, %v3877, 0.0
  %v3887 = vadd.f32 %v3885, %v3886
  %v3888 = vsel %vm1153, %v3878, 0.0
  %v3889 = vadd.f32 %v3887, %v3888
  %v3890 = vsel %vm1153, %v3879, 0.0
  %v3891 = vadd.f32 %v3889, %v3890
  %v3892 = vsel %vm1153, %v3880, 0.0
  %v3893 = vadd.f32 %v3891, %v3892
  %v3894 = vsel %vm1153, %v3881, 0.0
  %v3895 = vadd.f32 %v3893, %v3894
  %v3896 = vsel %vm1153, %v3882, 0.0
  %v3897 = vadd.f32 %v3895, %v3896
  %3898 = vadd.xlane.f32.xlu0 %v3897
  %v3899 = vpop.xlane.xlu0 %3898
  %v3900 = vrot.slane %v3899, 4
  %v3901 = vadd.f32 %v3899, %v3900
  %v3902 = vrot.slane %v3901, 2
  %v3903 = vadd.f32 %v3901, %v3902
  %v3904 = vrot.slane %v3903, 1
  %v3905 = vadd.f32 %v3903, %v3904
  %s3906 = vtos %v3905
  %s3907 = smax.f32 %s3847, 1.0
  %v3908 = vstv %s3907
  %v3909 = vrcp.pop %v3908
  %v3910 = vmul.f32 %v3908, %v3909
  %v3911 = vsub.f32 1.0, %v3910
  %v3912 = vmul.f32 %v3909, %v3911
  %v3913 = vadd.f32 %v3909, %v3912
  %vm3914 = vweird.f32 %v3908
  %vm3915 = vweird.f32 %v3909
  %vm3916 = vmor %vm3914, %vm3915
  %v3917 = vsel %vm3916, %v3909, %v3913
  %v3918 = vand.u32 2147483647, %v3908
  %vm3919 = vcmp.eq.f32.partialorder %v3918, 8.507059e+37
  %v3920 = vand.u32 %v3908, 2147483648
  %v3921 = vor.u32 1.1754944e-38, %v3920
  %v3922 = vsel %vm3919, %v3921, %v3917
  %s3923 = vtos %v3922
  %s3924 = smul.f32 %s3906, %s3923
  %v3925 = vmul.f32 %v936, %v3761
  %v3926 = vmul.f32 %v937, %v3763
  %v3927 = vmul.f32 %v938, %v3765
  %v3928 = vmul.f32 %v939, %v3767
  %v3929 = vmul.f32 %v940, %v3769
  %v3930 = vmul.f32 %v941, %v3771
  %v3931 = vmul.f32 %v942, %v3773
  %v3932 = vmul.f32 %v943, %v3775
  %3941 = vrot.lane.b32.xlu0 %v3925, 127
  %v3942 = vpop.permute.xlu0 %3941
  %3943 = vrot.lane.b32.xlu0 %v3926, 127
  %v3944 = vpop.permute.xlu0 %3943
  %3945 = vrot.lane.b32.xlu0 %v3927, 127
  %v3946 = vpop.permute.xlu0 %3945
  %3947 = vrot.lane.b32.xlu0 %v3928, 127
  %v3948 = vpop.permute.xlu0 %3947
  %3949 = vrot.lane.b32.xlu0 %v3929, 127
  %v3950 = vpop.permute.xlu0 %3949
  %3951 = vrot.lane.b32.xlu0 %v3930, 127
  %v3952 = vpop.permute.xlu0 %3951
  %3953 = vrot.lane.b32.xlu0 %v3931, 127
  %v3954 = vpop.permute.xlu0 %3953
  %3955 = vrot.lane.b32.xlu0 %v3932, 127
  %v3956 = vpop.permute.xlu0 %3955
  %v3965 = vsel %vm1153, %v3942, 0.0
  %v3966 = vsel %vm1153, %v3944, 0.0
  %v3967 = vadd.f32 %v3965, %v3966
  %v3968 = vsel %vm1153, %v3946, 0.0
  %v3969 = vadd.f32 %v3967, %v3968
  %v3970 = vsel %vm1153, %v3948, 0.0
  %v3971 = vadd.f32 %v3969, %v3970
  %v3972 = vsel %vm1153, %v3950, 0.0
  %v3973 = vadd.f32 %v3971, %v3972
  %v3974 = vsel %vm1153, %v3952, 0.0
  %v3975 = vadd.f32 %v3973, %v3974
  %v3976 = vsel %vm1153, %v3954, 0.0
  %v3977 = vadd.f32 %v3975, %v3976
  %v3978 = vsel %vm1153, %v3956, 0.0
  %v3979 = vadd.f32 %v3977, %v3978
  %3980 = vadd.xlane.f32.xlu0 %v3979
  %v3981 = vpop.xlane.xlu0 %3980
  %v3982 = vrot.slane %v3981, 4
  %v3983 = vadd.f32 %v3981, %v3982
  %v3984 = vrot.slane %v3983, 2
  %v3985 = vadd.f32 %v3983, %v3984
  %v3986 = vrot.slane %v3985, 1
  %v3987 = vadd.f32 %v3985, %v3986
  %s3988 = vtos %v3987
  %v3989 = vstv %s3988
  %v3990 = vrsqrt.pop %v3989
  %v3991 = vmul.f32 %v3990, %v3989
  %v3992 = vmul.f32 %v3991, %v3990
  %v3993 = vmul.f32 0.5, %v3992
  %v3994 = vsub.f32 1.5, %v3993
  %v3995 = vmul.f32 %v3990, %v3994
  %v3996 = vmul.f32 %v3989, %v3995
  %vm3997 = vcmp.eq.f32.partialorder %v3989, inf
  %v3998 = vsel %vm3997, %v3989, %v3996
  %vm3999 = vcmp.eq.f32.partialorder %v3989, 0.0
  %v4000 = vand.u32 %v3989, 2147483648
  %v4001 = vsel %vm3999, %v4000, %v3998
  %s4002 = vtos %v4001
  %v4003 = vmul.f32 %v968, %v3761
  %v4004 = vmul.f32 %v969, %v3763
  %v4005 = vmul.f32 %v970, %v3765
  %v4006 = vmul.f32 %v971, %v3767
  %v4007 = vmul.f32 %v972, %v3769
  %v4008 = vmul.f32 %v973, %v3771
  %v4009 = vmul.f32 %v974, %v3773
  %v4010 = vmul.f32 %v975, %v3775
  %4019 = vrot.lane.b32.xlu0 %v4003, 127
  %v4020 = vpop.permute.xlu0 %4019
  %4021 = vrot.lane.b32.xlu0 %v4004, 127
  %v4022 = vpop.permute.xlu0 %4021
  %4023 = vrot.lane.b32.xlu0 %v4005, 127
  %v4024 = vpop.permute.xlu0 %4023
  %4025 = vrot.lane.b32.xlu0 %v4006, 127
  %v4026 = vpop.permute.xlu0 %4025
  %4027 = vrot.lane.b32.xlu0 %v4007, 127
  %v4028 = vpop.permute.xlu0 %4027
  %4029 = vrot.lane.b32.xlu0 %v4008, 127
  %v4030 = vpop.permute.xlu0 %4029
  %4031 = vrot.lane.b32.xlu0 %v4009, 127
  %v4032 = vpop.permute.xlu0 %4031
  %4033 = vrot.lane.b32.xlu0 %v4010, 127
  %v4034 = vpop.permute.xlu0 %4033
  %v4043 = vsel %vm1153, %v4020, 0.0
  %v4044 = vsel %vm1153, %v4022, 0.0
  %v4045 = vadd.f32 %v4043, %v4044
  %v4046 = vsel %vm1153, %v4024, 0.0
  %v4047 = vadd.f32 %v4045, %v4046
  %v4048 = vsel %vm1153, %v4026, 0.0
  %v4049 = vadd.f32 %v4047, %v4048
  %v4050 = vsel %vm1153, %v4028, 0.0
  %v4051 = vadd.f32 %v4049, %v4050
  %v4052 = vsel %vm1153, %v4030, 0.0
  %v4053 = vadd.f32 %v4051, %v4052
  %v4054 = vsel %vm1153, %v4032, 0.0
  %v4055 = vadd.f32 %v4053, %v4054
  %v4056 = vsel %vm1153, %v4034, 0.0
  %v4057 = vadd.f32 %v4055, %v4056
  %4058 = vadd.xlane.f32.xlu0 %v4057
  %v4059 = vpop.xlane.xlu0 %4058
  %v4060 = vrot.slane %v4059, 4
  %v4061 = vadd.f32 %v4059, %v4060
  %v4062 = vrot.slane %v4061, 2
  %v4063 = vadd.f32 %v4061, %v4062
  %v4064 = vrot.slane %v4063, 1
  %v4065 = vadd.f32 %v4063, %v4064
  %s4066 = vtos %v4065
  %v4067 = vstv %s4066
  %v4068 = vrsqrt.pop %v4067
  %v4069 = vmul.f32 %v4068, %v4067
  %v4070 = vmul.f32 %v4069, %v4068
  %v4071 = vmul.f32 0.5, %v4070
  %v4072 = vsub.f32 1.5, %v4071
  %v4073 = vmul.f32 %v4068, %v4072
  %v4074 = vmul.f32 %v4067, %v4073
  %vm4075 = vcmp.eq.f32.partialorder %v4067, inf
  %v4076 = vsel %vm4075, %v4067, %v4074
  %vm4077 = vcmp.eq.f32.partialorder %v4067, 0.0
  %v4078 = vand.u32 %v4067, 2147483648
  %v4079 = vsel %vm4077, %v4078, %v4076
  %s4080 = vtos %v4079
  %s4081 = sadd.f32 %s4002, %s4080
  %v4082 = vmul.f32 %v985, %v3744
  %v4083 = vmul.f32 %v987, %v3745
  %v4084 = vmul.f32 %v989, %v3746
  %v4085 = vmul.f32 %v991, %v3747
  %v4086 = vmul.f32 %v993, %v3748
  %v4087 = vmul.f32 %v995, %v3749
  %v4088 = vmul.f32 %v997, %v3750
  %v4089 = vmul.f32 %v999, %v3751
  %v4090 = vsel %vm1153, %v4082, 0.0
  %v4091 = vsel %vm1153, %v4083, 0.0
  %v4092 = vadd.f32 %v4090, %v4091
  %v4093 = vsel %vm1153, %v4084, 0.0
  %v4094 = vadd.f32 %v4092, %v4093
  %v4095 = vsel %vm1153, %v4085, 0.0
  %v4096 = vadd.f32 %v4094, %v4095
  %v4097 = vsel %vm1153, %v4086, 0.0
  %v4098 = vadd.f32 %v4096, %v4097
  %v4099 = vsel %vm1153, %v4087, 0.0
  %v4100 = vadd.f32 %v4098, %v4099
  %v4101 = vsel %vm1153, %v4088, 0.0
  %v4102 = vadd.f32 %v4100, %v4101
  %v4103 = vsel %vm1153, %v4089, 0.0
  %v4104 = vadd.f32 %v4102, %v4103
  %4105 = vadd.xlane.f32.xlu0 %v4104
  %v4106 = vpop.xlane.xlu0 %4105
  %v4107 = vrot.slane %v4106, 4
  %v4108 = vadd.f32 %v4106, %v4107
  %v4109 = vrot.slane %v4108, 2
  %v4110 = vadd.f32 %v4108, %v4109
  %v4111 = vrot.slane %v4110, 1
  %v4112 = vadd.f32 %v4110, %v4111
  %s4113 = vtos %v4112
  %v4114 = vstv %s4113
  %v4115 = vrsqrt.pop %v4114
  %v4116 = vmul.f32 %v4115, %v4114
  %v4117 = vmul.f32 %v4116, %v4115
  %v4118 = vmul.f32 0.5, %v4117
  %v4119 = vsub.f32 1.5, %v4118
  %v4120 = vmul.f32 %v4115, %v4119
  %v4121 = vmul.f32 %v4114, %v4120
  %vm4122 = vcmp.eq.f32.partialorder %v4114, inf
  %v4123 = vsel %vm4122, %v4114, %v4121
  %vm4124 = vcmp.eq.f32.partialorder %v4114, 0.0
  %v4125 = vand.u32 %v4114, 2147483648
  %v4126 = vsel %vm4124, %v4125, %v4123
  %s4127 = vtos %v4126
  %s4128 = sadd.f32 %s4081, %s4127
  %s4129 = smul.f32 %s3850, %s3924
  %s4130 = sadd.f32 %s3685, %s4129
  %s4131 = smul.f32 %s3850, %s4128
  %s4132 = sadd.f32 %s3687, %s4131
  %vm4133 = vcmp.eq.f32.partialorder %v168, 7.0
  %vm4134 = vcmp.eq.f32.partialorder %v169, 7.0
  %vm4135 = vcmp.eq.f32.partialorder %v170, 7.0
  %vm4136 = vcmp.eq.f32.partialorder %v171, 7.0
  %vm4137 = vcmp.eq.f32.partialorder %v172, 7.0
  %vm4138 = vcmp.eq.f32.partialorder %v173, 7.0
  %vm4139 = vcmp.eq.f32.partialorder %v174, 7.0
  %vm4140 = vcmp.eq.f32.partialorder %v175, 7.0
  %v4141 = vsel %vm4133, 1, 0
  %v4142 = vsel %vm4134, 1, 0
  %v4143 = vsel %vm4135, 1, 0
  %v4144 = vsel %vm4136, 1, 0
  %v4145 = vsel %vm4137, 1, 0
  %v4146 = vsel %vm4138, 1, 0
  %v4147 = vsel %vm4139, 1, 0
  %v4148 = vsel %vm4140, 1, 0
  %v4149 = vcvt.s32.f32 %v4141
  %v4150 = vcvt.s32.f32 %v4142
  %v4151 = vcvt.s32.f32 %v4143
  %v4152 = vcvt.s32.f32 %v4144
  %v4153 = vcvt.s32.f32 %v4145
  %v4154 = vcvt.s32.f32 %v4146
  %v4155 = vcvt.s32.f32 %v4147
  %v4156 = vcvt.s32.f32 %v4148
  %vm4157 = vcmp.ge.f32.partialorder %v1009, 56.0
  %vm4158 = vcmp.ge.f32.partialorder %v1010, 56.0
  %vm4159 = vcmp.ge.f32.partialorder %v1011, 56.0
  %vm4160 = vcmp.ge.f32.partialorder %v1012, 56.0
  %vm4161 = vcmp.ge.f32.partialorder %v1013, 56.0
  %vm4162 = vcmp.ge.f32.partialorder %v1014, 56.0
  %vm4163 = vcmp.ge.f32.partialorder %v1015, 56.0
  %vm4164 = vcmp.ge.f32.partialorder %v1016, 56.0
  %vm4165 = vcmp.lt.f32.partialorder %v1009, 64.0
  %vm4166 = vcmp.lt.f32.partialorder %v1010, 64.0
  %vm4167 = vcmp.lt.f32.partialorder %v1011, 64.0
  %vm4168 = vcmp.lt.f32.partialorder %v1012, 64.0
  %vm4169 = vcmp.lt.f32.partialorder %v1013, 64.0
  %vm4170 = vcmp.lt.f32.partialorder %v1014, 64.0
  %vm4171 = vcmp.lt.f32.partialorder %v1015, 64.0
  %vm4172 = vcmp.lt.f32.partialorder %v1016, 64.0
  %vm4173 = vmand %vm4157, %vm4165
  %vm4174 = vmand %vm4158, %vm4166
  %vm4175 = vmand %vm4159, %vm4167
  %vm4176 = vmand %vm4160, %vm4168
  %vm4177 = vmand %vm4161, %vm4169
  %vm4178 = vmand %vm4162, %vm4170
  %vm4179 = vmand %vm4163, %vm4171
  %vm4180 = vmand %vm4164, %vm4172
  %v4181 = vsel %vm4173, 1, 0
  %v4182 = vsel %vm4174, 1, 0
  %v4183 = vsel %vm4175, 1, 0
  %v4184 = vsel %vm4176, 1, 0
  %v4185 = vsel %vm4177, 1, 0
  %v4186 = vsel %vm4178, 1, 0
  %v4187 = vsel %vm4179, 1, 0
  %v4188 = vsel %vm4180, 1, 0
  %v4189 = vcvt.s32.f32 %v4181
  %v4190 = vcvt.s32.f32 %v4182
  %v4191 = vcvt.s32.f32 %v4183
  %v4192 = vcvt.s32.f32 %v4184
  %v4193 = vcvt.s32.f32 %v4185
  %v4194 = vcvt.s32.f32 %v4186
  %v4195 = vcvt.s32.f32 %v4187
  %v4196 = vcvt.s32.f32 %v4188
  %4205 = vrot.lane.b32.xlu0 %v4149, 126
  %v4206 = vpop.permute.xlu0 %4205
  %4207 = vrot.lane.b32.xlu0 %v4150, 126
  %v4208 = vpop.permute.xlu0 %4207
  %4209 = vrot.lane.b32.xlu0 %v4151, 126
  %v4210 = vpop.permute.xlu0 %4209
  %4211 = vrot.lane.b32.xlu0 %v4152, 126
  %v4212 = vpop.permute.xlu0 %4211
  %4213 = vrot.lane.b32.xlu0 %v4153, 126
  %v4214 = vpop.permute.xlu0 %4213
  %4215 = vrot.lane.b32.xlu0 %v4154, 126
  %v4216 = vpop.permute.xlu0 %4215
  %4217 = vrot.lane.b32.xlu0 %v4155, 126
  %v4218 = vpop.permute.xlu0 %4217
  %4219 = vrot.lane.b32.xlu0 %v4156, 126
  %v4220 = vpop.permute.xlu0 %4219
  %v4229 = vmul.f32 %v168, %v4206
  %v4230 = vmul.f32 %v169, %v4208
  %v4231 = vmul.f32 %v170, %v4210
  %v4232 = vmul.f32 %v171, %v4212
  %v4233 = vmul.f32 %v172, %v4214
  %v4234 = vmul.f32 %v173, %v4216
  %v4235 = vmul.f32 %v174, %v4218
  %v4236 = vmul.f32 %v175, %v4220
  %4245 = vrot.lane.b32.xlu0 %v4229, 127
  %v4246 = vpop.permute.xlu0 %4245
  %4247 = vrot.lane.b32.xlu0 %v4230, 127
  %v4248 = vpop.permute.xlu0 %4247
  %4249 = vrot.lane.b32.xlu0 %v4231, 127
  %v4250 = vpop.permute.xlu0 %4249
  %4251 = vrot.lane.b32.xlu0 %v4232, 127
  %v4252 = vpop.permute.xlu0 %4251
  %4253 = vrot.lane.b32.xlu0 %v4233, 127
  %v4254 = vpop.permute.xlu0 %4253
  %4255 = vrot.lane.b32.xlu0 %v4234, 127
  %v4256 = vpop.permute.xlu0 %4255
  %4257 = vrot.lane.b32.xlu0 %v4235, 127
  %v4258 = vpop.permute.xlu0 %4257
  %4259 = vrot.lane.b32.xlu0 %v4236, 127
  %v4260 = vpop.permute.xlu0 %4259
  %v4269 = vsel %vm1153, %v4246, 0.0
  %v4270 = vsel %vm1153, %v4248, 0.0
  %v4271 = vadd.f32 %v4269, %v4270
  %v4272 = vsel %vm1153, %v4250, 0.0
  %v4273 = vadd.f32 %v4271, %v4272
  %v4274 = vsel %vm1153, %v4252, 0.0
  %v4275 = vadd.f32 %v4273, %v4274
  %v4276 = vsel %vm1153, %v4254, 0.0
  %v4277 = vadd.f32 %v4275, %v4276
  %v4278 = vsel %vm1153, %v4256, 0.0
  %v4279 = vadd.f32 %v4277, %v4278
  %v4280 = vsel %vm1153, %v4258, 0.0
  %v4281 = vadd.f32 %v4279, %v4280
  %v4282 = vsel %vm1153, %v4260, 0.0
  %v4283 = vadd.f32 %v4281, %v4282
  %4284 = vadd.xlane.f32.xlu0 %v4283
  %v4285 = vpop.xlane.xlu0 %4284
  %v4286 = vrot.slane %v4285, 4
  %v4287 = vadd.f32 %v4285, %v4286
  %v4288 = vrot.slane %v4287, 2
  %v4289 = vadd.f32 %v4287, %v4288
  %v4290 = vrot.slane %v4289, 1
  %v4291 = vadd.f32 %v4289, %v4290
  %s4292 = vtos %v4291
  %p4293 = scmp.gt.f32.partialorder %s4292, 0.0
  %s4294 = scalar_select %p4293, 1, 0
  %s4295 = scvt.s32.f32 %s4294
  %4296 = vrot.lane.b32.xlu0 %v4149, 125
  %v4297 = vpop.permute.xlu0 %4296
  %4298 = vrot.lane.b32.xlu0 %v4150, 125
  %v4299 = vpop.permute.xlu0 %4298
  %4300 = vrot.lane.b32.xlu0 %v4151, 125
  %v4301 = vpop.permute.xlu0 %4300
  %4302 = vrot.lane.b32.xlu0 %v4152, 125
  %v4303 = vpop.permute.xlu0 %4302
  %4304 = vrot.lane.b32.xlu0 %v4153, 125
  %v4305 = vpop.permute.xlu0 %4304
  %4306 = vrot.lane.b32.xlu0 %v4154, 125
  %v4307 = vpop.permute.xlu0 %4306
  %4308 = vrot.lane.b32.xlu0 %v4155, 125
  %v4309 = vpop.permute.xlu0 %4308
  %4310 = vrot.lane.b32.xlu0 %v4156, 125
  %v4311 = vpop.permute.xlu0 %4310
  %v4320 = vmul.f32 %v904, %v4297
  %v4321 = vmul.f32 %v905, %v4299
  %v4322 = vmul.f32 %v906, %v4301
  %v4323 = vmul.f32 %v907, %v4303
  %v4324 = vmul.f32 %v908, %v4305
  %v4325 = vmul.f32 %v909, %v4307
  %v4326 = vmul.f32 %v910, %v4309
  %v4327 = vmul.f32 %v911, %v4311
  %v4328 = vsel %vm1153, %v4320, 0.0
  %v4329 = vsel %vm1153, %v4321, 0.0
  %v4330 = vadd.f32 %v4328, %v4329
  %v4331 = vsel %vm1153, %v4322, 0.0
  %v4332 = vadd.f32 %v4330, %v4331
  %v4333 = vsel %vm1153, %v4323, 0.0
  %v4334 = vadd.f32 %v4332, %v4333
  %v4335 = vsel %vm1153, %v4324, 0.0
  %v4336 = vadd.f32 %v4334, %v4335
  %v4337 = vsel %vm1153, %v4325, 0.0
  %v4338 = vadd.f32 %v4336, %v4337
  %v4339 = vsel %vm1153, %v4326, 0.0
  %v4340 = vadd.f32 %v4338, %v4339
  %v4341 = vsel %vm1153, %v4327, 0.0
  %v4342 = vadd.f32 %v4340, %v4341
  %4343 = vadd.xlane.f32.xlu0 %v4342
  %v4344 = vpop.xlane.xlu0 %4343
  %v4345 = vrot.slane %v4344, 4
  %v4346 = vadd.f32 %v4344, %v4345
  %v4347 = vrot.slane %v4346, 2
  %v4348 = vadd.f32 %v4346, %v4347
  %v4349 = vrot.slane %v4348, 1
  %v4350 = vadd.f32 %v4348, %v4349
  %s4351 = vtos %v4350
  %s4352 = smax.f32 %s4292, 1.0
  %v4353 = vstv %s4352
  %v4354 = vrcp.pop %v4353
  %v4355 = vmul.f32 %v4353, %v4354
  %v4356 = vsub.f32 1.0, %v4355
  %v4357 = vmul.f32 %v4354, %v4356
  %v4358 = vadd.f32 %v4354, %v4357
  %vm4359 = vweird.f32 %v4353
  %vm4360 = vweird.f32 %v4354
  %vm4361 = vmor %vm4359, %vm4360
  %v4362 = vsel %vm4361, %v4354, %v4358
  %v4363 = vand.u32 2147483647, %v4353
  %vm4364 = vcmp.eq.f32.partialorder %v4363, 8.507059e+37
  %v4365 = vand.u32 %v4353, 2147483648
  %v4366 = vor.u32 1.1754944e-38, %v4365
  %v4367 = vsel %vm4364, %v4366, %v4362
  %s4368 = vtos %v4367
  %s4369 = smul.f32 %s4351, %s4368
  %v4370 = vmul.f32 %v936, %v4206
  %v4371 = vmul.f32 %v937, %v4208
  %v4372 = vmul.f32 %v938, %v4210
  %v4373 = vmul.f32 %v939, %v4212
  %v4374 = vmul.f32 %v940, %v4214
  %v4375 = vmul.f32 %v941, %v4216
  %v4376 = vmul.f32 %v942, %v4218
  %v4377 = vmul.f32 %v943, %v4220
  %4386 = vrot.lane.b32.xlu0 %v4370, 127
  %v4387 = vpop.permute.xlu0 %4386
  %4388 = vrot.lane.b32.xlu0 %v4371, 127
  %v4389 = vpop.permute.xlu0 %4388
  %4390 = vrot.lane.b32.xlu0 %v4372, 127
  %v4391 = vpop.permute.xlu0 %4390
  %4392 = vrot.lane.b32.xlu0 %v4373, 127
  %v4393 = vpop.permute.xlu0 %4392
  %4394 = vrot.lane.b32.xlu0 %v4374, 127
  %v4395 = vpop.permute.xlu0 %4394
  %4396 = vrot.lane.b32.xlu0 %v4375, 127
  %v4397 = vpop.permute.xlu0 %4396
  %4398 = vrot.lane.b32.xlu0 %v4376, 127
  %v4399 = vpop.permute.xlu0 %4398
  %4400 = vrot.lane.b32.xlu0 %v4377, 127
  %v4401 = vpop.permute.xlu0 %4400
  %v4410 = vsel %vm1153, %v4387, 0.0
  %v4411 = vsel %vm1153, %v4389, 0.0
  %v4412 = vadd.f32 %v4410, %v4411
  %v4413 = vsel %vm1153, %v4391, 0.0
  %v4414 = vadd.f32 %v4412, %v4413
  %v4415 = vsel %vm1153, %v4393, 0.0
  %v4416 = vadd.f32 %v4414, %v4415
  %v4417 = vsel %vm1153, %v4395, 0.0
  %v4418 = vadd.f32 %v4416, %v4417
  %v4419 = vsel %vm1153, %v4397, 0.0
  %v4420 = vadd.f32 %v4418, %v4419
  %v4421 = vsel %vm1153, %v4399, 0.0
  %v4422 = vadd.f32 %v4420, %v4421
  %v4423 = vsel %vm1153, %v4401, 0.0
  %v4424 = vadd.f32 %v4422, %v4423
  %4425 = vadd.xlane.f32.xlu0 %v4424
  %v4426 = vpop.xlane.xlu0 %4425
  %v4427 = vrot.slane %v4426, 4
  %v4428 = vadd.f32 %v4426, %v4427
  %v4429 = vrot.slane %v4428, 2
  %v4430 = vadd.f32 %v4428, %v4429
  %v4431 = vrot.slane %v4430, 1
  %v4432 = vadd.f32 %v4430, %v4431
  %s4433 = vtos %v4432
  %v4434 = vstv %s4433
  %v4435 = vrsqrt.pop %v4434
  %v4436 = vmul.f32 %v4435, %v4434
  %v4437 = vmul.f32 %v4436, %v4435
  %v4438 = vmul.f32 0.5, %v4437
  %v4439 = vsub.f32 1.5, %v4438
  %v4440 = vmul.f32 %v4435, %v4439
  %v4441 = vmul.f32 %v4434, %v4440
  %vm4442 = vcmp.eq.f32.partialorder %v4434, inf
  %v4443 = vsel %vm4442, %v4434, %v4441
  %vm4444 = vcmp.eq.f32.partialorder %v4434, 0.0
  %v4445 = vand.u32 %v4434, 2147483648
  %v4446 = vsel %vm4444, %v4445, %v4443
  %s4447 = vtos %v4446
  %v4448 = vmul.f32 %v968, %v4206
  %v4449 = vmul.f32 %v969, %v4208
  %v4450 = vmul.f32 %v970, %v4210
  %v4451 = vmul.f32 %v971, %v4212
  %v4452 = vmul.f32 %v972, %v4214
  %v4453 = vmul.f32 %v973, %v4216
  %v4454 = vmul.f32 %v974, %v4218
  %v4455 = vmul.f32 %v975, %v4220
  %4464 = vrot.lane.b32.xlu0 %v4448, 127
  %v4465 = vpop.permute.xlu0 %4464
  %4466 = vrot.lane.b32.xlu0 %v4449, 127
  %v4467 = vpop.permute.xlu0 %4466
  %4468 = vrot.lane.b32.xlu0 %v4450, 127
  %v4469 = vpop.permute.xlu0 %4468
  %4470 = vrot.lane.b32.xlu0 %v4451, 127
  %v4471 = vpop.permute.xlu0 %4470
  %4472 = vrot.lane.b32.xlu0 %v4452, 127
  %v4473 = vpop.permute.xlu0 %4472
  %4474 = vrot.lane.b32.xlu0 %v4453, 127
  %v4475 = vpop.permute.xlu0 %4474
  %4476 = vrot.lane.b32.xlu0 %v4454, 127
  %v4477 = vpop.permute.xlu0 %4476
  %4478 = vrot.lane.b32.xlu0 %v4455, 127
  %v4479 = vpop.permute.xlu0 %4478
  %v4488 = vsel %vm1153, %v4465, 0.0
  %v4489 = vsel %vm1153, %v4467, 0.0
  %v4490 = vadd.f32 %v4488, %v4489
  %v4491 = vsel %vm1153, %v4469, 0.0
  %v4492 = vadd.f32 %v4490, %v4491
  %v4493 = vsel %vm1153, %v4471, 0.0
  %v4494 = vadd.f32 %v4492, %v4493
  %v4495 = vsel %vm1153, %v4473, 0.0
  %v4496 = vadd.f32 %v4494, %v4495
  %v4497 = vsel %vm1153, %v4475, 0.0
  %v4498 = vadd.f32 %v4496, %v4497
  %v4499 = vsel %vm1153, %v4477, 0.0
  %v4500 = vadd.f32 %v4498, %v4499
  %v4501 = vsel %vm1153, %v4479, 0.0
  %v4502 = vadd.f32 %v4500, %v4501
  %4503 = vadd.xlane.f32.xlu0 %v4502
  %v4504 = vpop.xlane.xlu0 %4503
  %v4505 = vrot.slane %v4504, 4
  %v4506 = vadd.f32 %v4504, %v4505
  %v4507 = vrot.slane %v4506, 2
  %v4508 = vadd.f32 %v4506, %v4507
  %v4509 = vrot.slane %v4508, 1
  %v4510 = vadd.f32 %v4508, %v4509
  %s4511 = vtos %v4510
  %v4512 = vstv %s4511
  %v4513 = vrsqrt.pop %v4512
  %v4514 = vmul.f32 %v4513, %v4512
  %v4515 = vmul.f32 %v4514, %v4513
  %v4516 = vmul.f32 0.5, %v4515
  %v4517 = vsub.f32 1.5, %v4516
  %v4518 = vmul.f32 %v4513, %v4517
  %v4519 = vmul.f32 %v4512, %v4518
  %vm4520 = vcmp.eq.f32.partialorder %v4512, inf
  %v4521 = vsel %vm4520, %v4512, %v4519
  %vm4522 = vcmp.eq.f32.partialorder %v4512, 0.0
  %v4523 = vand.u32 %v4512, 2147483648
  %v4524 = vsel %vm4522, %v4523, %v4521
  %s4525 = vtos %v4524
  %s4526 = sadd.f32 %s4447, %s4525
  %v4527 = vmul.f32 %v985, %v4189
  %v4528 = vmul.f32 %v987, %v4190
  %v4529 = vmul.f32 %v989, %v4191
  %v4530 = vmul.f32 %v991, %v4192
  %v4531 = vmul.f32 %v993, %v4193
  %v4532 = vmul.f32 %v995, %v4194
  %v4533 = vmul.f32 %v997, %v4195
  %v4534 = vmul.f32 %v999, %v4196
  %v4535 = vsel %vm1153, %v4527, 0.0
  %v4536 = vsel %vm1153, %v4528, 0.0
  %v4537 = vadd.f32 %v4535, %v4536
  %v4538 = vsel %vm1153, %v4529, 0.0
  %v4539 = vadd.f32 %v4537, %v4538
  %v4540 = vsel %vm1153, %v4530, 0.0
  %v4541 = vadd.f32 %v4539, %v4540
  %v4542 = vsel %vm1153, %v4531, 0.0
  %v4543 = vadd.f32 %v4541, %v4542
  %v4544 = vsel %vm1153, %v4532, 0.0
  %v4545 = vadd.f32 %v4543, %v4544
  %v4546 = vsel %vm1153, %v4533, 0.0
  %v4547 = vadd.f32 %v4545, %v4546
  %v4548 = vsel %vm1153, %v4534, 0.0
  %v4549 = vadd.f32 %v4547, %v4548
  %4550 = vadd.xlane.f32.xlu0 %v4549
  %v4551 = vpop.xlane.xlu0 %4550
  %v4552 = vrot.slane %v4551, 4
  %v4553 = vadd.f32 %v4551, %v4552
  %v4554 = vrot.slane %v4553, 2
  %v4555 = vadd.f32 %v4553, %v4554
  %v4556 = vrot.slane %v4555, 1
  %v4557 = vadd.f32 %v4555, %v4556
  %s4558 = vtos %v4557
  %v4559 = vstv %s4558
  %v4560 = vrsqrt.pop %v4559
  %v4561 = vmul.f32 %v4560, %v4559
  %v4562 = vmul.f32 %v4561, %v4560
  %v4563 = vmul.f32 0.5, %v4562
  %v4564 = vsub.f32 1.5, %v4563
  %v4565 = vmul.f32 %v4560, %v4564
  %v4566 = vmul.f32 %v4559, %v4565
  %vm4567 = vcmp.eq.f32.partialorder %v4559, inf
  %v4568 = vsel %vm4567, %v4559, %v4566
  %vm4569 = vcmp.eq.f32.partialorder %v4559, 0.0
  %v4570 = vand.u32 %v4559, 2147483648
  %v4571 = vsel %vm4569, %v4570, %v4568
  %s4572 = vtos %v4571
  %s4573 = sadd.f32 %s4526, %s4572
  %s4574 = smul.f32 %s4295, %s4369
  %s4575 = sadd.f32 %s4130, %s4574
  %s4576 = smul.f32 %s4295, %s4573
  %s4577 = sadd.f32 %s4132, %s4576
  %vm4578 = vcmp.eq.s32.totalorder %v1001, 0
  %vm4579 = vcmp.eq.s32.totalorder %v425, 0
  %vm4580 = vmand %vm4578, %vm4579
  %vm4581 = vcmp.eq.s32.totalorder %v425, 1
  %vm4582 = vmand %vm4578, %vm4581
  %v4583 = vstv %s4577
  %v4584 = vsel %vm4582, %v4583, 0.0
  %v4585 = vstv %s4575
  %v4586 = vsel %vm4580, %v4585, %v4584
  %4587 = vst [vmem:[%s11] sm:$0xff] %v4586
  // Predicated region
  $region46: #{compute_loss.3} parent=0 // pred_check
    _
  $region47: #{compute_loss.3} parent=0 // pred_check_branch
    %4589 = sbr.rel (0) target = $region49
  $region48: #{compute_loss.3} parent=0 // pred_region
    _
  $region49: #{compute_loss.3} parent=0 // pred_fallthru
    _
  // Predicated region
  $region50: #{compute_loss.3} parent=0 // pred_check
    _
  $region51: #{compute_loss.3} parent=0 // pred_check_branch
    %4591 = sbr.rel (0) target = $region53
  $region52: #{compute_loss.3} parent=0 // pred_region
    _
  $region53: #{compute_loss.3} parent=0 // pred_fallthru
    _

</llo_original>
